<compile_context>
chip_gen: v7x
topology: tpu7x:2x2x1
jax: 0.10.0
libtpu: 0.0.40
codegen_flags: <defaults>
</compile_context>

<pallas_src>
import jax
import jax.numpy as jnp
from jax.experimental import pallas as pl
from jax.experimental.pallas import tpu as pltpu

HIDDEN_SIZE_1 = 256
HIDDEN_SIZE_2 = 256


def _elu(x):
    # ELU with alpha=1.0 (matches F.elu defaults); exp lowers to the EUP slot.
    return jnp.where(x > 0, x, jnp.exp(jnp.minimum(x, 0.0)) - 1.0)


# ----------------------------------------------------------------------------
# Fused kernel: [GRU layer 0 -> GRU layer 1 -> ... -> ELU(fc1) -> ELU(fc2) -> value]
# Everything resident in VMEM; recurrence fully unrolled, h carried in vregs.
# ----------------------------------------------------------------------------
def make_fused_kernel(num_layers, seq_len):
    n_gru = 4 * num_layers

    def kernel(*refs):
        x_ref, h0_ref = refs[0], refs[1]
        gru_refs = refs[2:2 + n_gru]
        (fc1_w_ref, fc1_b_ref, fc2_w_ref, fc2_b_ref,
         val_w_ref, val_b_ref) = refs[2 + n_gru:2 + n_gru + 6]
        value_out_ref, hidden_out_ref = refs[2 + n_gru + 6:]

        x = x_ref[...].astype(jnp.float32)                      # (T, D)
        finals = []

        for l in range(num_layers):
            w_ih_ref = gru_refs[4 * l + 0]                       # (3, D_l, H)  gates r,z,n
            w_hh_ref = gru_refs[4 * l + 1]                       # (3, H, H)
            b_ih_ref = gru_refs[4 * l + 2]                       # (3, 1, H)
            b_hh_ref = gru_refs[4 * l + 3]                       # (3, 1, H)

            # Hoisted batched input projection: one (T, D) x (D, H) matmul per gate.
            # b_hr / b_hz are folded in here (they only appear inside the same sigmoid).
            gi_r = (jnp.dot(x, w_ih_ref[0], preferred_element_type=jnp.float32)
                    + b_ih_ref[0] + b_hh_ref[0])
            gi_z = (jnp.dot(x, w_ih_ref[1], preferred_element_type=jnp.float32)
                    + b_ih_ref[1] + b_hh_ref[1])
            gi_n = jnp.dot(x, w_ih_ref[2],
                           preferred_element_type=jnp.float32) + b_ih_ref[2]

            w_hr, w_hz, w_hn = w_hh_ref[0], w_hh_ref[1], w_hh_ref[2]
            b_hn = b_hh_ref[2]

            h = h0_ref[pl.ds(l, 1), :]                           # (1, H), lives in vregs
            outs = []
            for t in range(seq_len):                             # fully unrolled (T static)
                gh_r = jnp.dot(h, w_hr, preferred_element_type=jnp.float32)
                gh_z = jnp.dot(h, w_hz, preferred_element_type=jnp.float32)
                gh_n = jnp.dot(h, w_hn, preferred_element_type=jnp.float32) + b_hn
                # PyTorch gate ordering: r, z, n
                r = jax.nn.sigmoid(gi_r[t:t + 1, :] + gh_r)
                z = jax.nn.sigmoid(gi_z[t:t + 1, :] + gh_z)
                n = jnp.tanh(gi_n[t:t + 1, :] + r * gh_n)
                h = (1.0 - z) * n + z * h
                outs.append(h)

            finals.append(h)
            x = jnp.concatenate(outs, axis=0)                    # (T, H), assembled once

        # Single writeback of all layers' final hidden states.
        hidden_out_ref[...] = jnp.concatenate(finals, axis=0).astype(hidden_out_ref.dtype)

        # Value head.  (Dead PyTorch line elu(fc1(hidden_cell[-1])) intentionally omitted.)
        h1 = _elu(jnp.dot(x, fc1_w_ref[...],
                          preferred_element_type=jnp.float32) + fc1_b_ref[...])     # (T, 256)
        h2 = _elu(jnp.dot(h1, fc2_w_ref[...],
                          preferred_element_type=jnp.float32) + fc2_b_ref[...])     # (T, 256)
        # N=1 output column: VPU multiply + lane reduction instead of an MXU matmul.
        v = jnp.sum(h2 * val_w_ref[...], axis=-1, keepdims=True) + val_b_ref[...]   # (T, 1)
        value_out_ref[...] = v.astype(value_out_ref.dtype)

    return kernel


# ----------------------------------------------------------------------------
# One-time weight packing (transpose / gate-separation / casts happen ONCE).
# ----------------------------------------------------------------------------
def pack_params(params):
    packed = {
        "num_layers": len(params["gru"]),
        "hidden_size": int(params["gru"][0]["w_hh"].shape[-1]),
        "gru": [],
    }
    for p in params["gru"]:
        H = p["w_hh"].shape[-1]
        D = p["w_ih"].shape[-1]
        # PyTorch layout: w_ih (3H, D) rows = [W_ir; W_iz; W_in] -> (3, D, H) so x @ W_g.
        w_ih_g = jnp.transpose(p["w_ih"].astype(jnp.float32).reshape(3, H, D), (0, 2, 1))
        w_hh_g = jnp.transpose(p["w_hh"].astype(jnp.float32).reshape(3, H, H), (0, 2, 1))
        b_ih_g = p["b_ih"].astype(jnp.float32).reshape(3, 1, H)
        b_hh_g = p["b_hh"].astype(jnp.float32).reshape(3, 1, H)
        packed["gru"].append(
            {"w_ih": w_ih_g, "w_hh": w_hh_g, "b_ih": b_ih_g, "b_hh": b_hh_g})
    packed["fc1_w"] = params["fc1_w"].T.astype(jnp.float32)               # (H, 256)
    packed["fc1_b"] = params["fc1_b"].reshape(1, -1).astype(jnp.float32)
    packed["fc2_w"] = params["fc2_w"].T.astype(jnp.float32)               # (256, 256)
    packed["fc2_b"] = params["fc2_b"].reshape(1, -1).astype(jnp.float32)
    packed["val_w"] = params["val_w"].reshape(1, -1).astype(jnp.float32)  # (1, 256)
    packed["val_b"] = params["val_b"].reshape(1, 1).astype(jnp.float32)
    return packed


# ----------------------------------------------------------------------------
# Full forward: single fused pallas_call.
# ----------------------------------------------------------------------------
def recurrent_critic_forward(state, packed, hidden_cell=None, terminal=None):
    num_layers = packed["num_layers"]
    H = packed["hidden_size"]
    T = state.shape[0]

    if hidden_cell is None:
        hidden_cell = jnp.zeros((num_layers, H), jnp.float32)
    if terminal is not None:
        hidden_cell = hidden_cell * (1.0 - terminal)

    args = [state.astype(jnp.float32), hidden_cell.astype(jnp.float32)]
    for layer in packed["gru"]:
        args += [layer["w_ih"], layer["w_hh"], layer["b_ih"], layer["b_hh"]]
    args += [packed["fc1_w"], packed["fc1_b"], packed["fc2_w"], packed["fc2_b"],
             packed["val_w"], packed["val_b"]]

    vmem = pl.BlockSpec(memory_space=pltpu.MemorySpace.VMEM)
    value_out, new_hidden = pl.pallas_call(
        make_fused_kernel(num_layers, T),
        out_shape=(jax.ShapeDtypeStruct((T, 1), jnp.float32),
                   jax.ShapeDtypeStruct((num_layers, H), jnp.float32)),
        in_specs=[vmem] * len(args),
        out_specs=(vmem, vmem),
    )(*args)
    return value_out, new_hidden


# ----------------------------------------------------------------------------
# Pure-JAX reference (correctness check only): returns (value_out, new_hidden).
# ----------------------------------------------------------------------------
def reference_forward(state, params, hidden_cell):
    num_layers = len(params["gru"])
    x = state
    finals = []
    for l in range(num_layers):
        p = params["gru"][l]
        H = p["w_hh"].shape[-1]
        h = hidden_cell[l]
        outs = []
        for t in range(x.shape[0]):
            gi = x[t] @ p["w_ih"].T + p["b_ih"]
            gh = h @ p["w_hh"].T + p["b_hh"]
            i_r, i_z, i_n = gi[:H], gi[H:2 * H], gi[2 * H:]
            h_r, h_z, h_n = gh[:H], gh[H:2 * H], gh[2 * H:]
            r = jax.nn.sigmoid(i_r + h_r)
            z = jax.nn.sigmoid(i_z + h_z)
            n = jnp.tanh(i_n + r * h_n)
            h = (1.0 - z) * n + z * h
            outs.append(h)
        finals.append(h)
        x = jnp.stack(outs, axis=0)
    h1 = jax.nn.elu(x @ params["fc1_w"].T + params["fc1_b"])
    h2 = jax.nn.elu(h1 @ params["fc2_w"].T + params["fc2_b"])
    value = h2 @ params["val_w"].T + params["val_b"]
    return value, jnp.stack(finals, axis=0)


# ----------------------------------------------------------------------------
# Deterministic parameter init (PyTorch default-style uniform(-k, k)).
# ----------------------------------------------------------------------------
def init_params(key, state_dim, hidden_size, recurrent_layers):
    def uniform(k_, shape, k):
        return jax.random.uniform(k_, shape, jnp.float32, -k, k)

    params = {"gru": []}
    k_gru = 1.0 / jnp.sqrt(hidden_size)
    keys = jax.random.split(key, 4 * recurrent_layers + 6)
    idx = 0
    for l in range(recurrent_layers):
        in_dim = state_dim if l == 0 else hidden_size
        params["gru"].append({
            "w_ih": uniform(keys[idx + 0], (3 * hidden_size, in_dim), k_gru),
            "w_hh": uniform(keys[idx + 1], (3 * hidden_size, hidden_size), k_gru),
            "b_ih": uniform(keys[idx + 2], (3 * hidden_size,), k_gru),
            "b_hh": uniform(keys[idx + 3], (3 * hidden_size,), k_gru),
        })
        idx += 4
    k1 = 1.0 / jnp.sqrt(hidden_size)
    k2 = 1.0 / jnp.sqrt(HIDDEN_SIZE_1)
    k3 = 1.0 / jnp.sqrt(HIDDEN_SIZE_2)
    params["fc1_w"] = uniform(keys[idx + 0], (HIDDEN_SIZE_1, hidden_size), k1)
    params["fc1_b"] = uniform(keys[idx + 1], (HIDDEN_SIZE_1,), k1)
    params["fc2_w"] = uniform(keys[idx + 2], (HIDDEN_SIZE_2, HIDDEN_SIZE_1), k2)
    params["fc2_b"] = uniform(keys[idx + 3], (HIDDEN_SIZE_2,), k2)
    params["val_w"] = uniform(keys[idx + 4], (1, HIDDEN_SIZE_2), k3)
    params["val_b"] = uniform(keys[idx + 5], (1,), k3)
    return params


if __name__ == "__main__":
    seq_len = 8
    state_dim = 16
    hidden_size = 32
    recurrent_layers = 2

    key = jax.random.PRNGKey(0)
    pkey, skey = jax.random.split(key)
    params = init_params(pkey, state_dim, hidden_size, recurrent_layers)
    packed = pack_params(params)                      # one-time layout-ready weight pack
    state = jax.random.normal(skey, (seq_len, state_dim), jnp.float32)
    hidden0 = jnp.zeros((recurrent_layers, hidden_size), jnp.float32)

    fwd = jax.jit(lambda s, h: recurrent_critic_forward(s, packed, hidden_cell=h))
    value_out, new_hidden = fwd(state, hidden0)
    jax.block_until_ready(value_out)
    jax.block_until_ready(new_hidden)

    ref_value, ref_hidden = reference_forward(state, params, hidden0)
    assert value_out.shape == (seq_len, 1), value_out.shape
    assert new_hidden.shape == (recurrent_layers, hidden_size), new_hidden.shape
    v_err = jnp.max(jnp.abs(value_out - ref_value))
    h_err = jnp.max(jnp.abs(new_hidden - ref_hidden))
    assert v_err < 1e-3, v_err
    assert h_err < 1e-3, h_err

    print("KERNEL_OK")
</pallas_src>

<mosaic_0001>
module attributes {stable_mosaic.version = 11 : i64} {
  func.func @kernel(%arg0: memref<8x16xf32, #tpu.memory_space<vmem>>, %arg1: memref<2x32xf32, #tpu.memory_space<vmem>>, %arg2: memref<3x16x32xf32, #tpu.memory_space<vmem>>, %arg3: memref<3x32x32xf32, #tpu.memory_space<vmem>>, %arg4: memref<3x1x32xf32, #tpu.memory_space<vmem>>, %arg5: memref<3x1x32xf32, #tpu.memory_space<vmem>>, %arg6: memref<3x32x32xf32, #tpu.memory_space<vmem>>, %arg7: memref<3x32x32xf32, #tpu.memory_space<vmem>>, %arg8: memref<3x1x32xf32, #tpu.memory_space<vmem>>, %arg9: memref<3x1x32xf32, #tpu.memory_space<vmem>>, %arg10: memref<32x256xf32, #tpu.memory_space<vmem>>, %arg11: memref<1x256xf32, #tpu.memory_space<vmem>>, %arg12: memref<256x256xf32, #tpu.memory_space<vmem>>, %arg13: memref<1x256xf32, #tpu.memory_space<vmem>>, %arg14: memref<1x256xf32, #tpu.memory_space<vmem>>, %arg15: memref<1x1xf32, #tpu.memory_space<vmem>>, %arg16: memref<8x1xf32, #tpu.memory_space<vmem>>, %arg17: memref<2x32xf32, #tpu.memory_space<vmem>>) attributes {dimension_semantics = [], scalar_prefetch = 0 : i64, scratch_operands = 0 : i64, tpu.core_type = #tpu.core_type<tc>} {
    %c0 = arith.constant 0 : index
    %c0_0 = arith.constant 0 : index
    %0 = vector.load %arg0[%c0, %c0_0] : memref<8x16xf32, #tpu.memory_space<vmem>>, vector<8x16xf32>
    %c0_1 = arith.constant 0 : index
    %c0_2 = arith.constant 0 : index
    %c0_3 = arith.constant 0 : index
    %1 = vector.load %arg2[%c0_1, %c0_2, %c0_3] : memref<3x16x32xf32, #tpu.memory_space<vmem>>, vector<1x16x32xf32>
    %2 = vector.shape_cast %1 : vector<1x16x32xf32> to vector<16x32xf32>
    %cst = arith.constant dense<0.000000e+00> : vector<8x32xf32>
    %3 = tpu.matmul %0, %2, %cst {dimension_numbers = #tpu.dot_dimension_numbers<[1], [0], [0], [1], [0, 0, 1, 1], [], []>} : vector<8x16xf32>, vector<16x32xf32>, vector<8x32xf32> -> vector<8x32xf32>
    %c0_4 = arith.constant 0 : index
    %c0_5 = arith.constant 0 : index
    %c0_6 = arith.constant 0 : index
    %4 = vector.load %arg4[%c0_4, %c0_5, %c0_6] : memref<3x1x32xf32, #tpu.memory_space<vmem>>, vector<1x1x32xf32>
    %5 = vector.shape_cast %4 : vector<1x1x32xf32> to vector<1x32xf32>
    %6 = vector.broadcast %5 : vector<1x32xf32> to vector<8x32xf32>
    %7 = arith.addf %3, %6 : vector<8x32xf32>
    %c0_7 = arith.constant 0 : index
    %c0_8 = arith.constant 0 : index
    %c0_9 = arith.constant 0 : index
    %8 = vector.load %arg5[%c0_7, %c0_8, %c0_9] : memref<3x1x32xf32, #tpu.memory_space<vmem>>, vector<1x1x32xf32>
    %9 = vector.shape_cast %8 : vector<1x1x32xf32> to vector<1x32xf32>
    %10 = vector.broadcast %9 : vector<1x32xf32> to vector<8x32xf32>
    %11 = arith.addf %7, %10 : vector<8x32xf32>
    %c1 = arith.constant 1 : index
    %c0_10 = arith.constant 0 : index
    %c0_11 = arith.constant 0 : index
    %12 = vector.load %arg2[%c1, %c0_10, %c0_11] : memref<3x16x32xf32, #tpu.memory_space<vmem>>, vector<1x16x32xf32>
    %13 = vector.shape_cast %12 : vector<1x16x32xf32> to vector<16x32xf32>
    %cst_12 = arith.constant dense<0.000000e+00> : vector<8x32xf32>
    %14 = tpu.matmul %0, %13, %cst_12 {dimension_numbers = #tpu.dot_dimension_numbers<[1], [0], [0], [1], [0, 0, 1, 1], [], []>} : vector<8x16xf32>, vector<16x32xf32>, vector<8x32xf32> -> vector<8x32xf32>
    %c1_13 = arith.constant 1 : index
    %c0_14 = arith.constant 0 : index
    %c0_15 = arith.constant 0 : index
    %15 = vector.load %arg4[%c1_13, %c0_14, %c0_15] : memref<3x1x32xf32, #tpu.memory_space<vmem>>, vector<1x1x32xf32>
    %16 = vector.shape_cast %15 : vector<1x1x32xf32> to vector<1x32xf32>
    %17 = vector.broadcast %16 : vector<1x32xf32> to vector<8x32xf32>
    %18 = arith.addf %14, %17 : vector<8x32xf32>
    %c1_16 = arith.constant 1 : index
    %c0_17 = arith.constant 0 : index
    %c0_18 = arith.constant 0 : index
    %19 = vector.load %arg5[%c1_16, %c0_17, %c0_18] : memref<3x1x32xf32, #tpu.memory_space<vmem>>, vector<1x1x32xf32>
    %20 = vector.shape_cast %19 : vector<1x1x32xf32> to vector<1x32xf32>
    %21 = vector.broadcast %20 : vector<1x32xf32> to vector<8x32xf32>
    %22 = arith.addf %18, %21 : vector<8x32xf32>
    %c2 = arith.constant 2 : index
    %c0_19 = arith.constant 0 : index
    %c0_20 = arith.constant 0 : index
    %23 = vector.load %arg2[%c2, %c0_19, %c0_20] : memref<3x16x32xf32, #tpu.memory_space<vmem>>, vector<1x16x32xf32>
    %24 = vector.shape_cast %23 : vector<1x16x32xf32> to vector<16x32xf32>
    %cst_21 = arith.constant dense<0.000000e+00> : vector<8x32xf32>
    %25 = tpu.matmul %0, %24, %cst_21 {dimension_numbers = #tpu.dot_dimension_numbers<[1], [0], [0], [1], [0, 0, 1, 1], [], []>} : vector<8x16xf32>, vector<16x32xf32>, vector<8x32xf32> -> vector<8x32xf32>
    %c2_22 = arith.constant 2 : index
    %c0_23 = arith.constant 0 : index
    %c0_24 = arith.constant 0 : index
    %26 = vector.load %arg4[%c2_22, %c0_23, %c0_24] : memref<3x1x32xf32, #tpu.memory_space<vmem>>, vector<1x1x32xf32>
    %27 = vector.shape_cast %26 : vector<1x1x32xf32> to vector<1x32xf32>
    %28 = vector.broadcast %27 : vector<1x32xf32> to vector<8x32xf32>
    %29 = arith.addf %25, %28 : vector<8x32xf32>
    %c0_25 = arith.constant 0 : index
    %c0_26 = arith.constant 0 : index
    %c0_27 = arith.constant 0 : index
    %30 = vector.load %arg3[%c0_25, %c0_26, %c0_27] : memref<3x32x32xf32, #tpu.memory_space<vmem>>, vector<1x32x32xf32>
    %31 = vector.shape_cast %30 : vector<1x32x32xf32> to vector<32x32xf32>
    %c1_28 = arith.constant 1 : index
    %c0_29 = arith.constant 0 : index
    %c0_30 = arith.constant 0 : index
    %32 = vector.load %arg3[%c1_28, %c0_29, %c0_30] : memref<3x32x32xf32, #tpu.memory_space<vmem>>, vector<1x32x32xf32>
    %33 = vector.shape_cast %32 : vector<1x32x32xf32> to vector<32x32xf32>
    %c2_31 = arith.constant 2 : index
    %c0_32 = arith.constant 0 : index
    %c0_33 = arith.constant 0 : index
    %34 = vector.load %arg3[%c2_31, %c0_32, %c0_33] : memref<3x32x32xf32, #tpu.memory_space<vmem>>, vector<1x32x32xf32>
    %35 = vector.shape_cast %34 : vector<1x32x32xf32> to vector<32x32xf32>
    %c2_34 = arith.constant 2 : index
    %c0_35 = arith.constant 0 : index
    %c0_36 = arith.constant 0 : index
    %36 = vector.load %arg5[%c2_34, %c0_35, %c0_36] : memref<3x1x32xf32, #tpu.memory_space<vmem>>, vector<1x1x32xf32>
    %37 = vector.shape_cast %36 : vector<1x1x32xf32> to vector<1x32xf32>
    %c0_37 = arith.constant 0 : index
    %c0_38 = arith.constant 0 : index
    %38 = vector.load %arg1[%c0_37, %c0_38] : memref<2x32xf32, #tpu.memory_space<vmem>>, vector<1x32xf32>
    %cst_39 = arith.constant dense<0.000000e+00> : vector<1x32xf32>
    %39 = tpu.matmul %38, %31, %cst_39 {dimension_numbers = #tpu.dot_dimension_numbers<[1], [0], [0], [1], [0, 0, 1, 1], [], []>} : vector<1x32xf32>, vector<32x32xf32>, vector<1x32xf32> -> vector<1x32xf32>
    %cst_40 = arith.constant dense<0.000000e+00> : vector<1x32xf32>
    %40 = tpu.matmul %38, %33, %cst_40 {dimension_numbers = #tpu.dot_dimension_numbers<[1], [0], [0], [1], [0, 0, 1, 1], [], []>} : vector<1x32xf32>, vector<32x32xf32>, vector<1x32xf32> -> vector<1x32xf32>
    %cst_41 = arith.constant dense<0.000000e+00> : vector<1x32xf32>
    %41 = tpu.matmul %38, %35, %cst_41 {dimension_numbers = #tpu.dot_dimension_numbers<[1], [0], [0], [1], [0, 0, 1, 1], [], []>} : vector<1x32xf32>, vector<32x32xf32>, vector<1x32xf32> -> vector<1x32xf32>
    %42 = arith.addf %41, %37 : vector<1x32xf32>
    %43 = vector.extract_strided_slice %11 {offsets = [0, 0], sizes = [1, 32], strides = [1, 1]} : vector<8x32xf32> to vector<1x32xf32>
    %44 = arith.addf %43, %39 : vector<1x32xf32>
    %45 = arith.negf %44 : vector<1x32xf32>
    %46 = math.exp %45 : vector<1x32xf32>
    %cst_42 = arith.constant 1.000000e+00 : f32
    %47 = vector.broadcast %cst_42 : f32 to vector<1x32xf32>
    %48 = arith.addf %47, %46 : vector<1x32xf32>
    %49 = arith.divf %47, %48 : vector<1x32xf32>
    %50 = vector.extract_strided_slice %22 {offsets = [0, 0], sizes = [1, 32], strides = [1, 1]} : vector<8x32xf32> to vector<1x32xf32>
    %51 = arith.addf %50, %40 : vector<1x32xf32>
    %52 = arith.negf %51 : vector<1x32xf32>
    %53 = math.exp %52 : vector<1x32xf32>
    %cst_43 = arith.constant 1.000000e+00 : f32
    %54 = vector.broadcast %cst_43 : f32 to vector<1x32xf32>
    %55 = arith.addf %54, %53 : vector<1x32xf32>
    %56 = arith.divf %54, %55 : vector<1x32xf32>
    %57 = vector.extract_strided_slice %29 {offsets = [0, 0], sizes = [1, 32], strides = [1, 1]} : vector<8x32xf32> to vector<1x32xf32>
    %58 = arith.mulf %49, %42 : vector<1x32xf32>
    %59 = arith.addf %57, %58 : vector<1x32xf32>
    %60 = math.tanh %59 : vector<1x32xf32>
    %cst_44 = arith.constant 1.000000e+00 : f32
    %61 = vector.broadcast %cst_44 : f32 to vector<1x32xf32>
    %62 = arith.subf %61, %56 : vector<1x32xf32>
    %63 = arith.mulf %62, %60 : vector<1x32xf32>
    %64 = arith.mulf %56, %38 : vector<1x32xf32>
    %65 = arith.addf %63, %64 : vector<1x32xf32>
    %cst_45 = arith.constant dense<0.000000e+00> : vector<1x32xf32>
    %66 = tpu.matmul %65, %31, %cst_45 {dimension_numbers = #tpu.dot_dimension_numbers<[1], [0], [0], [1], [0, 0, 1, 1], [], []>} : vector<1x32xf32>, vector<32x32xf32>, vector<1x32xf32> -> vector<1x32xf32>
    %cst_46 = arith.constant dense<0.000000e+00> : vector<1x32xf32>
    %67 = tpu.matmul %65, %33, %cst_46 {dimension_numbers = #tpu.dot_dimension_numbers<[1], [0], [0], [1], [0, 0, 1, 1], [], []>} : vector<1x32xf32>, vector<32x32xf32>, vector<1x32xf32> -> vector<1x32xf32>
    %cst_47 = arith.constant dense<0.000000e+00> : vector<1x32xf32>
    %68 = tpu.matmul %65, %35, %cst_47 {dimension_numbers = #tpu.dot_dimension_numbers<[1], [0], [0], [1], [0, 0, 1, 1], [], []>} : vector<1x32xf32>, vector<32x32xf32>, vector<1x32xf32> -> vector<1x32xf32>
    %69 = arith.addf %68, %37 : vector<1x32xf32>
    %70 = vector.extract_strided_slice %11 {offsets = [1, 0], sizes = [1, 32], strides = [1, 1]} : vector<8x32xf32> to vector<1x32xf32>
    %71 = arith.addf %70, %66 : vector<1x32xf32>
    %72 = arith.negf %71 : vector<1x32xf32>
    %73 = math.exp %72 : vector<1x32xf32>
    %cst_48 = arith.constant 1.000000e+00 : f32
    %74 = vector.broadcast %cst_48 : f32 to vector<1x32xf32>
    %75 = arith.addf %74, %73 : vector<1x32xf32>
    %76 = arith.divf %74, %75 : vector<1x32xf32>
    %77 = vector.extract_strided_slice %22 {offsets = [1, 0], sizes = [1, 32], strides = [1, 1]} : vector<8x32xf32> to vector<1x32xf32>
    %78 = arith.addf %77, %67 : vector<1x32xf32>
    %79 = arith.negf %78 : vector<1x32xf32>
    %80 = math.exp %79 : vector<1x32xf32>
    %cst_49 = arith.constant 1.000000e+00 : f32
    %81 = vector.broadcast %cst_49 : f32 to vector<1x32xf32>
    %82 = arith.addf %81, %80 : vector<1x32xf32>
    %83 = arith.divf %81, %82 : vector<1x32xf32>
    %84 = vector.extract_strided_slice %29 {offsets = [1, 0], sizes = [1, 32], strides = [1, 1]} : vector<8x32xf32> to vector<1x32xf32>
    %85 = arith.mulf %76, %69 : vector<1x32xf32>
    %86 = arith.addf %84, %85 : vector<1x32xf32>
    %87 = math.tanh %86 : vector<1x32xf32>
    %cst_50 = arith.constant 1.000000e+00 : f32
    %88 = vector.broadcast %cst_50 : f32 to vector<1x32xf32>
    %89 = arith.subf %88, %83 : vector<1x32xf32>
    %90 = arith.mulf %89, %87 : vector<1x32xf32>
    %91 = arith.mulf %83, %65 : vector<1x32xf32>
    %92 = arith.addf %90, %91 : vector<1x32xf32>
    %cst_51 = arith.constant dense<0.000000e+00> : vector<1x32xf32>
    %93 = tpu.matmul %92, %31, %cst_51 {dimension_numbers = #tpu.dot_dimension_numbers<[1], [0], [0], [1], [0, 0, 1, 1], [], []>} : vector<1x32xf32>, vector<32x32xf32>, vector<1x32xf32> -> vector<1x32xf32>
    %cst_52 = arith.constant dense<0.000000e+00> : vector<1x32xf32>
    %94 = tpu.matmul %92, %33, %cst_52 {dimension_numbers = #tpu.dot_dimension_numbers<[1], [0], [0], [1], [0, 0, 1, 1], [], []>} : vector<1x32xf32>, vector<32x32xf32>, vector<1x32xf32> -> vector<1x32xf32>
    %cst_53 = arith.constant dense<0.000000e+00> : vector<1x32xf32>
    %95 = tpu.matmul %92, %35, %cst_53 {dimension_numbers = #tpu.dot_dimension_numbers<[1], [0], [0], [1], [0, 0, 1, 1], [], []>} : vector<1x32xf32>, vector<32x32xf32>, vector<1x32xf32> -> vector<1x32xf32>
    %96 = arith.addf %95, %37 : vector<1x32xf32>
    %97 = vector.extract_strided_slice %11 {offsets = [2, 0], sizes = [1, 32], strides = [1, 1]} : vector<8x32xf32> to vector<1x32xf32>
    %98 = arith.addf %97, %93 : vector<1x32xf32>
    %99 = arith.negf %98 : vector<1x32xf32>
    %100 = math.exp %99 : vector<1x32xf32>
    %cst_54 = arith.constant 1.000000e+00 : f32
    %101 = vector.broadcast %cst_54 : f32 to vector<1x32xf32>
    %102 = arith.addf %101, %100 : vector<1x32xf32>
    %103 = arith.divf %101, %102 : vector<1x32xf32>
    %104 = vector.extract_strided_slice %22 {offsets = [2, 0], sizes = [1, 32], strides = [1, 1]} : vector<8x32xf32> to vector<1x32xf32>
    %105 = arith.addf %104, %94 : vector<1x32xf32>
    %106 = arith.negf %105 : vector<1x32xf32>
    %107 = math.exp %106 : vector<1x32xf32>
    %cst_55 = arith.constant 1.000000e+00 : f32
    %108 = vector.broadcast %cst_55 : f32 to vector<1x32xf32>
    %109 = arith.addf %108, %107 : vector<1x32xf32>
    %110 = arith.divf %108, %109 : vector<1x32xf32>
    %111 = vector.extract_strided_slice %29 {offsets = [2, 0], sizes = [1, 32], strides = [1, 1]} : vector<8x32xf32> to vector<1x32xf32>
    %112 = arith.mulf %103, %96 : vector<1x32xf32>
    %113 = arith.addf %111, %112 : vector<1x32xf32>
    %114 = math.tanh %113 : vector<1x32xf32>
    %cst_56 = arith.constant 1.000000e+00 : f32
    %115 = vector.broadcast %cst_56 : f32 to vector<1x32xf32>
    %116 = arith.subf %115, %110 : vector<1x32xf32>
    %117 = arith.mulf %116, %114 : vector<1x32xf32>
    %118 = arith.mulf %110, %92 : vector<1x32xf32>
    %119 = arith.addf %117, %118 : vector<1x32xf32>
    %cst_57 = arith.constant dense<0.000000e+00> : vector<1x32xf32>
    %120 = tpu.matmul %119, %31, %cst_57 {dimension_numbers = #tpu.dot_dimension_numbers<[1], [0], [0], [1], [0, 0, 1, 1], [], []>} : vector<1x32xf32>, vector<32x32xf32>, vector<1x32xf32> -> vector<1x32xf32>
    %cst_58 = arith.constant dense<0.000000e+00> : vector<1x32xf32>
    %121 = tpu.matmul %119, %33, %cst_58 {dimension_numbers = #tpu.dot_dimension_numbers<[1], [0], [0], [1], [0, 0, 1, 1], [], []>} : vector<1x32xf32>, vector<32x32xf32>, vector<1x32xf32> -> vector<1x32xf32>
    %cst_59 = arith.constant dense<0.000000e+00> : vector<1x32xf32>
    %122 = tpu.matmul %119, %35, %cst_59 {dimension_numbers = #tpu.dot_dimension_numbers<[1], [0], [0], [1], [0, 0, 1, 1], [], []>} : vector<1x32xf32>, vector<32x32xf32>, vector<1x32xf32> -> vector<1x32xf32>
    %123 = arith.addf %122, %37 : vector<1x32xf32>
    %124 = vector.extract_strided_slice %11 {offsets = [3, 0], sizes = [1, 32], strides = [1, 1]} : vector<8x32xf32> to vector<1x32xf32>
    %125 = arith.addf %124, %120 : vector<1x32xf32>
    %126 = arith.negf %125 : vector<1x32xf32>
    %127 = math.exp %126 : vector<1x32xf32>
    %cst_60 = arith.constant 1.000000e+00 : f32
    %128 = vector.broadcast %cst_60 : f32 to vector<1x32xf32>
    %129 = arith.addf %128, %127 : vector<1x32xf32>
    %130 = arith.divf %128, %129 : vector<1x32xf32>
    %131 = vector.extract_strided_slice %22 {offsets = [3, 0], sizes = [1, 32], strides = [1, 1]} : vector<8x32xf32> to vector<1x32xf32>
    %132 = arith.addf %131, %121 : vector<1x32xf32>
    %133 = arith.negf %132 : vector<1x32xf32>
    %134 = math.exp %133 : vector<1x32xf32>
    %cst_61 = arith.constant 1.000000e+00 : f32
    %135 = vector.broadcast %cst_61 : f32 to vector<1x32xf32>
    %136 = arith.addf %135, %134 : vector<1x32xf32>
    %137 = arith.divf %135, %136 : vector<1x32xf32>
    %138 = vector.extract_strided_slice %29 {offsets = [3, 0], sizes = [1, 32], strides = [1, 1]} : vector<8x32xf32> to vector<1x32xf32>
    %139 = arith.mulf %130, %123 : vector<1x32xf32>
    %140 = arith.addf %138, %139 : vector<1x32xf32>
    %141 = math.tanh %140 : vector<1x32xf32>
    %cst_62 = arith.constant 1.000000e+00 : f32
    %142 = vector.broadcast %cst_62 : f32 to vector<1x32xf32>
    %143 = arith.subf %142, %137 : vector<1x32xf32>
    %144 = arith.mulf %143, %141 : vector<1x32xf32>
    %145 = arith.mulf %137, %119 : vector<1x32xf32>
    %146 = arith.addf %144, %145 : vector<1x32xf32>
    %cst_63 = arith.constant dense<0.000000e+00> : vector<1x32xf32>
    %147 = tpu.matmul %146, %31, %cst_63 {dimension_numbers = #tpu.dot_dimension_numbers<[1], [0], [0], [1], [0, 0, 1, 1], [], []>} : vector<1x32xf32>, vector<32x32xf32>, vector<1x32xf32> -> vector<1x32xf32>
    %cst_64 = arith.constant dense<0.000000e+00> : vector<1x32xf32>
    %148 = tpu.matmul %146, %33, %cst_64 {dimension_numbers = #tpu.dot_dimension_numbers<[1], [0], [0], [1], [0, 0, 1, 1], [], []>} : vector<1x32xf32>, vector<32x32xf32>, vector<1x32xf32> -> vector<1x32xf32>
    %cst_65 = arith.constant dense<0.000000e+00> : vector<1x32xf32>
    %149 = tpu.matmul %146, %35, %cst_65 {dimension_numbers = #tpu.dot_dimension_numbers<[1], [0], [0], [1], [0, 0, 1, 1], [], []>} : vector<1x32xf32>, vector<32x32xf32>, vector<1x32xf32> -> vector<1x32xf32>
    %150 = arith.addf %149, %37 : vector<1x32xf32>
    %151 = vector.extract_strided_slice %11 {offsets = [4, 0], sizes = [1, 32], strides = [1, 1]} : vector<8x32xf32> to vector<1x32xf32>
    %152 = arith.addf %151, %147 : vector<1x32xf32>
    %153 = arith.negf %152 : vector<1x32xf32>
    %154 = math.exp %153 : vector<1x32xf32>
    %cst_66 = arith.constant 1.000000e+00 : f32
    %155 = vector.broadcast %cst_66 : f32 to vector<1x32xf32>
    %156 = arith.addf %155, %154 : vector<1x32xf32>
    %157 = arith.divf %155, %156 : vector<1x32xf32>
    %158 = vector.extract_strided_slice %22 {offsets = [4, 0], sizes = [1, 32], strides = [1, 1]} : vector<8x32xf32> to vector<1x32xf32>
    %159 = arith.addf %158, %148 : vector<1x32xf32>
    %160 = arith.negf %159 : vector<1x32xf32>
    %161 = math.exp %160 : vector<1x32xf32>
    %cst_67 = arith.constant 1.000000e+00 : f32
    %162 = vector.broadcast %cst_67 : f32 to vector<1x32xf32>
    %163 = arith.addf %162, %161 : vector<1x32xf32>
    %164 = arith.divf %162, %163 : vector<1x32xf32>
    %165 = vector.extract_strided_slice %29 {offsets = [4, 0], sizes = [1, 32], strides = [1, 1]} : vector<8x32xf32> to vector<1x32xf32>
    %166 = arith.mulf %157, %150 : vector<1x32xf32>
    %167 = arith.addf %165, %166 : vector<1x32xf32>
    %168 = math.tanh %167 : vector<1x32xf32>
    %cst_68 = arith.constant 1.000000e+00 : f32
    %169 = vector.broadcast %cst_68 : f32 to vector<1x32xf32>
    %170 = arith.subf %169, %164 : vector<1x32xf32>
    %171 = arith.mulf %170, %168 : vector<1x32xf32>
    %172 = arith.mulf %164, %146 : vector<1x32xf32>
    %173 = arith.addf %171, %172 : vector<1x32xf32>
    %cst_69 = arith.constant dense<0.000000e+00> : vector<1x32xf32>
    %174 = tpu.matmul %173, %31, %cst_69 {dimension_numbers = #tpu.dot_dimension_numbers<[1], [0], [0], [1], [0, 0, 1, 1], [], []>} : vector<1x32xf32>, vector<32x32xf32>, vector<1x32xf32> -> vector<1x32xf32>
    %cst_70 = arith.constant dense<0.000000e+00> : vector<1x32xf32>
    %175 = tpu.matmul %173, %33, %cst_70 {dimension_numbers = #tpu.dot_dimension_numbers<[1], [0], [0], [1], [0, 0, 1, 1], [], []>} : vector<1x32xf32>, vector<32x32xf32>, vector<1x32xf32> -> vector<1x32xf32>
    %cst_71 = arith.constant dense<0.000000e+00> : vector<1x32xf32>
    %176 = tpu.matmul %173, %35, %cst_71 {dimension_numbers = #tpu.dot_dimension_numbers<[1], [0], [0], [1], [0, 0, 1, 1], [], []>} : vector<1x32xf32>, vector<32x32xf32>, vector<1x32xf32> -> vector<1x32xf32>
    %177 = arith.addf %176, %37 : vector<1x32xf32>
    %178 = vector.extract_strided_slice %11 {offsets = [5, 0], sizes = [1, 32], strides = [1, 1]} : vector<8x32xf32> to vector<1x32xf32>
    %179 = arith.addf %178, %174 : vector<1x32xf32>
    %180 = arith.negf %179 : vector<1x32xf32>
    %181 = math.exp %180 : vector<1x32xf32>
    %cst_72 = arith.constant 1.000000e+00 : f32
    %182 = vector.broadcast %cst_72 : f32 to vector<1x32xf32>
    %183 = arith.addf %182, %181 : vector<1x32xf32>
    %184 = arith.divf %182, %183 : vector<1x32xf32>
    %185 = vector.extract_strided_slice %22 {offsets = [5, 0], sizes = [1, 32], strides = [1, 1]} : vector<8x32xf32> to vector<1x32xf32>
    %186 = arith.addf %185, %175 : vector<1x32xf32>
    %187 = arith.negf %186 : vector<1x32xf32>
    %188 = math.exp %187 : vector<1x32xf32>
    %cst_73 = arith.constant 1.000000e+00 : f32
    %189 = vector.broadcast %cst_73 : f32 to vector<1x32xf32>
    %190 = arith.addf %189, %188 : vector<1x32xf32>
    %191 = arith.divf %189, %190 : vector<1x32xf32>
    %192 = vector.extract_strided_slice %29 {offsets = [5, 0], sizes = [1, 32], strides = [1, 1]} : vector<8x32xf32> to vector<1x32xf32>
    %193 = arith.mulf %184, %177 : vector<1x32xf32>
    %194 = arith.addf %192, %193 : vector<1x32xf32>
    %195 = math.tanh %194 : vector<1x32xf32>
    %cst_74 = arith.constant 1.000000e+00 : f32
    %196 = vector.broadcast %cst_74 : f32 to vector<1x32xf32>
    %197 = arith.subf %196, %191 : vector<1x32xf32>
    %198 = arith.mulf %197, %195 : vector<1x32xf32>
    %199 = arith.mulf %191, %173 : vector<1x32xf32>
    %200 = arith.addf %198, %199 : vector<1x32xf32>
    %cst_75 = arith.constant dense<0.000000e+00> : vector<1x32xf32>
    %201 = tpu.matmul %200, %31, %cst_75 {dimension_numbers = #tpu.dot_dimension_numbers<[1], [0], [0], [1], [0, 0, 1, 1], [], []>} : vector<1x32xf32>, vector<32x32xf32>, vector<1x32xf32> -> vector<1x32xf32>
    %cst_76 = arith.constant dense<0.000000e+00> : vector<1x32xf32>
    %202 = tpu.matmul %200, %33, %cst_76 {dimension_numbers = #tpu.dot_dimension_numbers<[1], [0], [0], [1], [0, 0, 1, 1], [], []>} : vector<1x32xf32>, vector<32x32xf32>, vector<1x32xf32> -> vector<1x32xf32>
    %cst_77 = arith.constant dense<0.000000e+00> : vector<1x32xf32>
    %203 = tpu.matmul %200, %35, %cst_77 {dimension_numbers = #tpu.dot_dimension_numbers<[1], [0], [0], [1], [0, 0, 1, 1], [], []>} : vector<1x32xf32>, vector<32x32xf32>, vector<1x32xf32> -> vector<1x32xf32>
    %204 = arith.addf %203, %37 : vector<1x32xf32>
    %205 = vector.extract_strided_slice %11 {offsets = [6, 0], sizes = [1, 32], strides = [1, 1]} : vector<8x32xf32> to vector<1x32xf32>
    %206 = arith.addf %205, %201 : vector<1x32xf32>
    %207 = arith.negf %206 : vector<1x32xf32>
    %208 = math.exp %207 : vector<1x32xf32>
    %cst_78 = arith.constant 1.000000e+00 : f32
    %209 = vector.broadcast %cst_78 : f32 to vector<1x32xf32>
    %210 = arith.addf %209, %208 : vector<1x32xf32>
    %211 = arith.divf %209, %210 : vector<1x32xf32>
    %212 = vector.extract_strided_slice %22 {offsets = [6, 0], sizes = [1, 32], strides = [1, 1]} : vector<8x32xf32> to vector<1x32xf32>
    %213 = arith.addf %212, %202 : vector<1x32xf32>
    %214 = arith.negf %213 : vector<1x32xf32>
    %215 = math.exp %214 : vector<1x32xf32>
    %cst_79 = arith.constant 1.000000e+00 : f32
    %216 = vector.broadcast %cst_79 : f32 to vector<1x32xf32>
    %217 = arith.addf %216, %215 : vector<1x32xf32>
    %218 = arith.divf %216, %217 : vector<1x32xf32>
    %219 = vector.extract_strided_slice %29 {offsets = [6, 0], sizes = [1, 32], strides = [1, 1]} : vector<8x32xf32> to vector<1x32xf32>
    %220 = arith.mulf %211, %204 : vector<1x32xf32>
    %221 = arith.addf %219, %220 : vector<1x32xf32>
    %222 = math.tanh %221 : vector<1x32xf32>
    %cst_80 = arith.constant 1.000000e+00 : f32
    %223 = vector.broadcast %cst_80 : f32 to vector<1x32xf32>
    %224 = arith.subf %223, %218 : vector<1x32xf32>
    %225 = arith.mulf %224, %222 : vector<1x32xf32>
    %226 = arith.mulf %218, %200 : vector<1x32xf32>
    %227 = arith.addf %225, %226 : vector<1x32xf32>
    %cst_81 = arith.constant dense<0.000000e+00> : vector<1x32xf32>
    %228 = tpu.matmul %227, %31, %cst_81 {dimension_numbers = #tpu.dot_dimension_numbers<[1], [0], [0], [1], [0, 0, 1, 1], [], []>} : vector<1x32xf32>, vector<32x32xf32>, vector<1x32xf32> -> vector<1x32xf32>
    %cst_82 = arith.constant dense<0.000000e+00> : vector<1x32xf32>
    %229 = tpu.matmul %227, %33, %cst_82 {dimension_numbers = #tpu.dot_dimension_numbers<[1], [0], [0], [1], [0, 0, 1, 1], [], []>} : vector<1x32xf32>, vector<32x32xf32>, vector<1x32xf32> -> vector<1x32xf32>
    %cst_83 = arith.constant dense<0.000000e+00> : vector<1x32xf32>
    %230 = tpu.matmul %227, %35, %cst_83 {dimension_numbers = #tpu.dot_dimension_numbers<[1], [0], [0], [1], [0, 0, 1, 1], [], []>} : vector<1x32xf32>, vector<32x32xf32>, vector<1x32xf32> -> vector<1x32xf32>
    %231 = arith.addf %230, %37 : vector<1x32xf32>
    %232 = vector.extract_strided_slice %11 {offsets = [7, 0], sizes = [1, 32], strides = [1, 1]} : vector<8x32xf32> to vector<1x32xf32>
    %233 = arith.addf %232, %228 : vector<1x32xf32>
    %234 = arith.negf %233 : vector<1x32xf32>
    %235 = math.exp %234 : vector<1x32xf32>
    %cst_84 = arith.constant 1.000000e+00 : f32
    %236 = vector.broadcast %cst_84 : f32 to vector<1x32xf32>
    %237 = arith.addf %236, %235 : vector<1x32xf32>
    %238 = arith.divf %236, %237 : vector<1x32xf32>
    %239 = vector.extract_strided_slice %22 {offsets = [7, 0], sizes = [1, 32], strides = [1, 1]} : vector<8x32xf32> to vector<1x32xf32>
    %240 = arith.addf %239, %229 : vector<1x32xf32>
    %241 = arith.negf %240 : vector<1x32xf32>
    %242 = math.exp %241 : vector<1x32xf32>
    %cst_85 = arith.constant 1.000000e+00 : f32
    %243 = vector.broadcast %cst_85 : f32 to vector<1x32xf32>
    %244 = arith.addf %243, %242 : vector<1x32xf32>
    %245 = arith.divf %243, %244 : vector<1x32xf32>
    %246 = vector.extract_strided_slice %29 {offsets = [7, 0], sizes = [1, 32], strides = [1, 1]} : vector<8x32xf32> to vector<1x32xf32>
    %247 = arith.mulf %238, %231 : vector<1x32xf32>
    %248 = arith.addf %246, %247 : vector<1x32xf32>
    %249 = math.tanh %248 : vector<1x32xf32>
    %cst_86 = arith.constant 1.000000e+00 : f32
    %250 = vector.broadcast %cst_86 : f32 to vector<1x32xf32>
    %251 = arith.subf %250, %245 : vector<1x32xf32>
    %252 = arith.mulf %251, %249 : vector<1x32xf32>
    %253 = arith.mulf %245, %227 : vector<1x32xf32>
    %254 = arith.addf %252, %253 : vector<1x32xf32>
    %255 = tpu.concatenate %65, %92, %119, %146, %173, %200, %227, %254 in 0 : vector<1x32xf32>, vector<1x32xf32>, vector<1x32xf32>, vector<1x32xf32>, vector<1x32xf32>, vector<1x32xf32>, vector<1x32xf32>, vector<1x32xf32> -> vector<8x32xf32>
    %c0_87 = arith.constant 0 : index
    %c0_88 = arith.constant 0 : index
    %c0_89 = arith.constant 0 : index
    %256 = vector.load %arg6[%c0_87, %c0_88, %c0_89] : memref<3x32x32xf32, #tpu.memory_space<vmem>>, vector<1x32x32xf32>
    %257 = vector.shape_cast %256 : vector<1x32x32xf32> to vector<32x32xf32>
    %cst_90 = arith.constant dense<0.000000e+00> : vector<8x32xf32>
    %258 = tpu.matmul %255, %257, %cst_90 {dimension_numbers = #tpu.dot_dimension_numbers<[1], [0], [0], [1], [0, 0, 1, 1], [], []>} : vector<8x32xf32>, vector<32x32xf32>, vector<8x32xf32> -> vector<8x32xf32>
    %c0_91 = arith.constant 0 : index
    %c0_92 = arith.constant 0 : index
    %c0_93 = arith.constant 0 : index
    %259 = vector.load %arg8[%c0_91, %c0_92, %c0_93] : memref<3x1x32xf32, #tpu.memory_space<vmem>>, vector<1x1x32xf32>
    %260 = vector.shape_cast %259 : vector<1x1x32xf32> to vector<1x32xf32>
    %261 = vector.broadcast %260 : vector<1x32xf32> to vector<8x32xf32>
    %262 = arith.addf %258, %261 : vector<8x32xf32>
    %c0_94 = arith.constant 0 : index
    %c0_95 = arith.constant 0 : index
    %c0_96 = arith.constant 0 : index
    %263 = vector.load %arg9[%c0_94, %c0_95, %c0_96] : memref<3x1x32xf32, #tpu.memory_space<vmem>>, vector<1x1x32xf32>
    %264 = vector.shape_cast %263 : vector<1x1x32xf32> to vector<1x32xf32>
    %265 = vector.broadcast %264 : vector<1x32xf32> to vector<8x32xf32>
    %266 = arith.addf %262, %265 : vector<8x32xf32>
    %c1_97 = arith.constant 1 : index
    %c0_98 = arith.constant 0 : index
    %c0_99 = arith.constant 0 : index
    %267 = vector.load %arg6[%c1_97, %c0_98, %c0_99] : memref<3x32x32xf32, #tpu.memory_space<vmem>>, vector<1x32x32xf32>
    %268 = vector.shape_cast %267 : vector<1x32x32xf32> to vector<32x32xf32>
    %cst_100 = arith.constant dense<0.000000e+00> : vector<8x32xf32>
    %269 = tpu.matmul %255, %268, %cst_100 {dimension_numbers = #tpu.dot_dimension_numbers<[1], [0], [0], [1], [0, 0, 1, 1], [], []>} : vector<8x32xf32>, vector<32x32xf32>, vector<8x32xf32> -> vector<8x32xf32>
    %c1_101 = arith.constant 1 : index
    %c0_102 = arith.constant 0 : index
    %c0_103 = arith.constant 0 : index
    %270 = vector.load %arg8[%c1_101, %c0_102, %c0_103] : memref<3x1x32xf32, #tpu.memory_space<vmem>>, vector<1x1x32xf32>
    %271 = vector.shape_cast %270 : vector<1x1x32xf32> to vector<1x32xf32>
    %272 = vector.broadcast %271 : vector<1x32xf32> to vector<8x32xf32>
    %273 = arith.addf %269, %272 : vector<8x32xf32>
    %c1_104 = arith.constant 1 : index
    %c0_105 = arith.constant 0 : index
    %c0_106 = arith.constant 0 : index
    %274 = vector.load %arg9[%c1_104, %c0_105, %c0_106] : memref<3x1x32xf32, #tpu.memory_space<vmem>>, vector<1x1x32xf32>
    %275 = vector.shape_cast %274 : vector<1x1x32xf32> to vector<1x32xf32>
    %276 = vector.broadcast %275 : vector<1x32xf32> to vector<8x32xf32>
    %277 = arith.addf %273, %276 : vector<8x32xf32>
    %c2_107 = arith.constant 2 : index
    %c0_108 = arith.constant 0 : index
    %c0_109 = arith.constant 0 : index
    %278 = vector.load %arg6[%c2_107, %c0_108, %c0_109] : memref<3x32x32xf32, #tpu.memory_space<vmem>>, vector<1x32x32xf32>
    %279 = vector.shape_cast %278 : vector<1x32x32xf32> to vector<32x32xf32>
    %cst_110 = arith.constant dense<0.000000e+00> : vector<8x32xf32>
    %280 = tpu.matmul %255, %279, %cst_110 {dimension_numbers = #tpu.dot_dimension_numbers<[1], [0], [0], [1], [0, 0, 1, 1], [], []>} : vector<8x32xf32>, vector<32x32xf32>, vector<8x32xf32> -> vector<8x32xf32>
    %c2_111 = arith.constant 2 : index
    %c0_112 = arith.constant 0 : index
    %c0_113 = arith.constant 0 : index
    %281 = vector.load %arg8[%c2_111, %c0_112, %c0_113] : memref<3x1x32xf32, #tpu.memory_space<vmem>>, vector<1x1x32xf32>
    %282 = vector.shape_cast %281 : vector<1x1x32xf32> to vector<1x32xf32>
    %283 = vector.broadcast %282 : vector<1x32xf32> to vector<8x32xf32>
    %284 = arith.addf %280, %283 : vector<8x32xf32>
    %c0_114 = arith.constant 0 : index
    %c0_115 = arith.constant 0 : index
    %c0_116 = arith.constant 0 : index
    %285 = vector.load %arg7[%c0_114, %c0_115, %c0_116] : memref<3x32x32xf32, #tpu.memory_space<vmem>>, vector<1x32x32xf32>
    %286 = vector.shape_cast %285 : vector<1x32x32xf32> to vector<32x32xf32>
    %c1_117 = arith.constant 1 : index
    %c0_118 = arith.constant 0 : index
    %c0_119 = arith.constant 0 : index
    %287 = vector.load %arg7[%c1_117, %c0_118, %c0_119] : memref<3x32x32xf32, #tpu.memory_space<vmem>>, vector<1x32x32xf32>
    %288 = vector.shape_cast %287 : vector<1x32x32xf32> to vector<32x32xf32>
    %c2_120 = arith.constant 2 : index
    %c0_121 = arith.constant 0 : index
    %c0_122 = arith.constant 0 : index
    %289 = vector.load %arg7[%c2_120, %c0_121, %c0_122] : memref<3x32x32xf32, #tpu.memory_space<vmem>>, vector<1x32x32xf32>
    %290 = vector.shape_cast %289 : vector<1x32x32xf32> to vector<32x32xf32>
    %c2_123 = arith.constant 2 : index
    %c0_124 = arith.constant 0 : index
    %c0_125 = arith.constant 0 : index
    %291 = vector.load %arg9[%c2_123, %c0_124, %c0_125] : memref<3x1x32xf32, #tpu.memory_space<vmem>>, vector<1x1x32xf32>
    %292 = vector.shape_cast %291 : vector<1x1x32xf32> to vector<1x32xf32>
    %c1_126 = arith.constant 1 : index
    %c0_127 = arith.constant 0 : index
    %293 = vector.load %arg1[%c1_126, %c0_127] : memref<2x32xf32, #tpu.memory_space<vmem>>, vector<1x32xf32>
    %cst_128 = arith.constant dense<0.000000e+00> : vector<1x32xf32>
    %294 = tpu.matmul %293, %286, %cst_128 {dimension_numbers = #tpu.dot_dimension_numbers<[1], [0], [0], [1], [0, 0, 1, 1], [], []>} : vector<1x32xf32>, vector<32x32xf32>, vector<1x32xf32> -> vector<1x32xf32>
    %cst_129 = arith.constant dense<0.000000e+00> : vector<1x32xf32>
    %295 = tpu.matmul %293, %288, %cst_129 {dimension_numbers = #tpu.dot_dimension_numbers<[1], [0], [0], [1], [0, 0, 1, 1], [], []>} : vector<1x32xf32>, vector<32x32xf32>, vector<1x32xf32> -> vector<1x32xf32>
    %cst_130 = arith.constant dense<0.000000e+00> : vector<1x32xf32>
    %296 = tpu.matmul %293, %290, %cst_130 {dimension_numbers = #tpu.dot_dimension_numbers<[1], [0], [0], [1], [0, 0, 1, 1], [], []>} : vector<1x32xf32>, vector<32x32xf32>, vector<1x32xf32> -> vector<1x32xf32>
    %297 = arith.addf %296, %292 : vector<1x32xf32>
    %298 = vector.extract_strided_slice %266 {offsets = [0, 0], sizes = [1, 32], strides = [1, 1]} : vector<8x32xf32> to vector<1x32xf32>
    %299 = arith.addf %298, %294 : vector<1x32xf32>
    %300 = arith.negf %299 : vector<1x32xf32>
    %301 = math.exp %300 : vector<1x32xf32>
    %cst_131 = arith.constant 1.000000e+00 : f32
    %302 = vector.broadcast %cst_131 : f32 to vector<1x32xf32>
    %303 = arith.addf %302, %301 : vector<1x32xf32>
    %304 = arith.divf %302, %303 : vector<1x32xf32>
    %305 = vector.extract_strided_slice %277 {offsets = [0, 0], sizes = [1, 32], strides = [1, 1]} : vector<8x32xf32> to vector<1x32xf32>
    %306 = arith.addf %305, %295 : vector<1x32xf32>
    %307 = arith.negf %306 : vector<1x32xf32>
    %308 = math.exp %307 : vector<1x32xf32>
    %cst_132 = arith.constant 1.000000e+00 : f32
    %309 = vector.broadcast %cst_132 : f32 to vector<1x32xf32>
    %310 = arith.addf %309, %308 : vector<1x32xf32>
    %311 = arith.divf %309, %310 : vector<1x32xf32>
    %312 = vector.extract_strided_slice %284 {offsets = [0, 0], sizes = [1, 32], strides = [1, 1]} : vector<8x32xf32> to vector<1x32xf32>
    %313 = arith.mulf %304, %297 : vector<1x32xf32>
    %314 = arith.addf %312, %313 : vector<1x32xf32>
    %315 = math.tanh %314 : vector<1x32xf32>
    %cst_133 = arith.constant 1.000000e+00 : f32
    %316 = vector.broadcast %cst_133 : f32 to vector<1x32xf32>
    %317 = arith.subf %316, %311 : vector<1x32xf32>
    %318 = arith.mulf %317, %315 : vector<1x32xf32>
    %319 = arith.mulf %311, %293 : vector<1x32xf32>
    %320 = arith.addf %318, %319 : vector<1x32xf32>
    %cst_134 = arith.constant dense<0.000000e+00> : vector<1x32xf32>
    %321 = tpu.matmul %320, %286, %cst_134 {dimension_numbers = #tpu.dot_dimension_numbers<[1], [0], [0], [1], [0, 0, 1, 1], [], []>} : vector<1x32xf32>, vector<32x32xf32>, vector<1x32xf32> -> vector<1x32xf32>
    %cst_135 = arith.constant dense<0.000000e+00> : vector<1x32xf32>
    %322 = tpu.matmul %320, %288, %cst_135 {dimension_numbers = #tpu.dot_dimension_numbers<[1], [0], [0], [1], [0, 0, 1, 1], [], []>} : vector<1x32xf32>, vector<32x32xf32>, vector<1x32xf32> -> vector<1x32xf32>
    %cst_136 = arith.constant dense<0.000000e+00> : vector<1x32xf32>
    %323 = tpu.matmul %320, %290, %cst_136 {dimension_numbers = #tpu.dot_dimension_numbers<[1], [0], [0], [1], [0, 0, 1, 1], [], []>} : vector<1x32xf32>, vector<32x32xf32>, vector<1x32xf32> -> vector<1x32xf32>
    %324 = arith.addf %323, %292 : vector<1x32xf32>
    %325 = vector.extract_strided_slice %266 {offsets = [1, 0], sizes = [1, 32], strides = [1, 1]} : vector<8x32xf32> to vector<1x32xf32>
    %326 = arith.addf %325, %321 : vector<1x32xf32>
    %327 = arith.negf %326 : vector<1x32xf32>
    %328 = math.exp %327 : vector<1x32xf32>
    %cst_137 = arith.constant 1.000000e+00 : f32
    %329 = vector.broadcast %cst_137 : f32 to vector<1x32xf32>
    %330 = arith.addf %329, %328 : vector<1x32xf32>
    %331 = arith.divf %329, %330 : vector<1x32xf32>
    %332 = vector.extract_strided_slice %277 {offsets = [1, 0], sizes = [1, 32], strides = [1, 1]} : vector<8x32xf32> to vector<1x32xf32>
    %333 = arith.addf %332, %322 : vector<1x32xf32>
    %334 = arith.negf %333 : vector<1x32xf32>
    %335 = math.exp %334 : vector<1x32xf32>
    %cst_138 = arith.constant 1.000000e+00 : f32
    %336 = vector.broadcast %cst_138 : f32 to vector<1x32xf32>
    %337 = arith.addf %336, %335 : vector<1x32xf32>
    %338 = arith.divf %336, %337 : vector<1x32xf32>
    %339 = vector.extract_strided_slice %284 {offsets = [1, 0], sizes = [1, 32], strides = [1, 1]} : vector<8x32xf32> to vector<1x32xf32>
    %340 = arith.mulf %331, %324 : vector<1x32xf32>
    %341 = arith.addf %339, %340 : vector<1x32xf32>
    %342 = math.tanh %341 : vector<1x32xf32>
    %cst_139 = arith.constant 1.000000e+00 : f32
    %343 = vector.broadcast %cst_139 : f32 to vector<1x32xf32>
    %344 = arith.subf %343, %338 : vector<1x32xf32>
    %345 = arith.mulf %344, %342 : vector<1x32xf32>
    %346 = arith.mulf %338, %320 : vector<1x32xf32>
    %347 = arith.addf %345, %346 : vector<1x32xf32>
    %cst_140 = arith.constant dense<0.000000e+00> : vector<1x32xf32>
    %348 = tpu.matmul %347, %286, %cst_140 {dimension_numbers = #tpu.dot_dimension_numbers<[1], [0], [0], [1], [0, 0, 1, 1], [], []>} : vector<1x32xf32>, vector<32x32xf32>, vector<1x32xf32> -> vector<1x32xf32>
    %cst_141 = arith.constant dense<0.000000e+00> : vector<1x32xf32>
    %349 = tpu.matmul %347, %288, %cst_141 {dimension_numbers = #tpu.dot_dimension_numbers<[1], [0], [0], [1], [0, 0, 1, 1], [], []>} : vector<1x32xf32>, vector<32x32xf32>, vector<1x32xf32> -> vector<1x32xf32>
    %cst_142 = arith.constant dense<0.000000e+00> : vector<1x32xf32>
    %350 = tpu.matmul %347, %290, %cst_142 {dimension_numbers = #tpu.dot_dimension_numbers<[1], [0], [0], [1], [0, 0, 1, 1], [], []>} : vector<1x32xf32>, vector<32x32xf32>, vector<1x32xf32> -> vector<1x32xf32>
    %351 = arith.addf %350, %292 : vector<1x32xf32>
    %352 = vector.extract_strided_slice %266 {offsets = [2, 0], sizes = [1, 32], strides = [1, 1]} : vector<8x32xf32> to vector<1x32xf32>
    %353 = arith.addf %352, %348 : vector<1x32xf32>
    %354 = arith.negf %353 : vector<1x32xf32>
    %355 = math.exp %354 : vector<1x32xf32>
    %cst_143 = arith.constant 1.000000e+00 : f32
    %356 = vector.broadcast %cst_143 : f32 to vector<1x32xf32>
    %357 = arith.addf %356, %355 : vector<1x32xf32>
    %358 = arith.divf %356, %357 : vector<1x32xf32>
    %359 = vector.extract_strided_slice %277 {offsets = [2, 0], sizes = [1, 32], strides = [1, 1]} : vector<8x32xf32> to vector<1x32xf32>
    %360 = arith.addf %359, %349 : vector<1x32xf32>
    %361 = arith.negf %360 : vector<1x32xf32>
    %362 = math.exp %361 : vector<1x32xf32>
    %cst_144 = arith.constant 1.000000e+00 : f32
    %363 = vector.broadcast %cst_144 : f32 to vector<1x32xf32>
    %364 = arith.addf %363, %362 : vector<1x32xf32>
    %365 = arith.divf %363, %364 : vector<1x32xf32>
    %366 = vector.extract_strided_slice %284 {offsets = [2, 0], sizes = [1, 32], strides = [1, 1]} : vector<8x32xf32> to vector<1x32xf32>
    %367 = arith.mulf %358, %351 : vector<1x32xf32>
    %368 = arith.addf %366, %367 : vector<1x32xf32>
    %369 = math.tanh %368 : vector<1x32xf32>
    %cst_145 = arith.constant 1.000000e+00 : f32
    %370 = vector.broadcast %cst_145 : f32 to vector<1x32xf32>
    %371 = arith.subf %370, %365 : vector<1x32xf32>
    %372 = arith.mulf %371, %369 : vector<1x32xf32>
    %373 = arith.mulf %365, %347 : vector<1x32xf32>
    %374 = arith.addf %372, %373 : vector<1x32xf32>
    %cst_146 = arith.constant dense<0.000000e+00> : vector<1x32xf32>
    %375 = tpu.matmul %374, %286, %cst_146 {dimension_numbers = #tpu.dot_dimension_numbers<[1], [0], [0], [1], [0, 0, 1, 1], [], []>} : vector<1x32xf32>, vector<32x32xf32>, vector<1x32xf32> -> vector<1x32xf32>
    %cst_147 = arith.constant dense<0.000000e+00> : vector<1x32xf32>
    %376 = tpu.matmul %374, %288, %cst_147 {dimension_numbers = #tpu.dot_dimension_numbers<[1], [0], [0], [1], [0, 0, 1, 1], [], []>} : vector<1x32xf32>, vector<32x32xf32>, vector<1x32xf32> -> vector<1x32xf32>
    %cst_148 = arith.constant dense<0.000000e+00> : vector<1x32xf32>
    %377 = tpu.matmul %374, %290, %cst_148 {dimension_numbers = #tpu.dot_dimension_numbers<[1], [0], [0], [1], [0, 0, 1, 1], [], []>} : vector<1x32xf32>, vector<32x32xf32>, vector<1x32xf32> -> vector<1x32xf32>
    %378 = arith.addf %377, %292 : vector<1x32xf32>
    %379 = vector.extract_strided_slice %266 {offsets = [3, 0], sizes = [1, 32], strides = [1, 1]} : vector<8x32xf32> to vector<1x32xf32>
    %380 = arith.addf %379, %375 : vector<1x32xf32>
    %381 = arith.negf %380 : vector<1x32xf32>
    %382 = math.exp %381 : vector<1x32xf32>
    %cst_149 = arith.constant 1.000000e+00 : f32
    %383 = vector.broadcast %cst_149 : f32 to vector<1x32xf32>
    %384 = arith.addf %383, %382 : vector<1x32xf32>
    %385 = arith.divf %383, %384 : vector<1x32xf32>
    %386 = vector.extract_strided_slice %277 {offsets = [3, 0], sizes = [1, 32], strides = [1, 1]} : vector<8x32xf32> to vector<1x32xf32>
    %387 = arith.addf %386, %376 : vector<1x32xf32>
    %388 = arith.negf %387 : vector<1x32xf32>
    %389 = math.exp %388 : vector<1x32xf32>
    %cst_150 = arith.constant 1.000000e+00 : f32
    %390 = vector.broadcast %cst_150 : f32 to vector<1x32xf32>
    %391 = arith.addf %390, %389 : vector<1x32xf32>
    %392 = arith.divf %390, %391 : vector<1x32xf32>
    %393 = vector.extract_strided_slice %284 {offsets = [3, 0], sizes = [1, 32], strides = [1, 1]} : vector<8x32xf32> to vector<1x32xf32>
    %394 = arith.mulf %385, %378 : vector<1x32xf32>
    %395 = arith.addf %393, %394 : vector<1x32xf32>
    %396 = math.tanh %395 : vector<1x32xf32>
    %cst_151 = arith.constant 1.000000e+00 : f32
    %397 = vector.broadcast %cst_151 : f32 to vector<1x32xf32>
    %398 = arith.subf %397, %392 : vector<1x32xf32>
    %399 = arith.mulf %398, %396 : vector<1x32xf32>
    %400 = arith.mulf %392, %374 : vector<1x32xf32>
    %401 = arith.addf %399, %400 : vector<1x32xf32>
    %cst_152 = arith.constant dense<0.000000e+00> : vector<1x32xf32>
    %402 = tpu.matmul %401, %286, %cst_152 {dimension_numbers = #tpu.dot_dimension_numbers<[1], [0], [0], [1], [0, 0, 1, 1], [], []>} : vector<1x32xf32>, vector<32x32xf32>, vector<1x32xf32> -> vector<1x32xf32>
    %cst_153 = arith.constant dense<0.000000e+00> : vector<1x32xf32>
    %403 = tpu.matmul %401, %288, %cst_153 {dimension_numbers = #tpu.dot_dimension_numbers<[1], [0], [0], [1], [0, 0, 1, 1], [], []>} : vector<1x32xf32>, vector<32x32xf32>, vector<1x32xf32> -> vector<1x32xf32>
    %cst_154 = arith.constant dense<0.000000e+00> : vector<1x32xf32>
    %404 = tpu.matmul %401, %290, %cst_154 {dimension_numbers = #tpu.dot_dimension_numbers<[1], [0], [0], [1], [0, 0, 1, 1], [], []>} : vector<1x32xf32>, vector<32x32xf32>, vector<1x32xf32> -> vector<1x32xf32>
    %405 = arith.addf %404, %292 : vector<1x32xf32>
    %406 = vector.extract_strided_slice %266 {offsets = [4, 0], sizes = [1, 32], strides = [1, 1]} : vector<8x32xf32> to vector<1x32xf32>
    %407 = arith.addf %406, %402 : vector<1x32xf32>
    %408 = arith.negf %407 : vector<1x32xf32>
    %409 = math.exp %408 : vector<1x32xf32>
    %cst_155 = arith.constant 1.000000e+00 : f32
    %410 = vector.broadcast %cst_155 : f32 to vector<1x32xf32>
    %411 = arith.addf %410, %409 : vector<1x32xf32>
    %412 = arith.divf %410, %411 : vector<1x32xf32>
    %413 = vector.extract_strided_slice %277 {offsets = [4, 0], sizes = [1, 32], strides = [1, 1]} : vector<8x32xf32> to vector<1x32xf32>
    %414 = arith.addf %413, %403 : vector<1x32xf32>
    %415 = arith.negf %414 : vector<1x32xf32>
    %416 = math.exp %415 : vector<1x32xf32>
    %cst_156 = arith.constant 1.000000e+00 : f32
    %417 = vector.broadcast %cst_156 : f32 to vector<1x32xf32>
    %418 = arith.addf %417, %416 : vector<1x32xf32>
    %419 = arith.divf %417, %418 : vector<1x32xf32>
    %420 = vector.extract_strided_slice %284 {offsets = [4, 0], sizes = [1, 32], strides = [1, 1]} : vector<8x32xf32> to vector<1x32xf32>
    %421 = arith.mulf %412, %405 : vector<1x32xf32>
    %422 = arith.addf %420, %421 : vector<1x32xf32>
    %423 = math.tanh %422 : vector<1x32xf32>
    %cst_157 = arith.constant 1.000000e+00 : f32
    %424 = vector.broadcast %cst_157 : f32 to vector<1x32xf32>
    %425 = arith.subf %424, %419 : vector<1x32xf32>
    %426 = arith.mulf %425, %423 : vector<1x32xf32>
    %427 = arith.mulf %419, %401 : vector<1x32xf32>
    %428 = arith.addf %426, %427 : vector<1x32xf32>
    %cst_158 = arith.constant dense<0.000000e+00> : vector<1x32xf32>
    %429 = tpu.matmul %428, %286, %cst_158 {dimension_numbers = #tpu.dot_dimension_numbers<[1], [0], [0], [1], [0, 0, 1, 1], [], []>} : vector<1x32xf32>, vector<32x32xf32>, vector<1x32xf32> -> vector<1x32xf32>
    %cst_159 = arith.constant dense<0.000000e+00> : vector<1x32xf32>
    %430 = tpu.matmul %428, %288, %cst_159 {dimension_numbers = #tpu.dot_dimension_numbers<[1], [0], [0], [1], [0, 0, 1, 1], [], []>} : vector<1x32xf32>, vector<32x32xf32>, vector<1x32xf32> -> vector<1x32xf32>
    %cst_160 = arith.constant dense<0.000000e+00> : vector<1x32xf32>
    %431 = tpu.matmul %428, %290, %cst_160 {dimension_numbers = #tpu.dot_dimension_numbers<[1], [0], [0], [1], [0, 0, 1, 1], [], []>} : vector<1x32xf32>, vector<32x32xf32>, vector<1x32xf32> -> vector<1x32xf32>
    %432 = arith.addf %431, %292 : vector<1x32xf32>
    %433 = vector.extract_strided_slice %266 {offsets = [5, 0], sizes = [1, 32], strides = [1, 1]} : vector<8x32xf32> to vector<1x32xf32>
    %434 = arith.addf %433, %429 : vector<1x32xf32>
    %435 = arith.negf %434 : vector<1x32xf32>
    %436 = math.exp %435 : vector<1x32xf32>
    %cst_161 = arith.constant 1.000000e+00 : f32
    %437 = vector.broadcast %cst_161 : f32 to vector<1x32xf32>
    %438 = arith.addf %437, %436 : vector<1x32xf32>
    %439 = arith.divf %437, %438 : vector<1x32xf32>
    %440 = vector.extract_strided_slice %277 {offsets = [5, 0], sizes = [1, 32], strides = [1, 1]} : vector<8x32xf32> to vector<1x32xf32>
    %441 = arith.addf %440, %430 : vector<1x32xf32>
    %442 = arith.negf %441 : vector<1x32xf32>
    %443 = math.exp %442 : vector<1x32xf32>
    %cst_162 = arith.constant 1.000000e+00 : f32
    %444 = vector.broadcast %cst_162 : f32 to vector<1x32xf32>
    %445 = arith.addf %444, %443 : vector<1x32xf32>
    %446 = arith.divf %444, %445 : vector<1x32xf32>
    %447 = vector.extract_strided_slice %284 {offsets = [5, 0], sizes = [1, 32], strides = [1, 1]} : vector<8x32xf32> to vector<1x32xf32>
    %448 = arith.mulf %439, %432 : vector<1x32xf32>
    %449 = arith.addf %447, %448 : vector<1x32xf32>
    %450 = math.tanh %449 : vector<1x32xf32>
    %cst_163 = arith.constant 1.000000e+00 : f32
    %451 = vector.broadcast %cst_163 : f32 to vector<1x32xf32>
    %452 = arith.subf %451, %446 : vector<1x32xf32>
    %453 = arith.mulf %452, %450 : vector<1x32xf32>
    %454 = arith.mulf %446, %428 : vector<1x32xf32>
    %455 = arith.addf %453, %454 : vector<1x32xf32>
    %cst_164 = arith.constant dense<0.000000e+00> : vector<1x32xf32>
    %456 = tpu.matmul %455, %286, %cst_164 {dimension_numbers = #tpu.dot_dimension_numbers<[1], [0], [0], [1], [0, 0, 1, 1], [], []>} : vector<1x32xf32>, vector<32x32xf32>, vector<1x32xf32> -> vector<1x32xf32>
    %cst_165 = arith.constant dense<0.000000e+00> : vector<1x32xf32>
    %457 = tpu.matmul %455, %288, %cst_165 {dimension_numbers = #tpu.dot_dimension_numbers<[1], [0], [0], [1], [0, 0, 1, 1], [], []>} : vector<1x32xf32>, vector<32x32xf32>, vector<1x32xf32> -> vector<1x32xf32>
    %cst_166 = arith.constant dense<0.000000e+00> : vector<1x32xf32>
    %458 = tpu.matmul %455, %290, %cst_166 {dimension_numbers = #tpu.dot_dimension_numbers<[1], [0], [0], [1], [0, 0, 1, 1], [], []>} : vector<1x32xf32>, vector<32x32xf32>, vector<1x32xf32> -> vector<1x32xf32>
    %459 = arith.addf %458, %292 : vector<1x32xf32>
    %460 = vector.extract_strided_slice %266 {offsets = [6, 0], sizes = [1, 32], strides = [1, 1]} : vector<8x32xf32> to vector<1x32xf32>
    %461 = arith.addf %460, %456 : vector<1x32xf32>
    %462 = arith.negf %461 : vector<1x32xf32>
    %463 = math.exp %462 : vector<1x32xf32>
    %cst_167 = arith.constant 1.000000e+00 : f32
    %464 = vector.broadcast %cst_167 : f32 to vector<1x32xf32>
    %465 = arith.addf %464, %463 : vector<1x32xf32>
    %466 = arith.divf %464, %465 : vector<1x32xf32>
    %467 = vector.extract_strided_slice %277 {offsets = [6, 0], sizes = [1, 32], strides = [1, 1]} : vector<8x32xf32> to vector<1x32xf32>
    %468 = arith.addf %467, %457 : vector<1x32xf32>
    %469 = arith.negf %468 : vector<1x32xf32>
    %470 = math.exp %469 : vector<1x32xf32>
    %cst_168 = arith.constant 1.000000e+00 : f32
    %471 = vector.broadcast %cst_168 : f32 to vector<1x32xf32>
    %472 = arith.addf %471, %470 : vector<1x32xf32>
    %473 = arith.divf %471, %472 : vector<1x32xf32>
    %474 = vector.extract_strided_slice %284 {offsets = [6, 0], sizes = [1, 32], strides = [1, 1]} : vector<8x32xf32> to vector<1x32xf32>
    %475 = arith.mulf %466, %459 : vector<1x32xf32>
    %476 = arith.addf %474, %475 : vector<1x32xf32>
    %477 = math.tanh %476 : vector<1x32xf32>
    %cst_169 = arith.constant 1.000000e+00 : f32
    %478 = vector.broadcast %cst_169 : f32 to vector<1x32xf32>
    %479 = arith.subf %478, %473 : vector<1x32xf32>
    %480 = arith.mulf %479, %477 : vector<1x32xf32>
    %481 = arith.mulf %473, %455 : vector<1x32xf32>
    %482 = arith.addf %480, %481 : vector<1x32xf32>
    %cst_170 = arith.constant dense<0.000000e+00> : vector<1x32xf32>
    %483 = tpu.matmul %482, %286, %cst_170 {dimension_numbers = #tpu.dot_dimension_numbers<[1], [0], [0], [1], [0, 0, 1, 1], [], []>} : vector<1x32xf32>, vector<32x32xf32>, vector<1x32xf32> -> vector<1x32xf32>
    %cst_171 = arith.constant dense<0.000000e+00> : vector<1x32xf32>
    %484 = tpu.matmul %482, %288, %cst_171 {dimension_numbers = #tpu.dot_dimension_numbers<[1], [0], [0], [1], [0, 0, 1, 1], [], []>} : vector<1x32xf32>, vector<32x32xf32>, vector<1x32xf32> -> vector<1x32xf32>
    %cst_172 = arith.constant dense<0.000000e+00> : vector<1x32xf32>
    %485 = tpu.matmul %482, %290, %cst_172 {dimension_numbers = #tpu.dot_dimension_numbers<[1], [0], [0], [1], [0, 0, 1, 1], [], []>} : vector<1x32xf32>, vector<32x32xf32>, vector<1x32xf32> -> vector<1x32xf32>
    %486 = arith.addf %485, %292 : vector<1x32xf32>
    %487 = vector.extract_strided_slice %266 {offsets = [7, 0], sizes = [1, 32], strides = [1, 1]} : vector<8x32xf32> to vector<1x32xf32>
    %488 = arith.addf %487, %483 : vector<1x32xf32>
    %489 = arith.negf %488 : vector<1x32xf32>
    %490 = math.exp %489 : vector<1x32xf32>
    %cst_173 = arith.constant 1.000000e+00 : f32
    %491 = vector.broadcast %cst_173 : f32 to vector<1x32xf32>
    %492 = arith.addf %491, %490 : vector<1x32xf32>
    %493 = arith.divf %491, %492 : vector<1x32xf32>
    %494 = vector.extract_strided_slice %277 {offsets = [7, 0], sizes = [1, 32], strides = [1, 1]} : vector<8x32xf32> to vector<1x32xf32>
    %495 = arith.addf %494, %484 : vector<1x32xf32>
    %496 = arith.negf %495 : vector<1x32xf32>
    %497 = math.exp %496 : vector<1x32xf32>
    %cst_174 = arith.constant 1.000000e+00 : f32
    %498 = vector.broadcast %cst_174 : f32 to vector<1x32xf32>
    %499 = arith.addf %498, %497 : vector<1x32xf32>
    %500 = arith.divf %498, %499 : vector<1x32xf32>
    %501 = vector.extract_strided_slice %284 {offsets = [7, 0], sizes = [1, 32], strides = [1, 1]} : vector<8x32xf32> to vector<1x32xf32>
    %502 = arith.mulf %493, %486 : vector<1x32xf32>
    %503 = arith.addf %501, %502 : vector<1x32xf32>
    %504 = math.tanh %503 : vector<1x32xf32>
    %cst_175 = arith.constant 1.000000e+00 : f32
    %505 = vector.broadcast %cst_175 : f32 to vector<1x32xf32>
    %506 = arith.subf %505, %500 : vector<1x32xf32>
    %507 = arith.mulf %506, %504 : vector<1x32xf32>
    %508 = arith.mulf %500, %482 : vector<1x32xf32>
    %509 = arith.addf %507, %508 : vector<1x32xf32>
    %510 = tpu.concatenate %320, %347, %374, %401, %428, %455, %482, %509 in 0 : vector<1x32xf32>, vector<1x32xf32>, vector<1x32xf32>, vector<1x32xf32>, vector<1x32xf32>, vector<1x32xf32>, vector<1x32xf32>, vector<1x32xf32> -> vector<8x32xf32>
    %511 = tpu.concatenate %254, %509 in 0 : vector<1x32xf32>, vector<1x32xf32> -> vector<2x32xf32>
    %c0_176 = arith.constant 0 : index
    %c0_177 = arith.constant 0 : index
    %512 = vector.load %arg17[%c0_176, %c0_177] : memref<2x32xf32, #tpu.memory_space<vmem>>, vector<2x32xf32>
    tpu.vector_store %arg17[%c0_176, %c0_177], %511 {strides = array<i32>} : memref<2x32xf32, #tpu.memory_space<vmem>>, vector<2x32xf32>,
    %c0_178 = arith.constant 0 : index
    %c0_179 = arith.constant 0 : index
    %513 = vector.load %arg10[%c0_178, %c0_179] : memref<32x256xf32, #tpu.memory_space<vmem>>, vector<32x256xf32>
    %cst_180 = arith.constant dense<0.000000e+00> : vector<8x256xf32>
    %514 = tpu.matmul %510, %513, %cst_180 {dimension_numbers = #tpu.dot_dimension_numbers<[1], [0], [0], [1], [0, 0, 1, 1], [], []>} : vector<8x32xf32>, vector<32x256xf32>, vector<8x256xf32> -> vector<8x256xf32>
    %c0_181 = arith.constant 0 : index
    %c0_182 = arith.constant 0 : index
    %515 = vector.load %arg11[%c0_181, %c0_182] : memref<1x256xf32, #tpu.memory_space<vmem>>, vector<1x256xf32>
    %516 = vector.broadcast %515 : vector<1x256xf32> to vector<8x256xf32>
    %517 = arith.addf %514, %516 : vector<8x256xf32>
    %cst_183 = arith.constant 0.000000e+00 : f32
    %518 = vector.broadcast %cst_183 : f32 to vector<8x256xf32>
    %519 = arith.cmpf ogt, %517, %518 : vector<8x256xf32>
    %cst_184 = arith.constant 0.000000e+00 : f32
    %520 = vector.broadcast %cst_184 : f32 to vector<8x256xf32>
    %521 = arith.minimumf %517, %520 : vector<8x256xf32>
    %522 = math.exp %521 : vector<8x256xf32>
    %cst_185 = arith.constant 1.000000e+00 : f32
    %523 = vector.broadcast %cst_185 : f32 to vector<8x256xf32>
    %524 = arith.subf %522, %523 : vector<8x256xf32>
    %525 = arith.select %519, %517, %524 : vector<8x256xi1>, vector<8x256xf32>
    %c0_186 = arith.constant 0 : index
    %c0_187 = arith.constant 0 : index
    %526 = vector.load %arg12[%c0_186, %c0_187] : memref<256x256xf32, #tpu.memory_space<vmem>>, vector<256x256xf32>
    %cst_188 = arith.constant dense<0.000000e+00> : vector<8x256xf32>
    %527 = tpu.matmul %525, %526, %cst_188 {dimension_numbers = #tpu.dot_dimension_numbers<[1], [0], [0], [1], [0, 0, 1, 1], [], []>} : vector<8x256xf32>, vector<256x256xf32>, vector<8x256xf32> -> vector<8x256xf32>
    %c0_189 = arith.constant 0 : index
    %c0_190 = arith.constant 0 : index
    %528 = vector.load %arg13[%c0_189, %c0_190] : memref<1x256xf32, #tpu.memory_space<vmem>>, vector<1x256xf32>
    %529 = vector.broadcast %528 : vector<1x256xf32> to vector<8x256xf32>
    %530 = arith.addf %527, %529 : vector<8x256xf32>
    %cst_191 = arith.constant 0.000000e+00 : f32
    %531 = vector.broadcast %cst_191 : f32 to vector<8x256xf32>
    %532 = arith.cmpf ogt, %530, %531 : vector<8x256xf32>
    %cst_192 = arith.constant 0.000000e+00 : f32
    %533 = vector.broadcast %cst_192 : f32 to vector<8x256xf32>
    %534 = arith.minimumf %530, %533 : vector<8x256xf32>
    %535 = math.exp %534 : vector<8x256xf32>
    %cst_193 = arith.constant 1.000000e+00 : f32
    %536 = vector.broadcast %cst_193 : f32 to vector<8x256xf32>
    %537 = arith.subf %535, %536 : vector<8x256xf32>
    %538 = arith.select %532, %530, %537 : vector<8x256xi1>, vector<8x256xf32>
    %c0_194 = arith.constant 0 : index
    %c0_195 = arith.constant 0 : index
    %539 = vector.load %arg14[%c0_194, %c0_195] : memref<1x256xf32, #tpu.memory_space<vmem>>, vector<1x256xf32>
    %540 = vector.broadcast %539 : vector<1x256xf32> to vector<8x256xf32>
    %541 = arith.mulf %538, %540 : vector<8x256xf32>
    %cst_196 = arith.constant dense<0.000000e+00> : vector<8xf32>
    %542 = vector.multi_reduction <add>, %541, %cst_196 [1] : vector<8x256xf32> to vector<8xf32>
    %543 = vector.shape_cast %542 : vector<8xf32> to vector<8x1xf32>
    %c0_197 = arith.constant 0 : index
    %c0_198 = arith.constant 0 : index
    %544 = vector.load %arg15[%c0_197, %c0_198] : memref<1x1xf32, #tpu.memory_space<vmem>>, vector<1x1xf32>
    %545 = vector.broadcast %544 : vector<1x1xf32> to vector<8x1xf32>
    %546 = arith.addf %543, %545 : vector<8x1xf32>
    %c0_199 = arith.constant 0 : index
    %c0_200 = arith.constant 0 : index
    %547 = vector.load %arg16[%c0_199, %c0_200] : memref<8x1xf32, #tpu.memory_space<vmem>>, vector<8x1xf32>
    tpu.vector_store %arg16[%c0_199, %c0_200], %546 {strides = array<i32>} : memref<8x1xf32, #tpu.memory_space<vmem>>, vector<8x1xf32>,
    return
  }
}

</mosaic_0001>

<llo_original>
// kernel: _lambda_.1
$region0: #{_lambda_.1}
  #allocation0 [shape = 'u32[]', space=smem, size = 0x4, offset = 0x4, fixed_abs, tag = 'smem constant byte address 0x4 - core index']
  #allocation1 [shape = 'u32[144,128]{1,0:T(1,128)}', space=vmem, size = 0x12000, scoped, tag = 'internal scratch']
  #allocation2 [shape = 'f32[1,1]{1,0:T(1,128)S(1)}', space=vmem, size = 0x200, scoped, tag = 'scoped memory for _lambda_.1']
  %s0 = inlined_call_operand.hbm [shape: f32[8,16], index: 0, kind: input, shape index: {}]
  %s1 = inlined_call_operand.hbm [shape: f32[2,32], index: 1, kind: input, shape index: {}]
  %s2 = inlined_call_operand.hbm [shape: f32[3,16,32], index: 2, kind: input, shape index: {}]
  %s3 = inlined_call_operand.hbm [shape: f32[3,32,32], index: 3, kind: input, shape index: {}]
  %s4 = inlined_call_operand.vmem [shape: f32[3,1,32], index: 4, kind: input, shape index: {}]
  %s5 = inlined_call_operand.vmem [shape: f32[3,1,32], index: 5, kind: input, shape index: {}]
  %s6 = inlined_call_operand.hbm [shape: f32[3,32,32], index: 6, kind: input, shape index: {}]
  %s7 = inlined_call_operand.hbm [shape: f32[3,32,32], index: 7, kind: input, shape index: {}]
  %s8 = inlined_call_operand.vmem [shape: f32[3,1,32], index: 8, kind: input, shape index: {}]
  %s9 = inlined_call_operand.vmem [shape: f32[3,1,32], index: 9, kind: input, shape index: {}]
  %s10 = inlined_call_operand.hbm [shape: f32[32,256], index: 10, kind: input, shape index: {}]
  %s11 = inlined_call_operand.vmem [shape: f32[1,256], index: 11, kind: input, shape index: {}]
  %s12 = inlined_call_operand.hbm [shape: f32[256,256], index: 12, kind: input, shape index: {}]
  %s13 = inlined_call_operand.vmem [shape: f32[1,256], index: 13, kind: input, shape index: {}]
  %s14 = inlined_call_operand.vmem [shape: f32[1,256], index: 14, kind: input, shape index: {}]
  %s15 = inlined_call_operand.<no memory space> [shape: f32[1,1], index: 15, kind: input, shape index: {}]
  %s16 = inlined_call_operand.vmem [shape: f32[8,1], index: 16, kind: output, shape index: {0}]
  %s17 = inlined_call_operand.hbm [shape: f32[2,32], index: 17, kind: output, shape index: {1}]
  %18 = xla_tuple %s16, %s17
  %s19 = sld [smem:[#allocation0]]
  $region114: #{_lambda_.1} parent=0
    _
  %s21 = ssub.s32 1, %s19
  %s22 = scalar_select 0, %s21, %s19
  %v23 = vstv %s15
  %24 = vst [vmem:[#allocation2] sm:$0x1] %v23
  $region1: #{_lambda_.1} parent=0
    #allocation3 [shape = 'u8[4096]{0}', space=vmem, size = 0x1000, scoped, tag = 'input window, operand 0, single buffered']
    #allocation4 [shape = 's32[1]{0}', space=sflag, size = 0x4, scoped, tag = 'scoped memory for _lambda_.1']
    #allocation5 [shape = 's32[1]{0}', space=sflag, size = 0x4, scoped, tag = 'scoped memory for _lambda_.1']
    #allocation6 [shape = 'u8[1024]{0}', space=vmem, size = 0x400, scoped, tag = 'input window, operand 1, single buffered']
    #allocation7 [shape = 's32[1]{0}', space=sflag, size = 0x4, scoped, tag = 'scoped memory for _lambda_.1']
    #allocation8 [shape = 'u8[24576]{0}', space=vmem, size = 0x6000, scoped, tag = 'input window, operand 2, single buffered']
    #allocation9 [shape = 'u8[49152]{0}', space=vmem, size = 0xc000, scoped, tag = 'input window, operand 3, single buffered']
    #allocation10 [shape = 's32[1]{0}', space=sflag, size = 0x4, scoped, tag = 'scoped memory for _lambda_.1']
    #allocation11 [shape = 'u8[49152]{0}', space=vmem, size = 0xc000, scoped, tag = 'input window, operand 6, single buffered']
    #allocation12 [shape = 'u8[49152]{0}', space=vmem, size = 0xc000, scoped, tag = 'input window, operand 7, single buffered']
    #allocation13 [shape = 's32[1]{0}', space=sflag, size = 0x4, scoped, tag = 'scoped memory for _lambda_.1']
    #allocation14 [shape = 'u8[32768]{0}', space=vmem, size = 0x8000, scoped, tag = 'input window, operand 10, single buffered']
    #allocation15 [shape = 'u8[262144]{0}', space=vmem, size = 0x40000, scoped, tag = 'input window, operand 12, single buffered']
    #allocation16 [shape = 's32[1]{0}', space=sflag, size = 0x4, scoped, tag = 'scoped memory for _lambda_.1']
    #allocation17 [shape = 'u8[1024]{0}', space=vmem, size = 0x400, scoped, tag = 'output window, operand 1, single buffered']
    %25 = vsyncpa [#allocation4], 0
    %26 = vsyncpa [#allocation7], 0
    %27 = vsyncpa [#allocation10], 0
    %28 = vsyncpa [#allocation13], 0
    %29 = vsyncpa [#allocation16], 0
    %30 = vsyncpa [#allocation5], 0
    // Predicated region
    $region2: #{_lambda_.1} parent=1 // pred_check
      _
    $region3: #{_lambda_.1} parent=1 // pred_check_branch
      %32 = sbr.rel (0) target = $region5
    $region4: #{_lambda_.1} parent=1 // pred_region
      %s34 = ssub.s32 128, 128
      %35 = vsyncadd [#allocation4], %s34
      %s37 = sshll.u32 [#allocation3], 4
      %s38 = int_to_ptr.vmem [resolvable:$true] %s37
      %40 = dma.hbm_to_vmem [thread:$0]  %s0, 128, %s38, [#allocation4]
    $region5: #{_lambda_.1} parent=1 // pred_fallthru
      _
    // Predicated region
    $region6: #{_lambda_.1} parent=1 // pred_check
      _
    $region7: #{_lambda_.1} parent=1 // pred_check_branch
      %42 = sbr.rel (0) target = $region9
    $region8: #{_lambda_.1} parent=1 // pred_region
      %s44 = ssub.s32 32, 32
      %45 = vsyncadd [#allocation7], %s44
      %s47 = sshll.u32 [#allocation6], 4
      %s48 = int_to_ptr.vmem [resolvable:$true] %s47
      %50 = dma.hbm_to_vmem [thread:$0]  %s1, 32, %s48, [#allocation7]
    $region9: #{_lambda_.1} parent=1 // pred_fallthru
      _
    // Predicated region
    $region10: #{_lambda_.1} parent=1 // pred_check
      _
    $region11: #{_lambda_.1} parent=1 // pred_check_branch
      %52 = sbr.rel (0) target = $region13
    $region12: #{_lambda_.1} parent=1 // pred_region
      %s54 = ssub.s32 768, 768
      %55 = vsyncadd [#allocation7], %s54
      %s56 = sshll.u32 [#allocation8], 4
      %s57 = int_to_ptr.vmem [resolvable:$true] %s56
      %62 = dma.hbm_to_vmem [thread:$0]  %s2, 768, %s57, [#allocation7], 128, 128, 8
    $region13: #{_lambda_.1} parent=1 // pred_fallthru
      _
    // Predicated region
    $region14: #{_lambda_.1} parent=1 // pred_check
      _
    $region15: #{_lambda_.1} parent=1 // pred_check_branch
      %64 = sbr.rel (0) target = $region17
    $region16: #{_lambda_.1} parent=1 // pred_region
      %s66 = ssub.s32 1536, 1536
      %67 = vsyncadd [#allocation10], %s66
      %s68 = sshll.u32 [#allocation9], 4
      %s69 = int_to_ptr.vmem [resolvable:$true] %s68
      %74 = dma.hbm_to_vmem [thread:$0]  %s3, 1536, %s69, [#allocation10], 128, 128, 8
    $region17: #{_lambda_.1} parent=1 // pred_fallthru
      _
    // Predicated region
    $region18: #{_lambda_.1} parent=1 // pred_check
      _
    $region19: #{_lambda_.1} parent=1 // pred_check_branch
      %76 = sbr.rel (0) target = $region21
    $region20: #{_lambda_.1} parent=1 // pred_region
      _
    $region21: #{_lambda_.1} parent=1 // pred_fallthru
      _
    // Predicated region
    $region22: #{_lambda_.1} parent=1 // pred_check
      _
    $region23: #{_lambda_.1} parent=1 // pred_check_branch
      %78 = sbr.rel (0) target = $region25
    $region24: #{_lambda_.1} parent=1 // pred_region
      _
    $region25: #{_lambda_.1} parent=1 // pred_fallthru
      _
    // Predicated region
    $region26: #{_lambda_.1} parent=1 // pred_check
      _
    $region27: #{_lambda_.1} parent=1 // pred_check_branch
      %80 = sbr.rel (0) target = $region29
    $region28: #{_lambda_.1} parent=1 // pred_region
      %s82 = ssub.s32 1536, 1536
      %83 = vsyncadd [#allocation10], %s82
      %s84 = sshll.u32 [#allocation11], 4
      %s85 = int_to_ptr.vmem [resolvable:$true] %s84
      %90 = dma.hbm_to_vmem [thread:$0]  %s6, 1536, %s85, [#allocation10], 128, 128, 8
    $region29: #{_lambda_.1} parent=1 // pred_fallthru
      _
    // Predicated region
    $region30: #{_lambda_.1} parent=1 // pred_check
      _
    $region31: #{_lambda_.1} parent=1 // pred_check_branch
      %92 = sbr.rel (0) target = $region33
    $region32: #{_lambda_.1} parent=1 // pred_region
      %s94 = ssub.s32 1536, 1536
      %95 = vsyncadd [#allocation13], %s94
      %s96 = sshll.u32 [#allocation12], 4
      %s97 = int_to_ptr.vmem [resolvable:$true] %s96
      %102 = dma.hbm_to_vmem [thread:$0]  %s7, 1536, %s97, [#allocation13], 128, 128, 8
    $region33: #{_lambda_.1} parent=1 // pred_fallthru
      _
    // Predicated region
    $region34: #{_lambda_.1} parent=1 // pred_check
      _
    $region35: #{_lambda_.1} parent=1 // pred_check_branch
      %104 = sbr.rel (0) target = $region37
    $region36: #{_lambda_.1} parent=1 // pred_region
      _
    $region37: #{_lambda_.1} parent=1 // pred_fallthru
      _
    // Predicated region
    $region38: #{_lambda_.1} parent=1 // pred_check
      _
    $region39: #{_lambda_.1} parent=1 // pred_check_branch
      %106 = sbr.rel (0) target = $region41
    $region40: #{_lambda_.1} parent=1 // pred_region
      _
    $region41: #{_lambda_.1} parent=1 // pred_fallthru
      _
    // Predicated region
    $region42: #{_lambda_.1} parent=1 // pred_check
      _
    $region43: #{_lambda_.1} parent=1 // pred_check_branch
      %108 = sbr.rel (0) target = $region45
    $region44: #{_lambda_.1} parent=1 // pred_region
      %s110 = ssub.s32 1024, 1024
      %111 = vsyncadd [#allocation13], %s110
      %s112 = sshll.u32 [#allocation14], 4
      %s113 = int_to_ptr.vmem [resolvable:$true] %s112
      %118 = dma.hbm_to_vmem [thread:$0]  %s10, 1024, %s113, [#allocation13], 256, 256, 16
    $region45: #{_lambda_.1} parent=1 // pred_fallthru
      _
    // Predicated region
    $region46: #{_lambda_.1} parent=1 // pred_check
      _
    $region47: #{_lambda_.1} parent=1 // pred_check_branch
      %120 = sbr.rel (0) target = $region49
    $region48: #{_lambda_.1} parent=1 // pred_region
      _
    $region49: #{_lambda_.1} parent=1 // pred_fallthru
      _
    // Predicated region
    $region50: #{_lambda_.1} parent=1 // pred_check
      _
    $region51: #{_lambda_.1} parent=1 // pred_check_branch
      %122 = sbr.rel (0) target = $region53
    $region52: #{_lambda_.1} parent=1 // pred_region
      %s124 = ssub.s32 8192, 8192
      %125 = vsyncadd [#allocation16], %s124
      %s126 = sshll.u32 [#allocation15], 4
      %s127 = int_to_ptr.vmem [resolvable:$true] %s126
      %132 = dma.hbm_to_vmem [thread:$0]  %s12, 8192, %s127, [#allocation16], 256, 256, 16
    $region53: #{_lambda_.1} parent=1 // pred_fallthru
      _
    // Predicated region
    $region54: #{_lambda_.1} parent=1 // pred_check
      _
    $region55: #{_lambda_.1} parent=1 // pred_check_branch
      %134 = sbr.rel (0) target = $region57
    $region56: #{_lambda_.1} parent=1 // pred_region
      _
    $region57: #{_lambda_.1} parent=1 // pred_fallthru
      _
    // Predicated region
    $region58: #{_lambda_.1} parent=1 // pred_check
      _
    $region59: #{_lambda_.1} parent=1 // pred_check_branch
      %136 = sbr.rel (0) target = $region61
    $region60: #{_lambda_.1} parent=1 // pred_region
      _
    $region61: #{_lambda_.1} parent=1 // pred_fallthru
      _
    // Predicated region
    $region62: #{_lambda_.1} parent=1 // pred_check
      _
    $region63: #{_lambda_.1} parent=1 // pred_check_branch
      %138 = sbr.rel (0) target = $region65
    $region64: #{_lambda_.1} parent=1 // pred_region
      _
    $region65: #{_lambda_.1} parent=1 // pred_fallthru
      _
    // Predicated region
    $region66: #{_lambda_.1} parent=1 // pred_check
      _
    $region67: #{_lambda_.1} parent=1 // pred_check_branch
      %140 = sbr.rel (0) target = $region69
    $region68: #{_lambda_.1} parent=1 // pred_region
      %141 = dma.done [#allocation4], 128
    $region69: #{_lambda_.1} parent=1 // pred_fallthru
      _
    // Predicated region
    $region70: #{_lambda_.1} parent=1 // pred_check
      _
    $region71: #{_lambda_.1} parent=1 // pred_check_branch
      %143 = sbr.rel (0) target = $region73
    $region72: #{_lambda_.1} parent=1 // pred_region
      %144 = dma.done [#allocation7], 32
    $region73: #{_lambda_.1} parent=1 // pred_fallthru
      _
    // Predicated region
    $region74: #{_lambda_.1} parent=1 // pred_check
      _
    $region75: #{_lambda_.1} parent=1 // pred_check_branch
      %146 = sbr.rel (0) target = $region77
    $region76: #{_lambda_.1} parent=1 // pred_region
      %147 = dma.done [#allocation7], 768
    $region77: #{_lambda_.1} parent=1 // pred_fallthru
      _
    // Predicated region
    $region78: #{_lambda_.1} parent=1 // pred_check
      _
    $region79: #{_lambda_.1} parent=1 // pred_check_branch
      %149 = sbr.rel (0) target = $region81
    $region80: #{_lambda_.1} parent=1 // pred_region
      %150 = dma.done [#allocation10], 1536
    $region81: #{_lambda_.1} parent=1 // pred_fallthru
      _
    // Predicated region
    $region82: #{_lambda_.1} parent=1 // pred_check
      _
    $region83: #{_lambda_.1} parent=1 // pred_check_branch
      %152 = sbr.rel (0) target = $region85
    $region84: #{_lambda_.1} parent=1 // pred_region
      %153 = dma.done [#allocation10], 1536
    $region85: #{_lambda_.1} parent=1 // pred_fallthru
      _
    // Predicated region
    $region86: #{_lambda_.1} parent=1 // pred_check
      _
    $region87: #{_lambda_.1} parent=1 // pred_check_branch
      %155 = sbr.rel (0) target = $region89
    $region88: #{_lambda_.1} parent=1 // pred_region
      %156 = dma.done [#allocation13], 1536
    $region89: #{_lambda_.1} parent=1 // pred_fallthru
      _
    // Predicated region
    $region90: #{_lambda_.1} parent=1 // pred_check
      _
    $region91: #{_lambda_.1} parent=1 // pred_check_branch
      %158 = sbr.rel (0) target = $region93
    $region92: #{_lambda_.1} parent=1 // pred_region
      %159 = dma.done [#allocation13], 1024
    $region93: #{_lambda_.1} parent=1 // pred_fallthru
      _
    // Predicated region
    $region94: #{_lambda_.1} parent=1 // pred_check
      _
    $region95: #{_lambda_.1} parent=1 // pred_check_branch
      %161 = sbr.rel (0) target = $region97
    $region96: #{_lambda_.1} parent=1 // pred_region
      %162 = dma.done [#allocation16], 8192
    $region97: #{_lambda_.1} parent=1 // pred_fallthru
      _
    %v163 = vld [vmem:[#allocation3] sm:$0xff]
    %v164 = vld [vmem:[#allocation8] sm:$0xff]
    %v165 = vld [vmem:[#allocation8 + $0x8] sm:$0xff]
    %v166 = vld [vmem:[%s4] sm:$0x1]
    %v168 = vlaneseq
    %v169 = vshrl.u32 %v168, 7
    %v170 = vsub.s32 0, %v169
    %v171 = vrot.slane %v166, %v170
    %vm173 = vcmask 130048
    %v175 = vsel %vm173, %v163, 0
    %177 = vmatprep.subr.mxu0 0.0
    %178 = vmatpush1.msra.mxu0 %v164
    %179 = vmatprep.subr.mxu0 0.0
    %180 = vmatpush1.msra.mxu0 %v165
    %181 = vmatprep.subr.mxu0 0.0
    %182 = vmatpush1.msra.mxu0 0.0
    %183 = vmatprep.subr.mxu0 0.0
    %184 = vmatpush1.msra.mxu0 0.0
    %185 = vmatprep.subr.mxu0 0.0
    %186 = vmatpush1.msra.mxu0 0.0
    %187 = vmatprep.subr.mxu0 0.0
    %188 = vmatpush1.msra.mxu0 0.0
    %189 = vmatprep.subr.mxu0 0.0
    %190 = vmatpush1.msra.mxu0 0.0
    %191 = vmatprep.subr.mxu0 0.0
    %192 = vmatpush1.msra.mxu0 0.0
    %193 = vmatprep.subr.mxu0 0.0
    %194 = vmatpush1.msra.mxu0 0.0
    %195 = vmatprep.subr.mxu0 0.0
    %196 = vmatpush1.msra.mxu0 0.0
    %197 = vmatprep.subr.mxu0 0.0
    %198 = vmatpush1.msra.mxu0 0.0
    %199 = vmatprep.subr.mxu0 0.0
    %200 = vmatpush1.msra.mxu0 0.0
    %201 = vmatprep.subr.mxu0 0.0
    %202 = vmatpush1.msra.mxu0 0.0
    %203 = vmatprep.subr.mxu0 0.0
    %204 = vmatpush1.msra.mxu0 0.0
    %205 = vmatprep.subr.mxu0 0.0
    %206 = vmatpush1.msra.mxu0 0.0
    %207 = vmatprep.subr.mxu0 0.0
    %208 = vmatpush1.msra.mxu0 0.0
    %209 = vmatprep.subr.mxu0 0.0
    %210 = vmatpush1.msra.mxu0 0.0
    %211 = vmatprep.subr.mxu0 0.0
    %212 = vmatpush1.msra.mxu0 0.0
    %213 = vmatprep.subr.mxu0 0.0
    %214 = vmatpush1.msra.mxu0 0.0
    %215 = vmatprep.subr.mxu0 0.0
    %216 = vmatpush1.msra.mxu0 0.0
    %217 = vmatprep.subr.mxu0 0.0
    %218 = vmatpush1.msra.mxu0 0.0
    %219 = vmatprep.subr.mxu0 0.0
    %220 = vmatpush1.msra.mxu0 0.0
    %221 = vmatprep.subr.mxu0 0.0
    %222 = vmatpush1.msra.mxu0 0.0
    %223 = vmatprep.subr.mxu0 0.0
    %224 = vmatpush1.msra.mxu0 0.0
    %225 = vmatprep.subr.mxu0 0.0
    %226 = vmatpush1.msra.mxu0 0.0
    %227 = vmatprep.subr.mxu0 0.0
    %228 = vmatpush1.msra.mxu0 0.0
    %229 = vmatprep.subr.mxu0 0.0
    %230 = vmatpush1.msra.mxu0 0.0
    %231 = vmatprep.subr.mxu0 0.0
    %232 = vmatpush1.msra.mxu0 0.0
    %233 = vmatprep.subr.mxu0 0.0
    %234 = vmatpush1.msra.mxu0 0.0
    %235 = vmatprep.subr.mxu0 0.0
    %236 = vmatpush1.msra.mxu0 0.0
    %237 = vmatprep.subr.mxu0 0.0
    %238 = vmatpush1.msra.mxu0 0.0
    %239 = vmatprep.subr.mxu0 0.0
    %240 = vmatpush1.msra.mxu0 0.0
    %241 = vmatprep.mubr.f32.mxu0 0.0
    %242 = vmatmul.mubr.f32.gmra.mrb[0].mxu0 %v175
    %v243 = vpop.f32.mrb[0].mxu0
    %v244 = vadd.f32 %v171, %v243
    %v245 = vpop.f32.mrb[0].mxu0
    %246 = vdwg.mxu0
    %v247 = vld [vmem:[%s5] sm:$0x1]
    %v249 = vlaneseq
    %v250 = vshrl.u32 %v249, 7
    %v251 = vsub.s32 0, %v250
    %v252 = vrot.slane %v247, %v251
    %v254 = vadd.f32 %v244, %v252
    %s255 = scalar_lea.vmem [#allocation8], 16
    %v256 = vld [vmem:[%s255] sm:$0xff]
    %v257 = vld [vmem:[%s255 + $0x8] sm:$0xff]
    %s258 = scalar_lea.vmem %s4, 1
    %v259 = vld [vmem:[%s258] sm:$0x1]
    %v261 = vlaneseq
    %v262 = vshrl.u32 %v261, 7
    %v263 = vsub.s32 0, %v262
    %v264 = vrot.slane %v259, %v263
    %266 = vmatprep.subr.mxu0 0.0
    %267 = vmatpush1.msra.mxu0 %v256
    %268 = vmatprep.subr.mxu0 0.0
    %269 = vmatpush1.msra.mxu0 %v257
    %270 = vmatprep.subr.mxu0 0.0
    %271 = vmatpush1.msra.mxu0 0.0
    %272 = vmatprep.subr.mxu0 0.0
    %273 = vmatpush1.msra.mxu0 0.0
    %274 = vmatprep.subr.mxu0 0.0
    %275 = vmatpush1.msra.mxu0 0.0
    %276 = vmatprep.subr.mxu0 0.0
    %277 = vmatpush1.msra.mxu0 0.0
    %278 = vmatprep.subr.mxu0 0.0
    %279 = vmatpush1.msra.mxu0 0.0
    %280 = vmatprep.subr.mxu0 0.0
    %281 = vmatpush1.msra.mxu0 0.0
    %282 = vmatprep.subr.mxu0 0.0
    %283 = vmatpush1.msra.mxu0 0.0
    %284 = vmatprep.subr.mxu0 0.0
    %285 = vmatpush1.msra.mxu0 0.0
    %286 = vmatprep.subr.mxu0 0.0
    %287 = vmatpush1.msra.mxu0 0.0
    %288 = vmatprep.subr.mxu0 0.0
    %289 = vmatpush1.msra.mxu0 0.0
    %290 = vmatprep.subr.mxu0 0.0
    %291 = vmatpush1.msra.mxu0 0.0
    %292 = vmatprep.subr.mxu0 0.0
    %293 = vmatpush1.msra.mxu0 0.0
    %294 = vmatprep.subr.mxu0 0.0
    %295 = vmatpush1.msra.mxu0 0.0
    %296 = vmatprep.subr.mxu0 0.0
    %297 = vmatpush1.msra.mxu0 0.0
    %298 = vmatprep.subr.mxu0 0.0
    %299 = vmatpush1.msra.mxu0 0.0
    %300 = vmatprep.subr.mxu0 0.0
    %301 = vmatpush1.msra.mxu0 0.0
    %302 = vmatprep.subr.mxu0 0.0
    %303 = vmatpush1.msra.mxu0 0.0
    %304 = vmatprep.subr.mxu0 0.0
    %305 = vmatpush1.msra.mxu0 0.0
    %306 = vmatprep.subr.mxu0 0.0
    %307 = vmatpush1.msra.mxu0 0.0
    %308 = vmatprep.subr.mxu0 0.0
    %309 = vmatpush1.msra.mxu0 0.0
    %310 = vmatprep.subr.mxu0 0.0
    %311 = vmatpush1.msra.mxu0 0.0
    %312 = vmatprep.subr.mxu0 0.0
    %313 = vmatpush1.msra.mxu0 0.0
    %314 = vmatprep.subr.mxu0 0.0
    %315 = vmatpush1.msra.mxu0 0.0
    %316 = vmatprep.subr.mxu0 0.0
    %317 = vmatpush1.msra.mxu0 0.0
    %318 = vmatprep.subr.mxu0 0.0
    %319 = vmatpush1.msra.mxu0 0.0
    %320 = vmatprep.subr.mxu0 0.0
    %321 = vmatpush1.msra.mxu0 0.0
    %322 = vmatprep.subr.mxu0 0.0
    %323 = vmatpush1.msra.mxu0 0.0
    %324 = vmatprep.subr.mxu0 0.0
    %325 = vmatpush1.msra.mxu0 0.0
    %326 = vmatprep.subr.mxu0 0.0
    %327 = vmatpush1.msra.mxu0 0.0
    %328 = vmatprep.subr.mxu0 0.0
    %329 = vmatpush1.msra.mxu0 0.0
    %330 = vmatprep.mubr.f32.mxu0 0.0
    %331 = vmatmul.mubr.f32.gmra.mrb[0].mxu0 %v175
    %v332 = vpop.f32.mrb[0].mxu0
    %v333 = vadd.f32 %v264, %v332
    %v334 = vpop.f32.mrb[0].mxu0
    %335 = vdwg.mxu0
    %s336 = scalar_lea.vmem %s5, 1
    %v337 = vld [vmem:[%s336] sm:$0x1]
    %v339 = vlaneseq
    %v340 = vshrl.u32 %v339, 7
    %v341 = vsub.s32 0, %v340
    %v342 = vrot.slane %v337, %v341
    %v344 = vadd.f32 %v333, %v342
    %s345 = scalar_lea.vmem [#allocation8], 32
    %v346 = vld [vmem:[%s345] sm:$0xff]
    %v347 = vld [vmem:[%s345 + $0x8] sm:$0xff]
    %s348 = scalar_lea.vmem %s4, 2
    %v349 = vld [vmem:[%s348] sm:$0x1]
    %v351 = vlaneseq
    %v352 = vshrl.u32 %v351, 7
    %v353 = vsub.s32 0, %v352
    %v354 = vrot.slane %v349, %v353
    %356 = vmatprep.subr.mxu0 0.0
    %357 = vmatpush1.msra.mxu0 %v346
    %358 = vmatprep.subr.mxu0 0.0
    %359 = vmatpush1.msra.mxu0 %v347
    %360 = vmatprep.subr.mxu0 0.0
    %361 = vmatpush1.msra.mxu0 0.0
    %362 = vmatprep.subr.mxu0 0.0
    %363 = vmatpush1.msra.mxu0 0.0
    %364 = vmatprep.subr.mxu0 0.0
    %365 = vmatpush1.msra.mxu0 0.0
    %366 = vmatprep.subr.mxu0 0.0
    %367 = vmatpush1.msra.mxu0 0.0
    %368 = vmatprep.subr.mxu0 0.0
    %369 = vmatpush1.msra.mxu0 0.0
    %370 = vmatprep.subr.mxu0 0.0
    %371 = vmatpush1.msra.mxu0 0.0
    %372 = vmatprep.subr.mxu0 0.0
    %373 = vmatpush1.msra.mxu0 0.0
    %374 = vmatprep.subr.mxu0 0.0
    %375 = vmatpush1.msra.mxu0 0.0
    %376 = vmatprep.subr.mxu0 0.0
    %377 = vmatpush1.msra.mxu0 0.0
    %378 = vmatprep.subr.mxu0 0.0
    %379 = vmatpush1.msra.mxu0 0.0
    %380 = vmatprep.subr.mxu0 0.0
    %381 = vmatpush1.msra.mxu0 0.0
    %382 = vmatprep.subr.mxu0 0.0
    %383 = vmatpush1.msra.mxu0 0.0
    %384 = vmatprep.subr.mxu0 0.0
    %385 = vmatpush1.msra.mxu0 0.0
    %386 = vmatprep.subr.mxu0 0.0
    %387 = vmatpush1.msra.mxu0 0.0
    %388 = vmatprep.subr.mxu0 0.0
    %389 = vmatpush1.msra.mxu0 0.0
    %390 = vmatprep.subr.mxu0 0.0
    %391 = vmatpush1.msra.mxu0 0.0
    %392 = vmatprep.subr.mxu0 0.0
    %393 = vmatpush1.msra.mxu0 0.0
    %394 = vmatprep.subr.mxu0 0.0
    %395 = vmatpush1.msra.mxu0 0.0
    %396 = vmatprep.subr.mxu0 0.0
    %397 = vmatpush1.msra.mxu0 0.0
    %398 = vmatprep.subr.mxu0 0.0
    %399 = vmatpush1.msra.mxu0 0.0
    %400 = vmatprep.subr.mxu0 0.0
    %401 = vmatpush1.msra.mxu0 0.0
    %402 = vmatprep.subr.mxu0 0.0
    %403 = vmatpush1.msra.mxu0 0.0
    %404 = vmatprep.subr.mxu0 0.0
    %405 = vmatpush1.msra.mxu0 0.0
    %406 = vmatprep.subr.mxu0 0.0
    %407 = vmatpush1.msra.mxu0 0.0
    %408 = vmatprep.subr.mxu0 0.0
    %409 = vmatpush1.msra.mxu0 0.0
    %410 = vmatprep.subr.mxu0 0.0
    %411 = vmatpush1.msra.mxu0 0.0
    %412 = vmatprep.subr.mxu0 0.0
    %413 = vmatpush1.msra.mxu0 0.0
    %414 = vmatprep.subr.mxu0 0.0
    %415 = vmatpush1.msra.mxu0 0.0
    %416 = vmatprep.subr.mxu0 0.0
    %417 = vmatpush1.msra.mxu0 0.0
    %418 = vmatprep.subr.mxu0 0.0
    %419 = vmatpush1.msra.mxu0 0.0
    %420 = vmatprep.mubr.f32.mxu0 0.0
    %421 = vmatmul.mubr.f32.gmra.mrb[0].mxu0 %v175
    %v422 = vpop.f32.mrb[0].mxu0
    %v423 = vadd.f32 %v354, %v422
    %v424 = vpop.f32.mrb[0].mxu0
    %425 = vdwg.mxu0
    %v426 = vld [vmem:[#allocation9] sm:$0xff]
    %v427 = vld [vmem:[#allocation9 + $0x8] sm:$0xff]
    %v428 = vld [vmem:[#allocation9 + $0x10] sm:$0xff]
    %v429 = vld [vmem:[#allocation9 + $0x18] sm:$0xff]
    %s430 = scalar_lea.vmem [#allocation9], 32
    %v431 = vld [vmem:[%s430] sm:$0xff]
    %v432 = vld [vmem:[%s430 + $0x8] sm:$0xff]
    %v433 = vld [vmem:[%s430 + $0x10] sm:$0xff]
    %v434 = vld [vmem:[%s430 + $0x18] sm:$0xff]
    %s435 = scalar_lea.vmem [#allocation9], 64
    %v436 = vld [vmem:[%s435] sm:$0xff]
    %v437 = vld [vmem:[%s435 + $0x8] sm:$0xff]
    %v438 = vld [vmem:[%s435 + $0x10] sm:$0xff]
    %v439 = vld [vmem:[%s435 + $0x18] sm:$0xff]
    %s440 = scalar_lea.vmem %s5, 2
    %v441 = vld [vmem:[%s440] sm:$0x1]
    %v442 = vld [vmem:[#allocation6] sm:$0x1]
    %vm443 = vcmask 261120
    %v445 = vsel %vm443, %v442, 0
    %447 = vmatprep.subr.mxu0 0.0
    %448 = vmatpush1.msra.mxu0 %v426
    %449 = vmatprep.subr.mxu0 0.0
    %450 = vmatpush1.msra.mxu0 %v427
    %451 = vmatprep.subr.mxu0 0.0
    %452 = vmatpush1.msra.mxu0 %v428
    %453 = vmatprep.subr.mxu0 0.0
    %454 = vmatpush1.msra.mxu0 %v429
    %455 = vmatprep.subr.mxu0 0.0
    %456 = vmatpush1.msra.mxu0 0.0
    %457 = vmatprep.subr.mxu0 0.0
    %458 = vmatpush1.msra.mxu0 0.0
    %459 = vmatprep.subr.mxu0 0.0
    %460 = vmatpush1.msra.mxu0 0.0
    %461 = vmatprep.subr.mxu0 0.0
    %462 = vmatpush1.msra.mxu0 0.0
    %463 = vmatprep.subr.mxu0 0.0
    %464 = vmatpush1.msra.mxu0 0.0
    %465 = vmatprep.subr.mxu0 0.0
    %466 = vmatpush1.msra.mxu0 0.0
    %467 = vmatprep.subr.mxu0 0.0
    %468 = vmatpush1.msra.mxu0 0.0
    %469 = vmatprep.subr.mxu0 0.0
    %470 = vmatpush1.msra.mxu0 0.0
    %471 = vmatprep.subr.mxu0 0.0
    %472 = vmatpush1.msra.mxu0 0.0
    %473 = vmatprep.subr.mxu0 0.0
    %474 = vmatpush1.msra.mxu0 0.0
    %475 = vmatprep.subr.mxu0 0.0
    %476 = vmatpush1.msra.mxu0 0.0
    %477 = vmatprep.subr.mxu0 0.0
    %478 = vmatpush1.msra.mxu0 0.0
    %479 = vmatprep.subr.mxu0 0.0
    %480 = vmatpush1.msra.mxu0 0.0
    %481 = vmatprep.subr.mxu0 0.0
    %482 = vmatpush1.msra.mxu0 0.0
    %483 = vmatprep.subr.mxu0 0.0
    %484 = vmatpush1.msra.mxu0 0.0
    %485 = vmatprep.subr.mxu0 0.0
    %486 = vmatpush1.msra.mxu0 0.0
    %487 = vmatprep.subr.mxu0 0.0
    %488 = vmatpush1.msra.mxu0 0.0
    %489 = vmatprep.subr.mxu0 0.0
    %490 = vmatpush1.msra.mxu0 0.0
    %491 = vmatprep.subr.mxu0 0.0
    %492 = vmatpush1.msra.mxu0 0.0
    %493 = vmatprep.subr.mxu0 0.0
    %494 = vmatpush1.msra.mxu0 0.0
    %495 = vmatprep.subr.mxu0 0.0
    %496 = vmatpush1.msra.mxu0 0.0
    %497 = vmatprep.subr.mxu0 0.0
    %498 = vmatpush1.msra.mxu0 0.0
    %499 = vmatprep.subr.mxu0 0.0
    %500 = vmatpush1.msra.mxu0 0.0
    %501 = vmatprep.subr.mxu0 0.0
    %502 = vmatpush1.msra.mxu0 0.0
    %503 = vmatprep.subr.mxu0 0.0
    %504 = vmatpush1.msra.mxu0 0.0
    %505 = vmatprep.subr.mxu0 0.0
    %506 = vmatpush1.msra.mxu0 0.0
    %507 = vmatprep.subr.mxu0 0.0
    %508 = vmatpush1.msra.mxu0 0.0
    %509 = vmatprep.subr.mxu0 0.0
    %510 = vmatpush1.msra.mxu0 0.0
    %511 = vmatprep.mubr.f32.mxu0 0.0
    %512 = vmatmul.mubr.f32.gmra.mrb[0].mxu0 %v445
    %v513 = vpop.f32.mrb[0].mxu0
    %v514 = vadd.f32 0.0, %v513
    %v515 = vpop.f32.mrb[0].mxu0
    %516 = vdwg.mxu0
    %517 = vmatprep.subr.mxu0 0.0
    %518 = vmatpush1.msra.mxu0 %v431
    %519 = vmatprep.subr.mxu0 0.0
    %520 = vmatpush1.msra.mxu0 %v432
    %521 = vmatprep.subr.mxu0 0.0
    %522 = vmatpush1.msra.mxu0 %v433
    %523 = vmatprep.subr.mxu0 0.0
    %524 = vmatpush1.msra.mxu0 %v434
    %525 = vmatprep.subr.mxu0 0.0
    %526 = vmatpush1.msra.mxu0 0.0
    %527 = vmatprep.subr.mxu0 0.0
    %528 = vmatpush1.msra.mxu0 0.0
    %529 = vmatprep.subr.mxu0 0.0
    %530 = vmatpush1.msra.mxu0 0.0
    %531 = vmatprep.subr.mxu0 0.0
    %532 = vmatpush1.msra.mxu0 0.0
    %533 = vmatprep.subr.mxu0 0.0
    %534 = vmatpush1.msra.mxu0 0.0
    %535 = vmatprep.subr.mxu0 0.0
    %536 = vmatpush1.msra.mxu0 0.0
    %537 = vmatprep.subr.mxu0 0.0
    %538 = vmatpush1.msra.mxu0 0.0
    %539 = vmatprep.subr.mxu0 0.0
    %540 = vmatpush1.msra.mxu0 0.0
    %541 = vmatprep.subr.mxu0 0.0
    %542 = vmatpush1.msra.mxu0 0.0
    %543 = vmatprep.subr.mxu0 0.0
    %544 = vmatpush1.msra.mxu0 0.0
    %545 = vmatprep.subr.mxu0 0.0
    %546 = vmatpush1.msra.mxu0 0.0
    %547 = vmatprep.subr.mxu0 0.0
    %548 = vmatpush1.msra.mxu0 0.0
    %549 = vmatprep.subr.mxu0 0.0
    %550 = vmatpush1.msra.mxu0 0.0
    %551 = vmatprep.subr.mxu0 0.0
    %552 = vmatpush1.msra.mxu0 0.0
    %553 = vmatprep.subr.mxu0 0.0
    %554 = vmatpush1.msra.mxu0 0.0
    %555 = vmatprep.subr.mxu0 0.0
    %556 = vmatpush1.msra.mxu0 0.0
    %557 = vmatprep.subr.mxu0 0.0
    %558 = vmatpush1.msra.mxu0 0.0
    %559 = vmatprep.subr.mxu0 0.0
    %560 = vmatpush1.msra.mxu0 0.0
    %561 = vmatprep.subr.mxu0 0.0
    %562 = vmatpush1.msra.mxu0 0.0
    %563 = vmatprep.subr.mxu0 0.0
    %564 = vmatpush1.msra.mxu0 0.0
    %565 = vmatprep.subr.mxu0 0.0
    %566 = vmatpush1.msra.mxu0 0.0
    %567 = vmatprep.subr.mxu0 0.0
    %568 = vmatpush1.msra.mxu0 0.0
    %569 = vmatprep.subr.mxu0 0.0
    %570 = vmatpush1.msra.mxu0 0.0
    %571 = vmatprep.subr.mxu0 0.0
    %572 = vmatpush1.msra.mxu0 0.0
    %573 = vmatprep.subr.mxu0 0.0
    %574 = vmatpush1.msra.mxu0 0.0
    %575 = vmatprep.subr.mxu0 0.0
    %576 = vmatpush1.msra.mxu0 0.0
    %577 = vmatprep.subr.mxu0 0.0
    %578 = vmatpush1.msra.mxu0 0.0
    %579 = vmatprep.subr.mxu0 0.0
    %580 = vmatpush1.msra.mxu0 0.0
    %581 = vmatprep.mubr.f32.mxu0 0.0
    %582 = vmatmul.mubr.f32.gmra.mrb[0].mxu0 %v445
    %v583 = vpop.f32.mrb[0].mxu0
    %v584 = vadd.f32 0.0, %v583
    %v585 = vpop.f32.mrb[0].mxu0
    %586 = vdwg.mxu0
    %587 = vmatprep.subr.mxu0 0.0
    %588 = vmatpush1.msra.mxu0 %v436
    %589 = vmatprep.subr.mxu0 0.0
    %590 = vmatpush1.msra.mxu0 %v437
    %591 = vmatprep.subr.mxu0 0.0
    %592 = vmatpush1.msra.mxu0 %v438
    %593 = vmatprep.subr.mxu0 0.0
    %594 = vmatpush1.msra.mxu0 %v439
    %595 = vmatprep.subr.mxu0 0.0
    %596 = vmatpush1.msra.mxu0 0.0
    %597 = vmatprep.subr.mxu0 0.0
    %598 = vmatpush1.msra.mxu0 0.0
    %599 = vmatprep.subr.mxu0 0.0
    %600 = vmatpush1.msra.mxu0 0.0
    %601 = vmatprep.subr.mxu0 0.0
    %602 = vmatpush1.msra.mxu0 0.0
    %603 = vmatprep.subr.mxu0 0.0
    %604 = vmatpush1.msra.mxu0 0.0
    %605 = vmatprep.subr.mxu0 0.0
    %606 = vmatpush1.msra.mxu0 0.0
    %607 = vmatprep.subr.mxu0 0.0
    %608 = vmatpush1.msra.mxu0 0.0
    %609 = vmatprep.subr.mxu0 0.0
    %610 = vmatpush1.msra.mxu0 0.0
    %611 = vmatprep.subr.mxu0 0.0
    %612 = vmatpush1.msra.mxu0 0.0
    %613 = vmatprep.subr.mxu0 0.0
    %614 = vmatpush1.msra.mxu0 0.0
    %615 = vmatprep.subr.mxu0 0.0
    %616 = vmatpush1.msra.mxu0 0.0
    %617 = vmatprep.subr.mxu0 0.0
    %618 = vmatpush1.msra.mxu0 0.0
    %619 = vmatprep.subr.mxu0 0.0
    %620 = vmatpush1.msra.mxu0 0.0
    %621 = vmatprep.subr.mxu0 0.0
    %622 = vmatpush1.msra.mxu0 0.0
    %623 = vmatprep.subr.mxu0 0.0
    %624 = vmatpush1.msra.mxu0 0.0
    %625 = vmatprep.subr.mxu0 0.0
    %626 = vmatpush1.msra.mxu0 0.0
    %627 = vmatprep.subr.mxu0 0.0
    %628 = vmatpush1.msra.mxu0 0.0
    %629 = vmatprep.subr.mxu0 0.0
    %630 = vmatpush1.msra.mxu0 0.0
    %631 = vmatprep.subr.mxu0 0.0
    %632 = vmatpush1.msra.mxu0 0.0
    %633 = vmatprep.subr.mxu0 0.0
    %634 = vmatpush1.msra.mxu0 0.0
    %635 = vmatprep.subr.mxu0 0.0
    %636 = vmatpush1.msra.mxu0 0.0
    %637 = vmatprep.subr.mxu0 0.0
    %638 = vmatpush1.msra.mxu0 0.0
    %639 = vmatprep.subr.mxu0 0.0
    %640 = vmatpush1.msra.mxu0 0.0
    %641 = vmatprep.subr.mxu0 0.0
    %642 = vmatpush1.msra.mxu0 0.0
    %643 = vmatprep.subr.mxu0 0.0
    %644 = vmatpush1.msra.mxu0 0.0
    %645 = vmatprep.subr.mxu0 0.0
    %646 = vmatpush1.msra.mxu0 0.0
    %647 = vmatprep.subr.mxu0 0.0
    %648 = vmatpush1.msra.mxu0 0.0
    %649 = vmatprep.subr.mxu0 0.0
    %650 = vmatpush1.msra.mxu0 0.0
    %651 = vmatprep.mubr.f32.mxu0 0.0
    %652 = vmatmul.mubr.f32.gmra.mrb[0].mxu0 %v445
    %v653 = vpop.f32.mrb[0].mxu0
    %v654 = vadd.f32 %v441, %v653
    %v655 = vpop.f32.mrb[0].mxu0
    %656 = vdwg.mxu0
    %v657 = vadd.f32 %v254, %v514
    %v658 = vxor.u32 %v657, 2147483648
    %v659 = vmul.f32 %v658, 1.442695
    %v660 = vpow.pop %v659
    %v661 = vadd.f32 %v660, 1.0
    %v662 = vrcp.pop %v661
    %v663 = vmul.f32 1.0, %v662
    %v664 = vadd.f32 %v344, %v584
    %v665 = vxor.u32 %v664, 2147483648
    %v666 = vmul.f32 %v665, 1.442695
    %v667 = vpow.pop %v666
    %v668 = vadd.f32 %v667, 1.0
    %v669 = vrcp.pop %v668
    %v670 = vmul.f32 1.0, %v669
    %v671 = vmul.f32 %v663, %v654
    %v672 = vadd.f32 %v423, %v671
    %v673 = vtanh.pop %v672
    %v674 = vsub.f32 1.0, %v670
    %v675 = vmul.f32 %v674, %v673
    %v676 = vmul.f32 %v670, %v442
    %v677 = vadd.f32 %v675, %v676
    %v679 = vsel %vm443, %v677, 0
    %681 = vmatprep.subr.mxu0 0.0
    %682 = vmatpush1.msra.mxu0 %v426
    %683 = vmatprep.subr.mxu0 0.0
    %684 = vmatpush1.msra.mxu0 %v427
    %685 = vmatprep.subr.mxu0 0.0
    %686 = vmatpush1.msra.mxu0 %v428
    %687 = vmatprep.subr.mxu0 0.0
    %688 = vmatpush1.msra.mxu0 %v429
    %689 = vmatprep.subr.mxu0 0.0
    %690 = vmatpush1.msra.mxu0 0.0
    %691 = vmatprep.subr.mxu0 0.0
    %692 = vmatpush1.msra.mxu0 0.0
    %693 = vmatprep.subr.mxu0 0.0
    %694 = vmatpush1.msra.mxu0 0.0
    %695 = vmatprep.subr.mxu0 0.0
    %696 = vmatpush1.msra.mxu0 0.0
    %697 = vmatprep.subr.mxu0 0.0
    %698 = vmatpush1.msra.mxu0 0.0
    %699 = vmatprep.subr.mxu0 0.0
    %700 = vmatpush1.msra.mxu0 0.0
    %701 = vmatprep.subr.mxu0 0.0
    %702 = vmatpush1.msra.mxu0 0.0
    %703 = vmatprep.subr.mxu0 0.0
    %704 = vmatpush1.msra.mxu0 0.0
    %705 = vmatprep.subr.mxu0 0.0
    %706 = vmatpush1.msra.mxu0 0.0
    %707 = vmatprep.subr.mxu0 0.0
    %708 = vmatpush1.msra.mxu0 0.0
    %709 = vmatprep.subr.mxu0 0.0
    %710 = vmatpush1.msra.mxu0 0.0
    %711 = vmatprep.subr.mxu0 0.0
    %712 = vmatpush1.msra.mxu0 0.0
    %713 = vmatprep.subr.mxu0 0.0
    %714 = vmatpush1.msra.mxu0 0.0
    %715 = vmatprep.subr.mxu0 0.0
    %716 = vmatpush1.msra.mxu0 0.0
    %717 = vmatprep.subr.mxu0 0.0
    %718 = vmatpush1.msra.mxu0 0.0
    %719 = vmatprep.subr.mxu0 0.0
    %720 = vmatpush1.msra.mxu0 0.0
    %721 = vmatprep.subr.mxu0 0.0
    %722 = vmatpush1.msra.mxu0 0.0
    %723 = vmatprep.subr.mxu0 0.0
    %724 = vmatpush1.msra.mxu0 0.0
    %725 = vmatprep.subr.mxu0 0.0
    %726 = vmatpush1.msra.mxu0 0.0
    %727 = vmatprep.subr.mxu0 0.0
    %728 = vmatpush1.msra.mxu0 0.0
    %729 = vmatprep.subr.mxu0 0.0
    %730 = vmatpush1.msra.mxu0 0.0
    %731 = vmatprep.subr.mxu0 0.0
    %732 = vmatpush1.msra.mxu0 0.0
    %733 = vmatprep.subr.mxu0 0.0
    %734 = vmatpush1.msra.mxu0 0.0
    %735 = vmatprep.subr.mxu0 0.0
    %736 = vmatpush1.msra.mxu0 0.0
    %737 = vmatprep.subr.mxu0 0.0
    %738 = vmatpush1.msra.mxu0 0.0
    %739 = vmatprep.subr.mxu0 0.0
    %740 = vmatpush1.msra.mxu0 0.0
    %741 = vmatprep.subr.mxu0 0.0
    %742 = vmatpush1.msra.mxu0 0.0
    %743 = vmatprep.subr.mxu0 0.0
    %744 = vmatpush1.msra.mxu0 0.0
    %745 = vmatprep.mubr.f32.mxu0 0.0
    %746 = vmatmul.mubr.f32.gmra.mrb[0].mxu0 %v679
    %v747 = vpop.f32.mrb[0].mxu0
    %v748 = vadd.f32 0.0, %v747
    %v749 = vpop.f32.mrb[0].mxu0
    %750 = vdwg.mxu0
    %751 = vmatprep.subr.mxu0 0.0
    %752 = vmatpush1.msra.mxu0 %v431
    %753 = vmatprep.subr.mxu0 0.0
    %754 = vmatpush1.msra.mxu0 %v432
    %755 = vmatprep.subr.mxu0 0.0
    %756 = vmatpush1.msra.mxu0 %v433
    %757 = vmatprep.subr.mxu0 0.0
    %758 = vmatpush1.msra.mxu0 %v434
    %759 = vmatprep.subr.mxu0 0.0
    %760 = vmatpush1.msra.mxu0 0.0
    %761 = vmatprep.subr.mxu0 0.0
    %762 = vmatpush1.msra.mxu0 0.0
    %763 = vmatprep.subr.mxu0 0.0
    %764 = vmatpush1.msra.mxu0 0.0
    %765 = vmatprep.subr.mxu0 0.0
    %766 = vmatpush1.msra.mxu0 0.0
    %767 = vmatprep.subr.mxu0 0.0
    %768 = vmatpush1.msra.mxu0 0.0
    %769 = vmatprep.subr.mxu0 0.0
    %770 = vmatpush1.msra.mxu0 0.0
    %771 = vmatprep.subr.mxu0 0.0
    %772 = vmatpush1.msra.mxu0 0.0
    %773 = vmatprep.subr.mxu0 0.0
    %774 = vmatpush1.msra.mxu0 0.0
    %775 = vmatprep.subr.mxu0 0.0
    %776 = vmatpush1.msra.mxu0 0.0
    %777 = vmatprep.subr.mxu0 0.0
    %778 = vmatpush1.msra.mxu0 0.0
    %779 = vmatprep.subr.mxu0 0.0
    %780 = vmatpush1.msra.mxu0 0.0
    %781 = vmatprep.subr.mxu0 0.0
    %782 = vmatpush1.msra.mxu0 0.0
    %783 = vmatprep.subr.mxu0 0.0
    %784 = vmatpush1.msra.mxu0 0.0
    %785 = vmatprep.subr.mxu0 0.0
    %786 = vmatpush1.msra.mxu0 0.0
    %787 = vmatprep.subr.mxu0 0.0
    %788 = vmatpush1.msra.mxu0 0.0
    %789 = vmatprep.subr.mxu0 0.0
    %790 = vmatpush1.msra.mxu0 0.0
    %791 = vmatprep.subr.mxu0 0.0
    %792 = vmatpush1.msra.mxu0 0.0
    %793 = vmatprep.subr.mxu0 0.0
    %794 = vmatpush1.msra.mxu0 0.0
    %795 = vmatprep.subr.mxu0 0.0
    %796 = vmatpush1.msra.mxu0 0.0
    %797 = vmatprep.subr.mxu0 0.0
    %798 = vmatpush1.msra.mxu0 0.0
    %799 = vmatprep.subr.mxu0 0.0
    %800 = vmatpush1.msra.mxu0 0.0
    %801 = vmatprep.subr.mxu0 0.0
    %802 = vmatpush1.msra.mxu0 0.0
    %803 = vmatprep.subr.mxu0 0.0
    %804 = vmatpush1.msra.mxu0 0.0
    %805 = vmatprep.subr.mxu0 0.0
    %806 = vmatpush1.msra.mxu0 0.0
    %807 = vmatprep.subr.mxu0 0.0
    %808 = vmatpush1.msra.mxu0 0.0
    %809 = vmatprep.subr.mxu0 0.0
    %810 = vmatpush1.msra.mxu0 0.0
    %811 = vmatprep.subr.mxu0 0.0
    %812 = vmatpush1.msra.mxu0 0.0
    %813 = vmatprep.subr.mxu0 0.0
    %814 = vmatpush1.msra.mxu0 0.0
    %815 = vmatprep.mubr.f32.mxu0 0.0
    %816 = vmatmul.mubr.f32.gmra.mrb[0].mxu0 %v679
    %v817 = vpop.f32.mrb[0].mxu0
    %v818 = vadd.f32 0.0, %v817
    %v819 = vpop.f32.mrb[0].mxu0
    %820 = vdwg.mxu0
    %821 = vmatprep.subr.mxu0 0.0
    %822 = vmatpush1.msra.mxu0 %v436
    %823 = vmatprep.subr.mxu0 0.0
    %824 = vmatpush1.msra.mxu0 %v437
    %825 = vmatprep.subr.mxu0 0.0
    %826 = vmatpush1.msra.mxu0 %v438
    %827 = vmatprep.subr.mxu0 0.0
    %828 = vmatpush1.msra.mxu0 %v439
    %829 = vmatprep.subr.mxu0 0.0
    %830 = vmatpush1.msra.mxu0 0.0
    %831 = vmatprep.subr.mxu0 0.0
    %832 = vmatpush1.msra.mxu0 0.0
    %833 = vmatprep.subr.mxu0 0.0
    %834 = vmatpush1.msra.mxu0 0.0
    %835 = vmatprep.subr.mxu0 0.0
    %836 = vmatpush1.msra.mxu0 0.0
    %837 = vmatprep.subr.mxu0 0.0
    %838 = vmatpush1.msra.mxu0 0.0
    %839 = vmatprep.subr.mxu0 0.0
    %840 = vmatpush1.msra.mxu0 0.0
    %841 = vmatprep.subr.mxu0 0.0
    %842 = vmatpush1.msra.mxu0 0.0
    %843 = vmatprep.subr.mxu0 0.0
    %844 = vmatpush1.msra.mxu0 0.0
    %845 = vmatprep.subr.mxu0 0.0
    %846 = vmatpush1.msra.mxu0 0.0
    %847 = vmatprep.subr.mxu0 0.0
    %848 = vmatpush1.msra.mxu0 0.0
    %849 = vmatprep.subr.mxu0 0.0
    %850 = vmatpush1.msra.mxu0 0.0
    %851 = vmatprep.subr.mxu0 0.0
    %852 = vmatpush1.msra.mxu0 0.0
    %853 = vmatprep.subr.mxu0 0.0
    %854 = vmatpush1.msra.mxu0 0.0
    %855 = vmatprep.subr.mxu0 0.0
    %856 = vmatpush1.msra.mxu0 0.0
    %857 = vmatprep.subr.mxu0 0.0
    %858 = vmatpush1.msra.mxu0 0.0
    %859 = vmatprep.subr.mxu0 0.0
    %860 = vmatpush1.msra.mxu0 0.0
    %861 = vmatprep.subr.mxu0 0.0
    %862 = vmatpush1.msra.mxu0 0.0
    %863 = vmatprep.subr.mxu0 0.0
    %864 = vmatpush1.msra.mxu0 0.0
    %865 = vmatprep.subr.mxu0 0.0
    %866 = vmatpush1.msra.mxu0 0.0
    %867 = vmatprep.subr.mxu0 0.0
    %868 = vmatpush1.msra.mxu0 0.0
    %869 = vmatprep.subr.mxu0 0.0
    %870 = vmatpush1.msra.mxu0 0.0
    %871 = vmatprep.subr.mxu0 0.0
    %872 = vmatpush1.msra.mxu0 0.0
    %873 = vmatprep.subr.mxu0 0.0
    %874 = vmatpush1.msra.mxu0 0.0
    %875 = vmatprep.subr.mxu0 0.0
    %876 = vmatpush1.msra.mxu0 0.0
    %877 = vmatprep.subr.mxu0 0.0
    %878 = vmatpush1.msra.mxu0 0.0
    %879 = vmatprep.subr.mxu0 0.0
    %880 = vmatpush1.msra.mxu0 0.0
    %881 = vmatprep.subr.mxu0 0.0
    %882 = vmatpush1.msra.mxu0 0.0
    %883 = vmatprep.subr.mxu0 0.0
    %884 = vmatpush1.msra.mxu0 0.0
    %885 = vmatprep.mubr.f32.mxu0 0.0
    %886 = vmatmul.mubr.f32.gmra.mrb[0].mxu0 %v679
    %v887 = vpop.f32.mrb[0].mxu0
    %v888 = vadd.f32 %v441, %v887
    %v889 = vpop.f32.mrb[0].mxu0
    %890 = vdwg.mxu0
    %v892 = vrot.slane %v748, 7
    %v894 = vadd.f32 %v254, %v892
    %v895 = vxor.u32 %v894, 2147483648
    %v896 = vmul.f32 %v895, 1.442695
    %v897 = vpow.pop %v896
    %v898 = vadd.f32 %v897, 1.0
    %v899 = vrcp.pop %v898
    %v900 = vmul.f32 1.0, %v899
    %v902 = vrot.slane %v818, 7
    %v904 = vadd.f32 %v344, %v902
    %v905 = vxor.u32 %v904, 2147483648
    %v906 = vmul.f32 %v905, 1.442695
    %v907 = vpow.pop %v906
    %v908 = vadd.f32 %v907, 1.0
    %v909 = vrcp.pop %v908
    %v910 = vmul.f32 1.0, %v909
    %v912 = vrot.slane %v888, 7
    %v914 = vmul.f32 %v900, %v912
    %v915 = vadd.f32 %v423, %v914
    %v916 = vtanh.pop %v915
    %v917 = vsub.f32 1.0, %v910
    %v918 = vmul.f32 %v917, %v916
    %v919 = vrot.slane %v677, 7
    %v921 = vmul.f32 %v910, %v919
    %v922 = vadd.f32 %v918, %v921
    %v924 = vrot.slane %v922, 1
    %v925 = vsel %vm443, %v924, 0
    %927 = vmatprep.subr.mxu0 0.0
    %928 = vmatpush1.msra.mxu0 %v426
    %929 = vmatprep.subr.mxu0 0.0
    %930 = vmatpush1.msra.mxu0 %v427
    %931 = vmatprep.subr.mxu0 0.0
    %932 = vmatpush1.msra.mxu0 %v428
    %933 = vmatprep.subr.mxu0 0.0
    %934 = vmatpush1.msra.mxu0 %v429
    %935 = vmatprep.subr.mxu0 0.0
    %936 = vmatpush1.msra.mxu0 0.0
    %937 = vmatprep.subr.mxu0 0.0
    %938 = vmatpush1.msra.mxu0 0.0
    %939 = vmatprep.subr.mxu0 0.0
    %940 = vmatpush1.msra.mxu0 0.0
    %941 = vmatprep.subr.mxu0 0.0
    %942 = vmatpush1.msra.mxu0 0.0
    %943 = vmatprep.subr.mxu0 0.0
    %944 = vmatpush1.msra.mxu0 0.0
    %945 = vmatprep.subr.mxu0 0.0
    %946 = vmatpush1.msra.mxu0 0.0
    %947 = vmatprep.subr.mxu0 0.0
    %948 = vmatpush1.msra.mxu0 0.0
    %949 = vmatprep.subr.mxu0 0.0
    %950 = vmatpush1.msra.mxu0 0.0
    %951 = vmatprep.subr.mxu0 0.0
    %952 = vmatpush1.msra.mxu0 0.0
    %953 = vmatprep.subr.mxu0 0.0
    %954 = vmatpush1.msra.mxu0 0.0
    %955 = vmatprep.subr.mxu0 0.0
    %956 = vmatpush1.msra.mxu0 0.0
    %957 = vmatprep.subr.mxu0 0.0
    %958 = vmatpush1.msra.mxu0 0.0
    %959 = vmatprep.subr.mxu0 0.0
    %960 = vmatpush1.msra.mxu0 0.0
    %961 = vmatprep.subr.mxu0 0.0
    %962 = vmatpush1.msra.mxu0 0.0
    %963 = vmatprep.subr.mxu0 0.0
    %964 = vmatpush1.msra.mxu0 0.0
    %965 = vmatprep.subr.mxu0 0.0
    %966 = vmatpush1.msra.mxu0 0.0
    %967 = vmatprep.subr.mxu0 0.0
    %968 = vmatpush1.msra.mxu0 0.0
    %969 = vmatprep.subr.mxu0 0.0
    %970 = vmatpush1.msra.mxu0 0.0
    %971 = vmatprep.subr.mxu0 0.0
    %972 = vmatpush1.msra.mxu0 0.0
    %973 = vmatprep.subr.mxu0 0.0
    %974 = vmatpush1.msra.mxu0 0.0
    %975 = vmatprep.subr.mxu0 0.0
    %976 = vmatpush1.msra.mxu0 0.0
    %977 = vmatprep.subr.mxu0 0.0
    %978 = vmatpush1.msra.mxu0 0.0
    %979 = vmatprep.subr.mxu0 0.0
    %980 = vmatpush1.msra.mxu0 0.0
    %981 = vmatprep.subr.mxu0 0.0
    %982 = vmatpush1.msra.mxu0 0.0
    %983 = vmatprep.subr.mxu0 0.0
    %984 = vmatpush1.msra.mxu0 0.0
    %985 = vmatprep.subr.mxu0 0.0
    %986 = vmatpush1.msra.mxu0 0.0
    %987 = vmatprep.subr.mxu0 0.0
    %988 = vmatpush1.msra.mxu0 0.0
    %989 = vmatprep.subr.mxu0 0.0
    %990 = vmatpush1.msra.mxu0 0.0
    %991 = vmatprep.mubr.f32.mxu0 0.0
    %992 = vmatmul.mubr.f32.gmra.mrb[0].mxu0 %v925
    %v993 = vpop.f32.mrb[0].mxu0
    %v994 = vadd.f32 0.0, %v993
    %v995 = vpop.f32.mrb[0].mxu0
    %996 = vdwg.mxu0
    %997 = vmatprep.subr.mxu0 0.0
    %998 = vmatpush1.msra.mxu0 %v431
    %999 = vmatprep.subr.mxu0 0.0
    %1000 = vmatpush1.msra.mxu0 %v432
    %1001 = vmatprep.subr.mxu0 0.0
    %1002 = vmatpush1.msra.mxu0 %v433
    %1003 = vmatprep.subr.mxu0 0.0
    %1004 = vmatpush1.msra.mxu0 %v434
    %1005 = vmatprep.subr.mxu0 0.0
    %1006 = vmatpush1.msra.mxu0 0.0
    %1007 = vmatprep.subr.mxu0 0.0
    %1008 = vmatpush1.msra.mxu0 0.0
    %1009 = vmatprep.subr.mxu0 0.0
    %1010 = vmatpush1.msra.mxu0 0.0
    %1011 = vmatprep.subr.mxu0 0.0
    %1012 = vmatpush1.msra.mxu0 0.0
    %1013 = vmatprep.subr.mxu0 0.0
    %1014 = vmatpush1.msra.mxu0 0.0
    %1015 = vmatprep.subr.mxu0 0.0
    %1016 = vmatpush1.msra.mxu0 0.0
    %1017 = vmatprep.subr.mxu0 0.0
    %1018 = vmatpush1.msra.mxu0 0.0
    %1019 = vmatprep.subr.mxu0 0.0
    %1020 = vmatpush1.msra.mxu0 0.0
    %1021 = vmatprep.subr.mxu0 0.0
    %1022 = vmatpush1.msra.mxu0 0.0
    %1023 = vmatprep.subr.mxu0 0.0
    %1024 = vmatpush1.msra.mxu0 0.0
    %1025 = vmatprep.subr.mxu0 0.0
    %1026 = vmatpush1.msra.mxu0 0.0
    %1027 = vmatprep.subr.mxu0 0.0
    %1028 = vmatpush1.msra.mxu0 0.0
    %1029 = vmatprep.subr.mxu0 0.0
    %1030 = vmatpush1.msra.mxu0 0.0
    %1031 = vmatprep.subr.mxu0 0.0
    %1032 = vmatpush1.msra.mxu0 0.0
    %1033 = vmatprep.subr.mxu0 0.0
    %1034 = vmatpush1.msra.mxu0 0.0
    %1035 = vmatprep.subr.mxu0 0.0
    %1036 = vmatpush1.msra.mxu0 0.0
    %1037 = vmatprep.subr.mxu0 0.0
    %1038 = vmatpush1.msra.mxu0 0.0
    %1039 = vmatprep.subr.mxu0 0.0
    %1040 = vmatpush1.msra.mxu0 0.0
    %1041 = vmatprep.subr.mxu0 0.0
    %1042 = vmatpush1.msra.mxu0 0.0
    %1043 = vmatprep.subr.mxu0 0.0
    %1044 = vmatpush1.msra.mxu0 0.0
    %1045 = vmatprep.subr.mxu0 0.0
    %1046 = vmatpush1.msra.mxu0 0.0
    %1047 = vmatprep.subr.mxu0 0.0
    %1048 = vmatpush1.msra.mxu0 0.0
    %1049 = vmatprep.subr.mxu0 0.0
    %1050 = vmatpush1.msra.mxu0 0.0
    %1051 = vmatprep.subr.mxu0 0.0
    %1052 = vmatpush1.msra.mxu0 0.0
    %1053 = vmatprep.subr.mxu0 0.0
    %1054 = vmatpush1.msra.mxu0 0.0
    %1055 = vmatprep.subr.mxu0 0.0
    %1056 = vmatpush1.msra.mxu0 0.0
    %1057 = vmatprep.subr.mxu0 0.0
    %1058 = vmatpush1.msra.mxu0 0.0
    %1059 = vmatprep.subr.mxu0 0.0
    %1060 = vmatpush1.msra.mxu0 0.0
    %1061 = vmatprep.mubr.f32.mxu0 0.0
    %1062 = vmatmul.mubr.f32.gmra.mrb[0].mxu0 %v925
    %v1063 = vpop.f32.mrb[0].mxu0
    %v1064 = vadd.f32 0.0, %v1063
    %v1065 = vpop.f32.mrb[0].mxu0
    %1066 = vdwg.mxu0
    %1067 = vmatprep.subr.mxu0 0.0
    %1068 = vmatpush1.msra.mxu0 %v436
    %1069 = vmatprep.subr.mxu0 0.0
    %1070 = vmatpush1.msra.mxu0 %v437
    %1071 = vmatprep.subr.mxu0 0.0
    %1072 = vmatpush1.msra.mxu0 %v438
    %1073 = vmatprep.subr.mxu0 0.0
    %1074 = vmatpush1.msra.mxu0 %v439
    %1075 = vmatprep.subr.mxu0 0.0
    %1076 = vmatpush1.msra.mxu0 0.0
    %1077 = vmatprep.subr.mxu0 0.0
    %1078 = vmatpush1.msra.mxu0 0.0
    %1079 = vmatprep.subr.mxu0 0.0
    %1080 = vmatpush1.msra.mxu0 0.0
    %1081 = vmatprep.subr.mxu0 0.0
    %1082 = vmatpush1.msra.mxu0 0.0
    %1083 = vmatprep.subr.mxu0 0.0
    %1084 = vmatpush1.msra.mxu0 0.0
    %1085 = vmatprep.subr.mxu0 0.0
    %1086 = vmatpush1.msra.mxu0 0.0
    %1087 = vmatprep.subr.mxu0 0.0
    %1088 = vmatpush1.msra.mxu0 0.0
    %1089 = vmatprep.subr.mxu0 0.0
    %1090 = vmatpush1.msra.mxu0 0.0
    %1091 = vmatprep.subr.mxu0 0.0
    %1092 = vmatpush1.msra.mxu0 0.0
    %1093 = vmatprep.subr.mxu0 0.0
    %1094 = vmatpush1.msra.mxu0 0.0
    %1095 = vmatprep.subr.mxu0 0.0
    %1096 = vmatpush1.msra.mxu0 0.0
    %1097 = vmatprep.subr.mxu0 0.0
    %1098 = vmatpush1.msra.mxu0 0.0
    %1099 = vmatprep.subr.mxu0 0.0
    %1100 = vmatpush1.msra.mxu0 0.0
    %1101 = vmatprep.subr.mxu0 0.0
    %1102 = vmatpush1.msra.mxu0 0.0
    %1103 = vmatprep.subr.mxu0 0.0
    %1104 = vmatpush1.msra.mxu0 0.0
    %1105 = vmatprep.subr.mxu0 0.0
    %1106 = vmatpush1.msra.mxu0 0.0
    %1107 = vmatprep.subr.mxu0 0.0
    %1108 = vmatpush1.msra.mxu0 0.0
    %1109 = vmatprep.subr.mxu0 0.0
    %1110 = vmatpush1.msra.mxu0 0.0
    %1111 = vmatprep.subr.mxu0 0.0
    %1112 = vmatpush1.msra.mxu0 0.0
    %1113 = vmatprep.subr.mxu0 0.0
    %1114 = vmatpush1.msra.mxu0 0.0
    %1115 = vmatprep.subr.mxu0 0.0
    %1116 = vmatpush1.msra.mxu0 0.0
    %1117 = vmatprep.subr.mxu0 0.0
    %1118 = vmatpush1.msra.mxu0 0.0
    %1119 = vmatprep.subr.mxu0 0.0
    %1120 = vmatpush1.msra.mxu0 0.0
    %1121 = vmatprep.subr.mxu0 0.0
    %1122 = vmatpush1.msra.mxu0 0.0
    %1123 = vmatprep.subr.mxu0 0.0
    %1124 = vmatpush1.msra.mxu0 0.0
    %1125 = vmatprep.subr.mxu0 0.0
    %1126 = vmatpush1.msra.mxu0 0.0
    %1127 = vmatprep.subr.mxu0 0.0
    %1128 = vmatpush1.msra.mxu0 0.0
    %1129 = vmatprep.subr.mxu0 0.0
    %1130 = vmatpush1.msra.mxu0 0.0
    %1131 = vmatprep.mubr.f32.mxu0 0.0
    %1132 = vmatmul.mubr.f32.gmra.mrb[0].mxu0 %v925
    %v1133 = vpop.f32.mrb[0].mxu0
    %v1134 = vadd.f32 %v441, %v1133
    %v1135 = vpop.f32.mrb[0].mxu0
    %1136 = vdwg.mxu0
    %v1138 = vrot.slane %v994, 6
    %v1140 = vadd.f32 %v254, %v1138
    %v1141 = vxor.u32 %v1140, 2147483648
    %v1142 = vmul.f32 %v1141, 1.442695
    %v1143 = vpow.pop %v1142
    %v1144 = vadd.f32 %v1143, 1.0
    %v1145 = vrcp.pop %v1144
    %v1146 = vmul.f32 1.0, %v1145
    %v1148 = vrot.slane %v1064, 6
    %v1150 = vadd.f32 %v344, %v1148
    %v1151 = vxor.u32 %v1150, 2147483648
    %v1152 = vmul.f32 %v1151, 1.442695
    %v1153 = vpow.pop %v1152
    %v1154 = vadd.f32 %v1153, 1.0
    %v1155 = vrcp.pop %v1154
    %v1156 = vmul.f32 1.0, %v1155
    %v1158 = vrot.slane %v1134, 6
    %v1160 = vmul.f32 %v1146, %v1158
    %v1161 = vadd.f32 %v423, %v1160
    %v1162 = vtanh.pop %v1161
    %v1163 = vsub.f32 1.0, %v1156
    %v1164 = vmul.f32 %v1163, %v1162
    %v1165 = vrot.slane %v922, 7
    %v1167 = vmul.f32 %v1156, %v1165
    %v1168 = vadd.f32 %v1164, %v1167
    %v1170 = vrot.slane %v1168, 2
    %v1171 = vsel %vm443, %v1170, 0
    %1173 = vmatprep.subr.mxu0 0.0
    %1174 = vmatpush1.msra.mxu0 %v426
    %1175 = vmatprep.subr.mxu0 0.0
    %1176 = vmatpush1.msra.mxu0 %v427
    %1177 = vmatprep.subr.mxu0 0.0
    %1178 = vmatpush1.msra.mxu0 %v428
    %1179 = vmatprep.subr.mxu0 0.0
    %1180 = vmatpush1.msra.mxu0 %v429
    %1181 = vmatprep.subr.mxu0 0.0
    %1182 = vmatpush1.msra.mxu0 0.0
    %1183 = vmatprep.subr.mxu0 0.0
    %1184 = vmatpush1.msra.mxu0 0.0
    %1185 = vmatprep.subr.mxu0 0.0
    %1186 = vmatpush1.msra.mxu0 0.0
    %1187 = vmatprep.subr.mxu0 0.0
    %1188 = vmatpush1.msra.mxu0 0.0
    %1189 = vmatprep.subr.mxu0 0.0
    %1190 = vmatpush1.msra.mxu0 0.0
    %1191 = vmatprep.subr.mxu0 0.0
    %1192 = vmatpush1.msra.mxu0 0.0
    %1193 = vmatprep.subr.mxu0 0.0
    %1194 = vmatpush1.msra.mxu0 0.0
    %1195 = vmatprep.subr.mxu0 0.0
    %1196 = vmatpush1.msra.mxu0 0.0
    %1197 = vmatprep.subr.mxu0 0.0
    %1198 = vmatpush1.msra.mxu0 0.0
    %1199 = vmatprep.subr.mxu0 0.0
    %1200 = vmatpush1.msra.mxu0 0.0
    %1201 = vmatprep.subr.mxu0 0.0
    %1202 = vmatpush1.msra.mxu0 0.0
    %1203 = vmatprep.subr.mxu0 0.0
    %1204 = vmatpush1.msra.mxu0 0.0
    %1205 = vmatprep.subr.mxu0 0.0
    %1206 = vmatpush1.msra.mxu0 0.0
    %1207 = vmatprep.subr.mxu0 0.0
    %1208 = vmatpush1.msra.mxu0 0.0
    %1209 = vmatprep.subr.mxu0 0.0
    %1210 = vmatpush1.msra.mxu0 0.0
    %1211 = vmatprep.subr.mxu0 0.0
    %1212 = vmatpush1.msra.mxu0 0.0
    %1213 = vmatprep.subr.mxu0 0.0
    %1214 = vmatpush1.msra.mxu0 0.0
    %1215 = vmatprep.subr.mxu0 0.0
    %1216 = vmatpush1.msra.mxu0 0.0
    %1217 = vmatprep.subr.mxu0 0.0
    %1218 = vmatpush1.msra.mxu0 0.0
    %1219 = vmatprep.subr.mxu0 0.0
    %1220 = vmatpush1.msra.mxu0 0.0
    %1221 = vmatprep.subr.mxu0 0.0
    %1222 = vmatpush1.msra.mxu0 0.0
    %1223 = vmatprep.subr.mxu0 0.0
    %1224 = vmatpush1.msra.mxu0 0.0
    %1225 = vmatprep.subr.mxu0 0.0
    %1226 = vmatpush1.msra.mxu0 0.0
    %1227 = vmatprep.subr.mxu0 0.0
    %1228 = vmatpush1.msra.mxu0 0.0
    %1229 = vmatprep.subr.mxu0 0.0
    %1230 = vmatpush1.msra.mxu0 0.0
    %1231 = vmatprep.subr.mxu0 0.0
    %1232 = vmatpush1.msra.mxu0 0.0
    %1233 = vmatprep.subr.mxu0 0.0
    %1234 = vmatpush1.msra.mxu0 0.0
    %1235 = vmatprep.subr.mxu0 0.0
    %1236 = vmatpush1.msra.mxu0 0.0
    %1237 = vmatprep.mubr.f32.mxu0 0.0
    %1238 = vmatmul.mubr.f32.gmra.mrb[0].mxu0 %v1171
    %v1239 = vpop.f32.mrb[0].mxu0
    %v1240 = vadd.f32 0.0, %v1239
    %v1241 = vpop.f32.mrb[0].mxu0
    %1242 = vdwg.mxu0
    %1243 = vmatprep.subr.mxu0 0.0
    %1244 = vmatpush1.msra.mxu0 %v431
    %1245 = vmatprep.subr.mxu0 0.0
    %1246 = vmatpush1.msra.mxu0 %v432
    %1247 = vmatprep.subr.mxu0 0.0
    %1248 = vmatpush1.msra.mxu0 %v433
    %1249 = vmatprep.subr.mxu0 0.0
    %1250 = vmatpush1.msra.mxu0 %v434
    %1251 = vmatprep.subr.mxu0 0.0
    %1252 = vmatpush1.msra.mxu0 0.0
    %1253 = vmatprep.subr.mxu0 0.0
    %1254 = vmatpush1.msra.mxu0 0.0
    %1255 = vmatprep.subr.mxu0 0.0
    %1256 = vmatpush1.msra.mxu0 0.0
    %1257 = vmatprep.subr.mxu0 0.0
    %1258 = vmatpush1.msra.mxu0 0.0
    %1259 = vmatprep.subr.mxu0 0.0
    %1260 = vmatpush1.msra.mxu0 0.0
    %1261 = vmatprep.subr.mxu0 0.0
    %1262 = vmatpush1.msra.mxu0 0.0
    %1263 = vmatprep.subr.mxu0 0.0
    %1264 = vmatpush1.msra.mxu0 0.0
    %1265 = vmatprep.subr.mxu0 0.0
    %1266 = vmatpush1.msra.mxu0 0.0
    %1267 = vmatprep.subr.mxu0 0.0
    %1268 = vmatpush1.msra.mxu0 0.0
    %1269 = vmatprep.subr.mxu0 0.0
    %1270 = vmatpush1.msra.mxu0 0.0
    %1271 = vmatprep.subr.mxu0 0.0
    %1272 = vmatpush1.msra.mxu0 0.0
    %1273 = vmatprep.subr.mxu0 0.0
    %1274 = vmatpush1.msra.mxu0 0.0
    %1275 = vmatprep.subr.mxu0 0.0
    %1276 = vmatpush1.msra.mxu0 0.0
    %1277 = vmatprep.subr.mxu0 0.0
    %1278 = vmatpush1.msra.mxu0 0.0
    %1279 = vmatprep.subr.mxu0 0.0
    %1280 = vmatpush1.msra.mxu0 0.0
    %1281 = vmatprep.subr.mxu0 0.0
    %1282 = vmatpush1.msra.mxu0 0.0
    %1283 = vmatprep.subr.mxu0 0.0
    %1284 = vmatpush1.msra.mxu0 0.0
    %1285 = vmatprep.subr.mxu0 0.0
    %1286 = vmatpush1.msra.mxu0 0.0
    %1287 = vmatprep.subr.mxu0 0.0
    %1288 = vmatpush1.msra.mxu0 0.0
    %1289 = vmatprep.subr.mxu0 0.0
    %1290 = vmatpush1.msra.mxu0 0.0
    %1291 = vmatprep.subr.mxu0 0.0
    %1292 = vmatpush1.msra.mxu0 0.0
    %1293 = vmatprep.subr.mxu0 0.0
    %1294 = vmatpush1.msra.mxu0 0.0
    %1295 = vmatprep.subr.mxu0 0.0
    %1296 = vmatpush1.msra.mxu0 0.0
    %1297 = vmatprep.subr.mxu0 0.0
    %1298 = vmatpush1.msra.mxu0 0.0
    %1299 = vmatprep.subr.mxu0 0.0
    %1300 = vmatpush1.msra.mxu0 0.0
    %1301 = vmatprep.subr.mxu0 0.0
    %1302 = vmatpush1.msra.mxu0 0.0
    %1303 = vmatprep.subr.mxu0 0.0
    %1304 = vmatpush1.msra.mxu0 0.0
    %1305 = vmatprep.subr.mxu0 0.0
    %1306 = vmatpush1.msra.mxu0 0.0
    %1307 = vmatprep.mubr.f32.mxu0 0.0
    %1308 = vmatmul.mubr.f32.gmra.mrb[0].mxu0 %v1171
    %v1309 = vpop.f32.mrb[0].mxu0
    %v1310 = vadd.f32 0.0, %v1309
    %v1311 = vpop.f32.mrb[0].mxu0
    %1312 = vdwg.mxu0
    %1313 = vmatprep.subr.mxu0 0.0
    %1314 = vmatpush1.msra.mxu0 %v436
    %1315 = vmatprep.subr.mxu0 0.0
    %1316 = vmatpush1.msra.mxu0 %v437
    %1317 = vmatprep.subr.mxu0 0.0
    %1318 = vmatpush1.msra.mxu0 %v438
    %1319 = vmatprep.subr.mxu0 0.0
    %1320 = vmatpush1.msra.mxu0 %v439
    %1321 = vmatprep.subr.mxu0 0.0
    %1322 = vmatpush1.msra.mxu0 0.0
    %1323 = vmatprep.subr.mxu0 0.0
    %1324 = vmatpush1.msra.mxu0 0.0
    %1325 = vmatprep.subr.mxu0 0.0
    %1326 = vmatpush1.msra.mxu0 0.0
    %1327 = vmatprep.subr.mxu0 0.0
    %1328 = vmatpush1.msra.mxu0 0.0
    %1329 = vmatprep.subr.mxu0 0.0
    %1330 = vmatpush1.msra.mxu0 0.0
    %1331 = vmatprep.subr.mxu0 0.0
    %1332 = vmatpush1.msra.mxu0 0.0
    %1333 = vmatprep.subr.mxu0 0.0
    %1334 = vmatpush1.msra.mxu0 0.0
    %1335 = vmatprep.subr.mxu0 0.0
    %1336 = vmatpush1.msra.mxu0 0.0
    %1337 = vmatprep.subr.mxu0 0.0
    %1338 = vmatpush1.msra.mxu0 0.0
    %1339 = vmatprep.subr.mxu0 0.0
    %1340 = vmatpush1.msra.mxu0 0.0
    %1341 = vmatprep.subr.mxu0 0.0
    %1342 = vmatpush1.msra.mxu0 0.0
    %1343 = vmatprep.subr.mxu0 0.0
    %1344 = vmatpush1.msra.mxu0 0.0
    %1345 = vmatprep.subr.mxu0 0.0
    %1346 = vmatpush1.msra.mxu0 0.0
    %1347 = vmatprep.subr.mxu0 0.0
    %1348 = vmatpush1.msra.mxu0 0.0
    %1349 = vmatprep.subr.mxu0 0.0
    %1350 = vmatpush1.msra.mxu0 0.0
    %1351 = vmatprep.subr.mxu0 0.0
    %1352 = vmatpush1.msra.mxu0 0.0
    %1353 = vmatprep.subr.mxu0 0.0
    %1354 = vmatpush1.msra.mxu0 0.0
    %1355 = vmatprep.subr.mxu0 0.0
    %1356 = vmatpush1.msra.mxu0 0.0
    %1357 = vmatprep.subr.mxu0 0.0
    %1358 = vmatpush1.msra.mxu0 0.0
    %1359 = vmatprep.subr.mxu0 0.0
    %1360 = vmatpush1.msra.mxu0 0.0
    %1361 = vmatprep.subr.mxu0 0.0
    %1362 = vmatpush1.msra.mxu0 0.0
    %1363 = vmatprep.subr.mxu0 0.0
    %1364 = vmatpush1.msra.mxu0 0.0
    %1365 = vmatprep.subr.mxu0 0.0
    %1366 = vmatpush1.msra.mxu0 0.0
    %1367 = vmatprep.subr.mxu0 0.0
    %1368 = vmatpush1.msra.mxu0 0.0
    %1369 = vmatprep.subr.mxu0 0.0
    %1370 = vmatpush1.msra.mxu0 0.0
    %1371 = vmatprep.subr.mxu0 0.0
    %1372 = vmatpush1.msra.mxu0 0.0
    %1373 = vmatprep.subr.mxu0 0.0
    %1374 = vmatpush1.msra.mxu0 0.0
    %1375 = vmatprep.subr.mxu0 0.0
    %1376 = vmatpush1.msra.mxu0 0.0
    %1377 = vmatprep.mubr.f32.mxu0 0.0
    %1378 = vmatmul.mubr.f32.gmra.mrb[0].mxu0 %v1171
    %v1379 = vpop.f32.mrb[0].mxu0
    %v1380 = vadd.f32 %v441, %v1379
    %v1381 = vpop.f32.mrb[0].mxu0
    %1382 = vdwg.mxu0
    %v1384 = vrot.slane %v1240, 5
    %v1386 = vadd.f32 %v254, %v1384
    %v1387 = vxor.u32 %v1386, 2147483648
    %v1388 = vmul.f32 %v1387, 1.442695
    %v1389 = vpow.pop %v1388
    %v1390 = vadd.f32 %v1389, 1.0
    %v1391 = vrcp.pop %v1390
    %v1392 = vmul.f32 1.0, %v1391
    %v1394 = vrot.slane %v1310, 5
    %v1396 = vadd.f32 %v344, %v1394
    %v1397 = vxor.u32 %v1396, 2147483648
    %v1398 = vmul.f32 %v1397, 1.442695
    %v1399 = vpow.pop %v1398
    %v1400 = vadd.f32 %v1399, 1.0
    %v1401 = vrcp.pop %v1400
    %v1402 = vmul.f32 1.0, %v1401
    %v1404 = vrot.slane %v1380, 5
    %v1406 = vmul.f32 %v1392, %v1404
    %v1407 = vadd.f32 %v423, %v1406
    %v1408 = vtanh.pop %v1407
    %v1409 = vsub.f32 1.0, %v1402
    %v1410 = vmul.f32 %v1409, %v1408
    %v1411 = vrot.slane %v1168, 7
    %v1413 = vmul.f32 %v1402, %v1411
    %v1414 = vadd.f32 %v1410, %v1413
    %v1416 = vrot.slane %v1414, 3
    %v1417 = vsel %vm443, %v1416, 0
    %1419 = vmatprep.subr.mxu0 0.0
    %1420 = vmatpush1.msra.mxu0 %v426
    %1421 = vmatprep.subr.mxu0 0.0
    %1422 = vmatpush1.msra.mxu0 %v427
    %1423 = vmatprep.subr.mxu0 0.0
    %1424 = vmatpush1.msra.mxu0 %v428
    %1425 = vmatprep.subr.mxu0 0.0
    %1426 = vmatpush1.msra.mxu0 %v429
    %1427 = vmatprep.subr.mxu0 0.0
    %1428 = vmatpush1.msra.mxu0 0.0
    %1429 = vmatprep.subr.mxu0 0.0
    %1430 = vmatpush1.msra.mxu0 0.0
    %1431 = vmatprep.subr.mxu0 0.0
    %1432 = vmatpush1.msra.mxu0 0.0
    %1433 = vmatprep.subr.mxu0 0.0
    %1434 = vmatpush1.msra.mxu0 0.0
    %1435 = vmatprep.subr.mxu0 0.0
    %1436 = vmatpush1.msra.mxu0 0.0
    %1437 = vmatprep.subr.mxu0 0.0
    %1438 = vmatpush1.msra.mxu0 0.0
    %1439 = vmatprep.subr.mxu0 0.0
    %1440 = vmatpush1.msra.mxu0 0.0
    %1441 = vmatprep.subr.mxu0 0.0
    %1442 = vmatpush1.msra.mxu0 0.0
    %1443 = vmatprep.subr.mxu0 0.0
    %1444 = vmatpush1.msra.mxu0 0.0
    %1445 = vmatprep.subr.mxu0 0.0
    %1446 = vmatpush1.msra.mxu0 0.0
    %1447 = vmatprep.subr.mxu0 0.0
    %1448 = vmatpush1.msra.mxu0 0.0
    %1449 = vmatprep.subr.mxu0 0.0
    %1450 = vmatpush1.msra.mxu0 0.0
    %1451 = vmatprep.subr.mxu0 0.0
    %1452 = vmatpush1.msra.mxu0 0.0
    %1453 = vmatprep.subr.mxu0 0.0
    %1454 = vmatpush1.msra.mxu0 0.0
    %1455 = vmatprep.subr.mxu0 0.0
    %1456 = vmatpush1.msra.mxu0 0.0
    %1457 = vmatprep.subr.mxu0 0.0
    %1458 = vmatpush1.msra.mxu0 0.0
    %1459 = vmatprep.subr.mxu0 0.0
    %1460 = vmatpush1.msra.mxu0 0.0
    %1461 = vmatprep.subr.mxu0 0.0
    %1462 = vmatpush1.msra.mxu0 0.0
    %1463 = vmatprep.subr.mxu0 0.0
    %1464 = vmatpush1.msra.mxu0 0.0
    %1465 = vmatprep.subr.mxu0 0.0
    %1466 = vmatpush1.msra.mxu0 0.0
    %1467 = vmatprep.subr.mxu0 0.0
    %1468 = vmatpush1.msra.mxu0 0.0
    %1469 = vmatprep.subr.mxu0 0.0
    %1470 = vmatpush1.msra.mxu0 0.0
    %1471 = vmatprep.subr.mxu0 0.0
    %1472 = vmatpush1.msra.mxu0 0.0
    %1473 = vmatprep.subr.mxu0 0.0
    %1474 = vmatpush1.msra.mxu0 0.0
    %1475 = vmatprep.subr.mxu0 0.0
    %1476 = vmatpush1.msra.mxu0 0.0
    %1477 = vmatprep.subr.mxu0 0.0
    %1478 = vmatpush1.msra.mxu0 0.0
    %1479 = vmatprep.subr.mxu0 0.0
    %1480 = vmatpush1.msra.mxu0 0.0
    %1481 = vmatprep.subr.mxu0 0.0
    %1482 = vmatpush1.msra.mxu0 0.0
    %1483 = vmatprep.mubr.f32.mxu0 0.0
    %1484 = vmatmul.mubr.f32.gmra.mrb[0].mxu0 %v1417
    %v1485 = vpop.f32.mrb[0].mxu0
    %v1486 = vadd.f32 0.0, %v1485
    %v1487 = vpop.f32.mrb[0].mxu0
    %1488 = vdwg.mxu0
    %1489 = vmatprep.subr.mxu0 0.0
    %1490 = vmatpush1.msra.mxu0 %v431
    %1491 = vmatprep.subr.mxu0 0.0
    %1492 = vmatpush1.msra.mxu0 %v432
    %1493 = vmatprep.subr.mxu0 0.0
    %1494 = vmatpush1.msra.mxu0 %v433
    %1495 = vmatprep.subr.mxu0 0.0
    %1496 = vmatpush1.msra.mxu0 %v434
    %1497 = vmatprep.subr.mxu0 0.0
    %1498 = vmatpush1.msra.mxu0 0.0
    %1499 = vmatprep.subr.mxu0 0.0
    %1500 = vmatpush1.msra.mxu0 0.0
    %1501 = vmatprep.subr.mxu0 0.0
    %1502 = vmatpush1.msra.mxu0 0.0
    %1503 = vmatprep.subr.mxu0 0.0
    %1504 = vmatpush1.msra.mxu0 0.0
    %1505 = vmatprep.subr.mxu0 0.0
    %1506 = vmatpush1.msra.mxu0 0.0
    %1507 = vmatprep.subr.mxu0 0.0
    %1508 = vmatpush1.msra.mxu0 0.0
    %1509 = vmatprep.subr.mxu0 0.0
    %1510 = vmatpush1.msra.mxu0 0.0
    %1511 = vmatprep.subr.mxu0 0.0
    %1512 = vmatpush1.msra.mxu0 0.0
    %1513 = vmatprep.subr.mxu0 0.0
    %1514 = vmatpush1.msra.mxu0 0.0
    %1515 = vmatprep.subr.mxu0 0.0
    %1516 = vmatpush1.msra.mxu0 0.0
    %1517 = vmatprep.subr.mxu0 0.0
    %1518 = vmatpush1.msra.mxu0 0.0
    %1519 = vmatprep.subr.mxu0 0.0
    %1520 = vmatpush1.msra.mxu0 0.0
    %1521 = vmatprep.subr.mxu0 0.0
    %1522 = vmatpush1.msra.mxu0 0.0
    %1523 = vmatprep.subr.mxu0 0.0
    %1524 = vmatpush1.msra.mxu0 0.0
    %1525 = vmatprep.subr.mxu0 0.0
    %1526 = vmatpush1.msra.mxu0 0.0
    %1527 = vmatprep.subr.mxu0 0.0
    %1528 = vmatpush1.msra.mxu0 0.0
    %1529 = vmatprep.subr.mxu0 0.0
    %1530 = vmatpush1.msra.mxu0 0.0
    %1531 = vmatprep.subr.mxu0 0.0
    %1532 = vmatpush1.msra.mxu0 0.0
    %1533 = vmatprep.subr.mxu0 0.0
    %1534 = vmatpush1.msra.mxu0 0.0
    %1535 = vmatprep.subr.mxu0 0.0
    %1536 = vmatpush1.msra.mxu0 0.0
    %1537 = vmatprep.subr.mxu0 0.0
    %1538 = vmatpush1.msra.mxu0 0.0
    %1539 = vmatprep.subr.mxu0 0.0
    %1540 = vmatpush1.msra.mxu0 0.0
    %1541 = vmatprep.subr.mxu0 0.0
    %1542 = vmatpush1.msra.mxu0 0.0
    %1543 = vmatprep.subr.mxu0 0.0
    %1544 = vmatpush1.msra.mxu0 0.0
    %1545 = vmatprep.subr.mxu0 0.0
    %1546 = vmatpush1.msra.mxu0 0.0
    %1547 = vmatprep.subr.mxu0 0.0
    %1548 = vmatpush1.msra.mxu0 0.0
    %1549 = vmatprep.subr.mxu0 0.0
    %1550 = vmatpush1.msra.mxu0 0.0
    %1551 = vmatprep.subr.mxu0 0.0
    %1552 = vmatpush1.msra.mxu0 0.0
    %1553 = vmatprep.mubr.f32.mxu0 0.0
    %1554 = vmatmul.mubr.f32.gmra.mrb[0].mxu0 %v1417
    %v1555 = vpop.f32.mrb[0].mxu0
    %v1556 = vadd.f32 0.0, %v1555
    %v1557 = vpop.f32.mrb[0].mxu0
    %1558 = vdwg.mxu0
    %1559 = vmatprep.subr.mxu0 0.0
    %1560 = vmatpush1.msra.mxu0 %v436
    %1561 = vmatprep.subr.mxu0 0.0
    %1562 = vmatpush1.msra.mxu0 %v437
    %1563 = vmatprep.subr.mxu0 0.0
    %1564 = vmatpush1.msra.mxu0 %v438
    %1565 = vmatprep.subr.mxu0 0.0
    %1566 = vmatpush1.msra.mxu0 %v439
    %1567 = vmatprep.subr.mxu0 0.0
    %1568 = vmatpush1.msra.mxu0 0.0
    %1569 = vmatprep.subr.mxu0 0.0
    %1570 = vmatpush1.msra.mxu0 0.0
    %1571 = vmatprep.subr.mxu0 0.0
    %1572 = vmatpush1.msra.mxu0 0.0
    %1573 = vmatprep.subr.mxu0 0.0
    %1574 = vmatpush1.msra.mxu0 0.0
    %1575 = vmatprep.subr.mxu0 0.0
    %1576 = vmatpush1.msra.mxu0 0.0
    %1577 = vmatprep.subr.mxu0 0.0
    %1578 = vmatpush1.msra.mxu0 0.0
    %1579 = vmatprep.subr.mxu0 0.0
    %1580 = vmatpush1.msra.mxu0 0.0
    %1581 = vmatprep.subr.mxu0 0.0
    %1582 = vmatpush1.msra.mxu0 0.0
    %1583 = vmatprep.subr.mxu0 0.0
    %1584 = vmatpush1.msra.mxu0 0.0
    %1585 = vmatprep.subr.mxu0 0.0
    %1586 = vmatpush1.msra.mxu0 0.0
    %1587 = vmatprep.subr.mxu0 0.0
    %1588 = vmatpush1.msra.mxu0 0.0
    %1589 = vmatprep.subr.mxu0 0.0
    %1590 = vmatpush1.msra.mxu0 0.0
    %1591 = vmatprep.subr.mxu0 0.0
    %1592 = vmatpush1.msra.mxu0 0.0
    %1593 = vmatprep.subr.mxu0 0.0
    %1594 = vmatpush1.msra.mxu0 0.0
    %1595 = vmatprep.subr.mxu0 0.0
    %1596 = vmatpush1.msra.mxu0 0.0
    %1597 = vmatprep.subr.mxu0 0.0
    %1598 = vmatpush1.msra.mxu0 0.0
    %1599 = vmatprep.subr.mxu0 0.0
    %1600 = vmatpush1.msra.mxu0 0.0
    %1601 = vmatprep.subr.mxu0 0.0
    %1602 = vmatpush1.msra.mxu0 0.0
    %1603 = vmatprep.subr.mxu0 0.0
    %1604 = vmatpush1.msra.mxu0 0.0
    %1605 = vmatprep.subr.mxu0 0.0
    %1606 = vmatpush1.msra.mxu0 0.0
    %1607 = vmatprep.subr.mxu0 0.0
    %1608 = vmatpush1.msra.mxu0 0.0
    %1609 = vmatprep.subr.mxu0 0.0
    %1610 = vmatpush1.msra.mxu0 0.0
    %1611 = vmatprep.subr.mxu0 0.0
    %1612 = vmatpush1.msra.mxu0 0.0
    %1613 = vmatprep.subr.mxu0 0.0
    %1614 = vmatpush1.msra.mxu0 0.0
    %1615 = vmatprep.subr.mxu0 0.0
    %1616 = vmatpush1.msra.mxu0 0.0
    %1617 = vmatprep.subr.mxu0 0.0
    %1618 = vmatpush1.msra.mxu0 0.0
    %1619 = vmatprep.subr.mxu0 0.0
    %1620 = vmatpush1.msra.mxu0 0.0
    %1621 = vmatprep.subr.mxu0 0.0
    %1622 = vmatpush1.msra.mxu0 0.0
    %1623 = vmatprep.mubr.f32.mxu0 0.0
    %1624 = vmatmul.mubr.f32.gmra.mrb[0].mxu0 %v1417
    %v1625 = vpop.f32.mrb[0].mxu0
    %v1626 = vadd.f32 %v441, %v1625
    %v1627 = vpop.f32.mrb[0].mxu0
    %1628 = vdwg.mxu0
    %v1630 = vrot.slane %v1486, 4
    %v1632 = vadd.f32 %v254, %v1630
    %v1633 = vxor.u32 %v1632, 2147483648
    %v1634 = vmul.f32 %v1633, 1.442695
    %v1635 = vpow.pop %v1634
    %v1636 = vadd.f32 %v1635, 1.0
    %v1637 = vrcp.pop %v1636
    %v1638 = vmul.f32 1.0, %v1637
    %v1640 = vrot.slane %v1556, 4
    %v1642 = vadd.f32 %v344, %v1640
    %v1643 = vxor.u32 %v1642, 2147483648
    %v1644 = vmul.f32 %v1643, 1.442695
    %v1645 = vpow.pop %v1644
    %v1646 = vadd.f32 %v1645, 1.0
    %v1647 = vrcp.pop %v1646
    %v1648 = vmul.f32 1.0, %v1647
    %v1650 = vrot.slane %v1626, 4
    %v1652 = vmul.f32 %v1638, %v1650
    %v1653 = vadd.f32 %v423, %v1652
    %v1654 = vtanh.pop %v1653
    %v1655 = vsub.f32 1.0, %v1648
    %v1656 = vmul.f32 %v1655, %v1654
    %v1657 = vrot.slane %v1414, 7
    %v1659 = vmul.f32 %v1648, %v1657
    %v1660 = vadd.f32 %v1656, %v1659
    %v1662 = vrot.slane %v1660, 4
    %v1663 = vsel %vm443, %v1662, 0
    %1665 = vmatprep.subr.mxu0 0.0
    %1666 = vmatpush1.msra.mxu0 %v426
    %1667 = vmatprep.subr.mxu0 0.0
    %1668 = vmatpush1.msra.mxu0 %v427
    %1669 = vmatprep.subr.mxu0 0.0
    %1670 = vmatpush1.msra.mxu0 %v428
    %1671 = vmatprep.subr.mxu0 0.0
    %1672 = vmatpush1.msra.mxu0 %v429
    %1673 = vmatprep.subr.mxu0 0.0
    %1674 = vmatpush1.msra.mxu0 0.0
    %1675 = vmatprep.subr.mxu0 0.0
    %1676 = vmatpush1.msra.mxu0 0.0
    %1677 = vmatprep.subr.mxu0 0.0
    %1678 = vmatpush1.msra.mxu0 0.0
    %1679 = vmatprep.subr.mxu0 0.0
    %1680 = vmatpush1.msra.mxu0 0.0
    %1681 = vmatprep.subr.mxu0 0.0
    %1682 = vmatpush1.msra.mxu0 0.0
    %1683 = vmatprep.subr.mxu0 0.0
    %1684 = vmatpush1.msra.mxu0 0.0
    %1685 = vmatprep.subr.mxu0 0.0
    %1686 = vmatpush1.msra.mxu0 0.0
    %1687 = vmatprep.subr.mxu0 0.0
    %1688 = vmatpush1.msra.mxu0 0.0
    %1689 = vmatprep.subr.mxu0 0.0
    %1690 = vmatpush1.msra.mxu0 0.0
    %1691 = vmatprep.subr.mxu0 0.0
    %1692 = vmatpush1.msra.mxu0 0.0
    %1693 = vmatprep.subr.mxu0 0.0
    %1694 = vmatpush1.msra.mxu0 0.0
    %1695 = vmatprep.subr.mxu0 0.0
    %1696 = vmatpush1.msra.mxu0 0.0
    %1697 = vmatprep.subr.mxu0 0.0
    %1698 = vmatpush1.msra.mxu0 0.0
    %1699 = vmatprep.subr.mxu0 0.0
    %1700 = vmatpush1.msra.mxu0 0.0
    %1701 = vmatprep.subr.mxu0 0.0
    %1702 = vmatpush1.msra.mxu0 0.0
    %1703 = vmatprep.subr.mxu0 0.0
    %1704 = vmatpush1.msra.mxu0 0.0
    %1705 = vmatprep.subr.mxu0 0.0
    %1706 = vmatpush1.msra.mxu0 0.0
    %1707 = vmatprep.subr.mxu0 0.0
    %1708 = vmatpush1.msra.mxu0 0.0
    %1709 = vmatprep.subr.mxu0 0.0
    %1710 = vmatpush1.msra.mxu0 0.0
    %1711 = vmatprep.subr.mxu0 0.0
    %1712 = vmatpush1.msra.mxu0 0.0
    %1713 = vmatprep.subr.mxu0 0.0
    %1714 = vmatpush1.msra.mxu0 0.0
    %1715 = vmatprep.subr.mxu0 0.0
    %1716 = vmatpush1.msra.mxu0 0.0
    %1717 = vmatprep.subr.mxu0 0.0
    %1718 = vmatpush1.msra.mxu0 0.0
    %1719 = vmatprep.subr.mxu0 0.0
    %1720 = vmatpush1.msra.mxu0 0.0
    %1721 = vmatprep.subr.mxu0 0.0
    %1722 = vmatpush1.msra.mxu0 0.0
    %1723 = vmatprep.subr.mxu0 0.0
    %1724 = vmatpush1.msra.mxu0 0.0
    %1725 = vmatprep.subr.mxu0 0.0
    %1726 = vmatpush1.msra.mxu0 0.0
    %1727 = vmatprep.subr.mxu0 0.0
    %1728 = vmatpush1.msra.mxu0 0.0
    %1729 = vmatprep.mubr.f32.mxu0 0.0
    %1730 = vmatmul.mubr.f32.gmra.mrb[0].mxu0 %v1663
    %v1731 = vpop.f32.mrb[0].mxu0
    %v1732 = vadd.f32 0.0, %v1731
    %v1733 = vpop.f32.mrb[0].mxu0
    %1734 = vdwg.mxu0
    %1735 = vmatprep.subr.mxu0 0.0
    %1736 = vmatpush1.msra.mxu0 %v431
    %1737 = vmatprep.subr.mxu0 0.0
    %1738 = vmatpush1.msra.mxu0 %v432
    %1739 = vmatprep.subr.mxu0 0.0
    %1740 = vmatpush1.msra.mxu0 %v433
    %1741 = vmatprep.subr.mxu0 0.0
    %1742 = vmatpush1.msra.mxu0 %v434
    %1743 = vmatprep.subr.mxu0 0.0
    %1744 = vmatpush1.msra.mxu0 0.0
    %1745 = vmatprep.subr.mxu0 0.0
    %1746 = vmatpush1.msra.mxu0 0.0
    %1747 = vmatprep.subr.mxu0 0.0
    %1748 = vmatpush1.msra.mxu0 0.0
    %1749 = vmatprep.subr.mxu0 0.0
    %1750 = vmatpush1.msra.mxu0 0.0
    %1751 = vmatprep.subr.mxu0 0.0
    %1752 = vmatpush1.msra.mxu0 0.0
    %1753 = vmatprep.subr.mxu0 0.0
    %1754 = vmatpush1.msra.mxu0 0.0
    %1755 = vmatprep.subr.mxu0 0.0
    %1756 = vmatpush1.msra.mxu0 0.0
    %1757 = vmatprep.subr.mxu0 0.0
    %1758 = vmatpush1.msra.mxu0 0.0
    %1759 = vmatprep.subr.mxu0 0.0
    %1760 = vmatpush1.msra.mxu0 0.0
    %1761 = vmatprep.subr.mxu0 0.0
    %1762 = vmatpush1.msra.mxu0 0.0
    %1763 = vmatprep.subr.mxu0 0.0
    %1764 = vmatpush1.msra.mxu0 0.0
    %1765 = vmatprep.subr.mxu0 0.0
    %1766 = vmatpush1.msra.mxu0 0.0
    %1767 = vmatprep.subr.mxu0 0.0
    %1768 = vmatpush1.msra.mxu0 0.0
    %1769 = vmatprep.subr.mxu0 0.0
    %1770 = vmatpush1.msra.mxu0 0.0
    %1771 = vmatprep.subr.mxu0 0.0
    %1772 = vmatpush1.msra.mxu0 0.0
    %1773 = vmatprep.subr.mxu0 0.0
    %1774 = vmatpush1.msra.mxu0 0.0
    %1775 = vmatprep.subr.mxu0 0.0
    %1776 = vmatpush1.msra.mxu0 0.0
    %1777 = vmatprep.subr.mxu0 0.0
    %1778 = vmatpush1.msra.mxu0 0.0
    %1779 = vmatprep.subr.mxu0 0.0
    %1780 = vmatpush1.msra.mxu0 0.0
    %1781 = vmatprep.subr.mxu0 0.0
    %1782 = vmatpush1.msra.mxu0 0.0
    %1783 = vmatprep.subr.mxu0 0.0
    %1784 = vmatpush1.msra.mxu0 0.0
    %1785 = vmatprep.subr.mxu0 0.0
    %1786 = vmatpush1.msra.mxu0 0.0
    %1787 = vmatprep.subr.mxu0 0.0
    %1788 = vmatpush1.msra.mxu0 0.0
    %1789 = vmatprep.subr.mxu0 0.0
    %1790 = vmatpush1.msra.mxu0 0.0
    %1791 = vmatprep.subr.mxu0 0.0
    %1792 = vmatpush1.msra.mxu0 0.0
    %1793 = vmatprep.subr.mxu0 0.0
    %1794 = vmatpush1.msra.mxu0 0.0
    %1795 = vmatprep.subr.mxu0 0.0
    %1796 = vmatpush1.msra.mxu0 0.0
    %1797 = vmatprep.subr.mxu0 0.0
    %1798 = vmatpush1.msra.mxu0 0.0
    %1799 = vmatprep.mubr.f32.mxu0 0.0
    %1800 = vmatmul.mubr.f32.gmra.mrb[0].mxu0 %v1663
    %v1801 = vpop.f32.mrb[0].mxu0
    %v1802 = vadd.f32 0.0, %v1801
    %v1803 = vpop.f32.mrb[0].mxu0
    %1804 = vdwg.mxu0
    %1805 = vmatprep.subr.mxu0 0.0
    %1806 = vmatpush1.msra.mxu0 %v436
    %1807 = vmatprep.subr.mxu0 0.0
    %1808 = vmatpush1.msra.mxu0 %v437
    %1809 = vmatprep.subr.mxu0 0.0
    %1810 = vmatpush1.msra.mxu0 %v438
    %1811 = vmatprep.subr.mxu0 0.0
    %1812 = vmatpush1.msra.mxu0 %v439
    %1813 = vmatprep.subr.mxu0 0.0
    %1814 = vmatpush1.msra.mxu0 0.0
    %1815 = vmatprep.subr.mxu0 0.0
    %1816 = vmatpush1.msra.mxu0 0.0
    %1817 = vmatprep.subr.mxu0 0.0
    %1818 = vmatpush1.msra.mxu0 0.0
    %1819 = vmatprep.subr.mxu0 0.0
    %1820 = vmatpush1.msra.mxu0 0.0
    %1821 = vmatprep.subr.mxu0 0.0
    %1822 = vmatpush1.msra.mxu0 0.0
    %1823 = vmatprep.subr.mxu0 0.0
    %1824 = vmatpush1.msra.mxu0 0.0
    %1825 = vmatprep.subr.mxu0 0.0
    %1826 = vmatpush1.msra.mxu0 0.0
    %1827 = vmatprep.subr.mxu0 0.0
    %1828 = vmatpush1.msra.mxu0 0.0
    %1829 = vmatprep.subr.mxu0 0.0
    %1830 = vmatpush1.msra.mxu0 0.0
    %1831 = vmatprep.subr.mxu0 0.0
    %1832 = vmatpush1.msra.mxu0 0.0
    %1833 = vmatprep.subr.mxu0 0.0
    %1834 = vmatpush1.msra.mxu0 0.0
    %1835 = vmatprep.subr.mxu0 0.0
    %1836 = vmatpush1.msra.mxu0 0.0
    %1837 = vmatprep.subr.mxu0 0.0
    %1838 = vmatpush1.msra.mxu0 0.0
    %1839 = vmatprep.subr.mxu0 0.0
    %1840 = vmatpush1.msra.mxu0 0.0
    %1841 = vmatprep.subr.mxu0 0.0
    %1842 = vmatpush1.msra.mxu0 0.0
    %1843 = vmatprep.subr.mxu0 0.0
    %1844 = vmatpush1.msra.mxu0 0.0
    %1845 = vmatprep.subr.mxu0 0.0
    %1846 = vmatpush1.msra.mxu0 0.0
    %1847 = vmatprep.subr.mxu0 0.0
    %1848 = vmatpush1.msra.mxu0 0.0
    %1849 = vmatprep.subr.mxu0 0.0
    %1850 = vmatpush1.msra.mxu0 0.0
    %1851 = vmatprep.subr.mxu0 0.0
    %1852 = vmatpush1.msra.mxu0 0.0
    %1853 = vmatprep.subr.mxu0 0.0
    %1854 = vmatpush1.msra.mxu0 0.0
    %1855 = vmatprep.subr.mxu0 0.0
    %1856 = vmatpush1.msra.mxu0 0.0
    %1857 = vmatprep.subr.mxu0 0.0
    %1858 = vmatpush1.msra.mxu0 0.0
    %1859 = vmatprep.subr.mxu0 0.0
    %1860 = vmatpush1.msra.mxu0 0.0
    %1861 = vmatprep.subr.mxu0 0.0
    %1862 = vmatpush1.msra.mxu0 0.0
    %1863 = vmatprep.subr.mxu0 0.0
    %1864 = vmatpush1.msra.mxu0 0.0
    %1865 = vmatprep.subr.mxu0 0.0
    %1866 = vmatpush1.msra.mxu0 0.0
    %1867 = vmatprep.subr.mxu0 0.0
    %1868 = vmatpush1.msra.mxu0 0.0
    %1869 = vmatprep.mubr.f32.mxu0 0.0
    %1870 = vmatmul.mubr.f32.gmra.mrb[0].mxu0 %v1663
    %v1871 = vpop.f32.mrb[0].mxu0
    %v1872 = vadd.f32 %v441, %v1871
    %v1873 = vpop.f32.mrb[0].mxu0
    %1874 = vdwg.mxu0
    %v1876 = vrot.slane %v1732, 3
    %v1878 = vadd.f32 %v254, %v1876
    %v1879 = vxor.u32 %v1878, 2147483648
    %v1880 = vmul.f32 %v1879, 1.442695
    %v1881 = vpow.pop %v1880
    %v1882 = vadd.f32 %v1881, 1.0
    %v1883 = vrcp.pop %v1882
    %v1884 = vmul.f32 1.0, %v1883
    %v1886 = vrot.slane %v1802, 3
    %v1888 = vadd.f32 %v344, %v1886
    %v1889 = vxor.u32 %v1888, 2147483648
    %v1890 = vmul.f32 %v1889, 1.442695
    %v1891 = vpow.pop %v1890
    %v1892 = vadd.f32 %v1891, 1.0
    %v1893 = vrcp.pop %v1892
    %v1894 = vmul.f32 1.0, %v1893
    %v1896 = vrot.slane %v1872, 3
    %v1898 = vmul.f32 %v1884, %v1896
    %v1899 = vadd.f32 %v423, %v1898
    %v1900 = vtanh.pop %v1899
    %v1901 = vsub.f32 1.0, %v1894
    %v1902 = vmul.f32 %v1901, %v1900
    %v1903 = vrot.slane %v1660, 7
    %v1905 = vmul.f32 %v1894, %v1903
    %v1906 = vadd.f32 %v1902, %v1905
    %v1908 = vrot.slane %v1906, 5
    %v1909 = vsel %vm443, %v1908, 0
    %1911 = vmatprep.subr.mxu0 0.0
    %1912 = vmatpush1.msra.mxu0 %v426
    %1913 = vmatprep.subr.mxu0 0.0
    %1914 = vmatpush1.msra.mxu0 %v427
    %1915 = vmatprep.subr.mxu0 0.0
    %1916 = vmatpush1.msra.mxu0 %v428
    %1917 = vmatprep.subr.mxu0 0.0
    %1918 = vmatpush1.msra.mxu0 %v429
    %1919 = vmatprep.subr.mxu0 0.0
    %1920 = vmatpush1.msra.mxu0 0.0
    %1921 = vmatprep.subr.mxu0 0.0
    %1922 = vmatpush1.msra.mxu0 0.0
    %1923 = vmatprep.subr.mxu0 0.0
    %1924 = vmatpush1.msra.mxu0 0.0
    %1925 = vmatprep.subr.mxu0 0.0
    %1926 = vmatpush1.msra.mxu0 0.0
    %1927 = vmatprep.subr.mxu0 0.0
    %1928 = vmatpush1.msra.mxu0 0.0
    %1929 = vmatprep.subr.mxu0 0.0
    %1930 = vmatpush1.msra.mxu0 0.0
    %1931 = vmatprep.subr.mxu0 0.0
    %1932 = vmatpush1.msra.mxu0 0.0
    %1933 = vmatprep.subr.mxu0 0.0
    %1934 = vmatpush1.msra.mxu0 0.0
    %1935 = vmatprep.subr.mxu0 0.0
    %1936 = vmatpush1.msra.mxu0 0.0
    %1937 = vmatprep.subr.mxu0 0.0
    %1938 = vmatpush1.msra.mxu0 0.0
    %1939 = vmatprep.subr.mxu0 0.0
    %1940 = vmatpush1.msra.mxu0 0.0
    %1941 = vmatprep.subr.mxu0 0.0
    %1942 = vmatpush1.msra.mxu0 0.0
    %1943 = vmatprep.subr.mxu0 0.0
    %1944 = vmatpush1.msra.mxu0 0.0
    %1945 = vmatprep.subr.mxu0 0.0
    %1946 = vmatpush1.msra.mxu0 0.0
    %1947 = vmatprep.subr.mxu0 0.0
    %1948 = vmatpush1.msra.mxu0 0.0
    %1949 = vmatprep.subr.mxu0 0.0
    %1950 = vmatpush1.msra.mxu0 0.0
    %1951 = vmatprep.subr.mxu0 0.0
    %1952 = vmatpush1.msra.mxu0 0.0
    %1953 = vmatprep.subr.mxu0 0.0
    %1954 = vmatpush1.msra.mxu0 0.0
    %1955 = vmatprep.subr.mxu0 0.0
    %1956 = vmatpush1.msra.mxu0 0.0
    %1957 = vmatprep.subr.mxu0 0.0
    %1958 = vmatpush1.msra.mxu0 0.0
    %1959 = vmatprep.subr.mxu0 0.0
    %1960 = vmatpush1.msra.mxu0 0.0
    %1961 = vmatprep.subr.mxu0 0.0
    %1962 = vmatpush1.msra.mxu0 0.0
    %1963 = vmatprep.subr.mxu0 0.0
    %1964 = vmatpush1.msra.mxu0 0.0
    %1965 = vmatprep.subr.mxu0 0.0
    %1966 = vmatpush1.msra.mxu0 0.0
    %1967 = vmatprep.subr.mxu0 0.0
    %1968 = vmatpush1.msra.mxu0 0.0
    %1969 = vmatprep.subr.mxu0 0.0
    %1970 = vmatpush1.msra.mxu0 0.0
    %1971 = vmatprep.subr.mxu0 0.0
    %1972 = vmatpush1.msra.mxu0 0.0
    %1973 = vmatprep.subr.mxu0 0.0
    %1974 = vmatpush1.msra.mxu0 0.0
    %1975 = vmatprep.mubr.f32.mxu0 0.0
    %1976 = vmatmul.mubr.f32.gmra.mrb[0].mxu0 %v1909
    %v1977 = vpop.f32.mrb[0].mxu0
    %v1978 = vadd.f32 0.0, %v1977
    %v1979 = vpop.f32.mrb[0].mxu0
    %1980 = vdwg.mxu0
    %1981 = vmatprep.subr.mxu0 0.0
    %1982 = vmatpush1.msra.mxu0 %v431
    %1983 = vmatprep.subr.mxu0 0.0
    %1984 = vmatpush1.msra.mxu0 %v432
    %1985 = vmatprep.subr.mxu0 0.0
    %1986 = vmatpush1.msra.mxu0 %v433
    %1987 = vmatprep.subr.mxu0 0.0
    %1988 = vmatpush1.msra.mxu0 %v434
    %1989 = vmatprep.subr.mxu0 0.0
    %1990 = vmatpush1.msra.mxu0 0.0
    %1991 = vmatprep.subr.mxu0 0.0
    %1992 = vmatpush1.msra.mxu0 0.0
    %1993 = vmatprep.subr.mxu0 0.0
    %1994 = vmatpush1.msra.mxu0 0.0
    %1995 = vmatprep.subr.mxu0 0.0
    %1996 = vmatpush1.msra.mxu0 0.0
    %1997 = vmatprep.subr.mxu0 0.0
    %1998 = vmatpush1.msra.mxu0 0.0
    %1999 = vmatprep.subr.mxu0 0.0
    %2000 = vmatpush1.msra.mxu0 0.0
    %2001 = vmatprep.subr.mxu0 0.0
    %2002 = vmatpush1.msra.mxu0 0.0
    %2003 = vmatprep.subr.mxu0 0.0
    %2004 = vmatpush1.msra.mxu0 0.0
    %2005 = vmatprep.subr.mxu0 0.0
    %2006 = vmatpush1.msra.mxu0 0.0
    %2007 = vmatprep.subr.mxu0 0.0
    %2008 = vmatpush1.msra.mxu0 0.0
    %2009 = vmatprep.subr.mxu0 0.0
    %2010 = vmatpush1.msra.mxu0 0.0
    %2011 = vmatprep.subr.mxu0 0.0
    %2012 = vmatpush1.msra.mxu0 0.0
    %2013 = vmatprep.subr.mxu0 0.0
    %2014 = vmatpush1.msra.mxu0 0.0
    %2015 = vmatprep.subr.mxu0 0.0
    %2016 = vmatpush1.msra.mxu0 0.0
    %2017 = vmatprep.subr.mxu0 0.0
    %2018 = vmatpush1.msra.mxu0 0.0
    %2019 = vmatprep.subr.mxu0 0.0
    %2020 = vmatpush1.msra.mxu0 0.0
    %2021 = vmatprep.subr.mxu0 0.0
    %2022 = vmatpush1.msra.mxu0 0.0
    %2023 = vmatprep.subr.mxu0 0.0
    %2024 = vmatpush1.msra.mxu0 0.0
    %2025 = vmatprep.subr.mxu0 0.0
    %2026 = vmatpush1.msra.mxu0 0.0
    %2027 = vmatprep.subr.mxu0 0.0
    %2028 = vmatpush1.msra.mxu0 0.0
    %2029 = vmatprep.subr.mxu0 0.0
    %2030 = vmatpush1.msra.mxu0 0.0
    %2031 = vmatprep.subr.mxu0 0.0
    %2032 = vmatpush1.msra.mxu0 0.0
    %2033 = vmatprep.subr.mxu0 0.0
    %2034 = vmatpush1.msra.mxu0 0.0
    %2035 = vmatprep.subr.mxu0 0.0
    %2036 = vmatpush1.msra.mxu0 0.0
    %2037 = vmatprep.subr.mxu0 0.0
    %2038 = vmatpush1.msra.mxu0 0.0
    %2039 = vmatprep.subr.mxu0 0.0
    %2040 = vmatpush1.msra.mxu0 0.0
    %2041 = vmatprep.subr.mxu0 0.0
    %2042 = vmatpush1.msra.mxu0 0.0
    %2043 = vmatprep.subr.mxu0 0.0
    %2044 = vmatpush1.msra.mxu0 0.0
    %2045 = vmatprep.mubr.f32.mxu0 0.0
    %2046 = vmatmul.mubr.f32.gmra.mrb[0].mxu0 %v1909
    %v2047 = vpop.f32.mrb[0].mxu0
    %v2048 = vadd.f32 0.0, %v2047
    %v2049 = vpop.f32.mrb[0].mxu0
    %2050 = vdwg.mxu0
    %2051 = vmatprep.subr.mxu0 0.0
    %2052 = vmatpush1.msra.mxu0 %v436
    %2053 = vmatprep.subr.mxu0 0.0
    %2054 = vmatpush1.msra.mxu0 %v437
    %2055 = vmatprep.subr.mxu0 0.0
    %2056 = vmatpush1.msra.mxu0 %v438
    %2057 = vmatprep.subr.mxu0 0.0
    %2058 = vmatpush1.msra.mxu0 %v439
    %2059 = vmatprep.subr.mxu0 0.0
    %2060 = vmatpush1.msra.mxu0 0.0
    %2061 = vmatprep.subr.mxu0 0.0
    %2062 = vmatpush1.msra.mxu0 0.0
    %2063 = vmatprep.subr.mxu0 0.0
    %2064 = vmatpush1.msra.mxu0 0.0
    %2065 = vmatprep.subr.mxu0 0.0
    %2066 = vmatpush1.msra.mxu0 0.0
    %2067 = vmatprep.subr.mxu0 0.0
    %2068 = vmatpush1.msra.mxu0 0.0
    %2069 = vmatprep.subr.mxu0 0.0
    %2070 = vmatpush1.msra.mxu0 0.0
    %2071 = vmatprep.subr.mxu0 0.0
    %2072 = vmatpush1.msra.mxu0 0.0
    %2073 = vmatprep.subr.mxu0 0.0
    %2074 = vmatpush1.msra.mxu0 0.0
    %2075 = vmatprep.subr.mxu0 0.0
    %2076 = vmatpush1.msra.mxu0 0.0
    %2077 = vmatprep.subr.mxu0 0.0
    %2078 = vmatpush1.msra.mxu0 0.0
    %2079 = vmatprep.subr.mxu0 0.0
    %2080 = vmatpush1.msra.mxu0 0.0
    %2081 = vmatprep.subr.mxu0 0.0
    %2082 = vmatpush1.msra.mxu0 0.0
    %2083 = vmatprep.subr.mxu0 0.0
    %2084 = vmatpush1.msra.mxu0 0.0
    %2085 = vmatprep.subr.mxu0 0.0
    %2086 = vmatpush1.msra.mxu0 0.0
    %2087 = vmatprep.subr.mxu0 0.0
    %2088 = vmatpush1.msra.mxu0 0.0
    %2089 = vmatprep.subr.mxu0 0.0
    %2090 = vmatpush1.msra.mxu0 0.0
    %2091 = vmatprep.subr.mxu0 0.0
    %2092 = vmatpush1.msra.mxu0 0.0
    %2093 = vmatprep.subr.mxu0 0.0
    %2094 = vmatpush1.msra.mxu0 0.0
    %2095 = vmatprep.subr.mxu0 0.0
    %2096 = vmatpush1.msra.mxu0 0.0
    %2097 = vmatprep.subr.mxu0 0.0
    %2098 = vmatpush1.msra.mxu0 0.0
    %2099 = vmatprep.subr.mxu0 0.0
    %2100 = vmatpush1.msra.mxu0 0.0
    %2101 = vmatprep.subr.mxu0 0.0
    %2102 = vmatpush1.msra.mxu0 0.0
    %2103 = vmatprep.subr.mxu0 0.0
    %2104 = vmatpush1.msra.mxu0 0.0
    %2105 = vmatprep.subr.mxu0 0.0
    %2106 = vmatpush1.msra.mxu0 0.0
    %2107 = vmatprep.subr.mxu0 0.0
    %2108 = vmatpush1.msra.mxu0 0.0
    %2109 = vmatprep.subr.mxu0 0.0
    %2110 = vmatpush1.msra.mxu0 0.0
    %2111 = vmatprep.subr.mxu0 0.0
    %2112 = vmatpush1.msra.mxu0 0.0
    %2113 = vmatprep.subr.mxu0 0.0
    %2114 = vmatpush1.msra.mxu0 0.0
    %2115 = vmatprep.mubr.f32.mxu0 0.0
    %2116 = vmatmul.mubr.f32.gmra.mrb[0].mxu0 %v1909
    %v2117 = vpop.f32.mrb[0].mxu0
    %v2118 = vadd.f32 %v441, %v2117
    %v2119 = vpop.f32.mrb[0].mxu0
    %2120 = vdwg.mxu0
    %v2122 = vrot.slane %v1978, 2
    %v2124 = vadd.f32 %v254, %v2122
    %v2125 = vxor.u32 %v2124, 2147483648
    %v2126 = vmul.f32 %v2125, 1.442695
    %v2127 = vpow.pop %v2126
    %v2128 = vadd.f32 %v2127, 1.0
    %v2129 = vrcp.pop %v2128
    %v2130 = vmul.f32 1.0, %v2129
    %v2132 = vrot.slane %v2048, 2
    %v2134 = vadd.f32 %v344, %v2132
    %v2135 = vxor.u32 %v2134, 2147483648
    %v2136 = vmul.f32 %v2135, 1.442695
    %v2137 = vpow.pop %v2136
    %v2138 = vadd.f32 %v2137, 1.0
    %v2139 = vrcp.pop %v2138
    %v2140 = vmul.f32 1.0, %v2139
    %v2142 = vrot.slane %v2118, 2
    %v2144 = vmul.f32 %v2130, %v2142
    %v2145 = vadd.f32 %v423, %v2144
    %v2146 = vtanh.pop %v2145
    %v2147 = vsub.f32 1.0, %v2140
    %v2148 = vmul.f32 %v2147, %v2146
    %v2149 = vrot.slane %v1906, 7
    %v2151 = vmul.f32 %v2140, %v2149
    %v2152 = vadd.f32 %v2148, %v2151
    %v2154 = vrot.slane %v2152, 6
    %v2155 = vsel %vm443, %v2154, 0
    %2157 = vmatprep.subr.mxu0 0.0
    %2158 = vmatpush1.msra.mxu0 %v426
    %2159 = vmatprep.subr.mxu0 0.0
    %2160 = vmatpush1.msra.mxu0 %v427
    %2161 = vmatprep.subr.mxu0 0.0
    %2162 = vmatpush1.msra.mxu0 %v428
    %2163 = vmatprep.subr.mxu0 0.0
    %2164 = vmatpush1.msra.mxu0 %v429
    %2165 = vmatprep.subr.mxu0 0.0
    %2166 = vmatpush1.msra.mxu0 0.0
    %2167 = vmatprep.subr.mxu0 0.0
    %2168 = vmatpush1.msra.mxu0 0.0
    %2169 = vmatprep.subr.mxu0 0.0
    %2170 = vmatpush1.msra.mxu0 0.0
    %2171 = vmatprep.subr.mxu0 0.0
    %2172 = vmatpush1.msra.mxu0 0.0
    %2173 = vmatprep.subr.mxu0 0.0
    %2174 = vmatpush1.msra.mxu0 0.0
    %2175 = vmatprep.subr.mxu0 0.0
    %2176 = vmatpush1.msra.mxu0 0.0
    %2177 = vmatprep.subr.mxu0 0.0
    %2178 = vmatpush1.msra.mxu0 0.0
    %2179 = vmatprep.subr.mxu0 0.0
    %2180 = vmatpush1.msra.mxu0 0.0
    %2181 = vmatprep.subr.mxu0 0.0
    %2182 = vmatpush1.msra.mxu0 0.0
    %2183 = vmatprep.subr.mxu0 0.0
    %2184 = vmatpush1.msra.mxu0 0.0
    %2185 = vmatprep.subr.mxu0 0.0
    %2186 = vmatpush1.msra.mxu0 0.0
    %2187 = vmatprep.subr.mxu0 0.0
    %2188 = vmatpush1.msra.mxu0 0.0
    %2189 = vmatprep.subr.mxu0 0.0
    %2190 = vmatpush1.msra.mxu0 0.0
    %2191 = vmatprep.subr.mxu0 0.0
    %2192 = vmatpush1.msra.mxu0 0.0
    %2193 = vmatprep.subr.mxu0 0.0
    %2194 = vmatpush1.msra.mxu0 0.0
    %2195 = vmatprep.subr.mxu0 0.0
    %2196 = vmatpush1.msra.mxu0 0.0
    %2197 = vmatprep.subr.mxu0 0.0
    %2198 = vmatpush1.msra.mxu0 0.0
    %2199 = vmatprep.subr.mxu0 0.0
    %2200 = vmatpush1.msra.mxu0 0.0
    %2201 = vmatprep.subr.mxu0 0.0
    %2202 = vmatpush1.msra.mxu0 0.0
    %2203 = vmatprep.subr.mxu0 0.0
    %2204 = vmatpush1.msra.mxu0 0.0
    %2205 = vmatprep.subr.mxu0 0.0
    %2206 = vmatpush1.msra.mxu0 0.0
    %2207 = vmatprep.subr.mxu0 0.0
    %2208 = vmatpush1.msra.mxu0 0.0
    %2209 = vmatprep.subr.mxu0 0.0
    %2210 = vmatpush1.msra.mxu0 0.0
    %2211 = vmatprep.subr.mxu0 0.0
    %2212 = vmatpush1.msra.mxu0 0.0
    %2213 = vmatprep.subr.mxu0 0.0
    %2214 = vmatpush1.msra.mxu0 0.0
    %2215 = vmatprep.subr.mxu0 0.0
    %2216 = vmatpush1.msra.mxu0 0.0
    %2217 = vmatprep.subr.mxu0 0.0
    %2218 = vmatpush1.msra.mxu0 0.0
    %2219 = vmatprep.subr.mxu0 0.0
    %2220 = vmatpush1.msra.mxu0 0.0
    %2221 = vmatprep.mubr.f32.mxu0 0.0
    %2222 = vmatmul.mubr.f32.gmra.mrb[0].mxu0 %v2155
    %v2223 = vpop.f32.mrb[0].mxu0
    %v2224 = vadd.f32 0.0, %v2223
    %v2225 = vpop.f32.mrb[0].mxu0
    %2226 = vdwg.mxu0
    %2227 = vmatprep.subr.mxu0 0.0
    %2228 = vmatpush1.msra.mxu0 %v431
    %2229 = vmatprep.subr.mxu0 0.0
    %2230 = vmatpush1.msra.mxu0 %v432
    %2231 = vmatprep.subr.mxu0 0.0
    %2232 = vmatpush1.msra.mxu0 %v433
    %2233 = vmatprep.subr.mxu0 0.0
    %2234 = vmatpush1.msra.mxu0 %v434
    %2235 = vmatprep.subr.mxu0 0.0
    %2236 = vmatpush1.msra.mxu0 0.0
    %2237 = vmatprep.subr.mxu0 0.0
    %2238 = vmatpush1.msra.mxu0 0.0
    %2239 = vmatprep.subr.mxu0 0.0
    %2240 = vmatpush1.msra.mxu0 0.0
    %2241 = vmatprep.subr.mxu0 0.0
    %2242 = vmatpush1.msra.mxu0 0.0
    %2243 = vmatprep.subr.mxu0 0.0
    %2244 = vmatpush1.msra.mxu0 0.0
    %2245 = vmatprep.subr.mxu0 0.0
    %2246 = vmatpush1.msra.mxu0 0.0
    %2247 = vmatprep.subr.mxu0 0.0
    %2248 = vmatpush1.msra.mxu0 0.0
    %2249 = vmatprep.subr.mxu0 0.0
    %2250 = vmatpush1.msra.mxu0 0.0
    %2251 = vmatprep.subr.mxu0 0.0
    %2252 = vmatpush1.msra.mxu0 0.0
    %2253 = vmatprep.subr.mxu0 0.0
    %2254 = vmatpush1.msra.mxu0 0.0
    %2255 = vmatprep.subr.mxu0 0.0
    %2256 = vmatpush1.msra.mxu0 0.0
    %2257 = vmatprep.subr.mxu0 0.0
    %2258 = vmatpush1.msra.mxu0 0.0
    %2259 = vmatprep.subr.mxu0 0.0
    %2260 = vmatpush1.msra.mxu0 0.0
    %2261 = vmatprep.subr.mxu0 0.0
    %2262 = vmatpush1.msra.mxu0 0.0
    %2263 = vmatprep.subr.mxu0 0.0
    %2264 = vmatpush1.msra.mxu0 0.0
    %2265 = vmatprep.subr.mxu0 0.0
    %2266 = vmatpush1.msra.mxu0 0.0
    %2267 = vmatprep.subr.mxu0 0.0
    %2268 = vmatpush1.msra.mxu0 0.0
    %2269 = vmatprep.subr.mxu0 0.0
    %2270 = vmatpush1.msra.mxu0 0.0
    %2271 = vmatprep.subr.mxu0 0.0
    %2272 = vmatpush1.msra.mxu0 0.0
    %2273 = vmatprep.subr.mxu0 0.0
    %2274 = vmatpush1.msra.mxu0 0.0
    %2275 = vmatprep.subr.mxu0 0.0
    %2276 = vmatpush1.msra.mxu0 0.0
    %2277 = vmatprep.subr.mxu0 0.0
    %2278 = vmatpush1.msra.mxu0 0.0
    %2279 = vmatprep.subr.mxu0 0.0
    %2280 = vmatpush1.msra.mxu0 0.0
    %2281 = vmatprep.subr.mxu0 0.0
    %2282 = vmatpush1.msra.mxu0 0.0
    %2283 = vmatprep.subr.mxu0 0.0
    %2284 = vmatpush1.msra.mxu0 0.0
    %2285 = vmatprep.subr.mxu0 0.0
    %2286 = vmatpush1.msra.mxu0 0.0
    %2287 = vmatprep.subr.mxu0 0.0
    %2288 = vmatpush1.msra.mxu0 0.0
    %2289 = vmatprep.subr.mxu0 0.0
    %2290 = vmatpush1.msra.mxu0 0.0
    %2291 = vmatprep.mubr.f32.mxu0 0.0
    %2292 = vmatmul.mubr.f32.gmra.mrb[0].mxu0 %v2155
    %v2293 = vpop.f32.mrb[0].mxu0
    %v2294 = vadd.f32 0.0, %v2293
    %v2295 = vpop.f32.mrb[0].mxu0
    %2296 = vdwg.mxu0
    %2297 = vmatprep.subr.mxu0 0.0
    %2298 = vmatpush1.msra.mxu0 %v436
    %2299 = vmatprep.subr.mxu0 0.0
    %2300 = vmatpush1.msra.mxu0 %v437
    %2301 = vmatprep.subr.mxu0 0.0
    %2302 = vmatpush1.msra.mxu0 %v438
    %2303 = vmatprep.subr.mxu0 0.0
    %2304 = vmatpush1.msra.mxu0 %v439
    %2305 = vmatprep.subr.mxu0 0.0
    %2306 = vmatpush1.msra.mxu0 0.0
    %2307 = vmatprep.subr.mxu0 0.0
    %2308 = vmatpush1.msra.mxu0 0.0
    %2309 = vmatprep.subr.mxu0 0.0
    %2310 = vmatpush1.msra.mxu0 0.0
    %2311 = vmatprep.subr.mxu0 0.0
    %2312 = vmatpush1.msra.mxu0 0.0
    %2313 = vmatprep.subr.mxu0 0.0
    %2314 = vmatpush1.msra.mxu0 0.0
    %2315 = vmatprep.subr.mxu0 0.0
    %2316 = vmatpush1.msra.mxu0 0.0
    %2317 = vmatprep.subr.mxu0 0.0
    %2318 = vmatpush1.msra.mxu0 0.0
    %2319 = vmatprep.subr.mxu0 0.0
    %2320 = vmatpush1.msra.mxu0 0.0
    %2321 = vmatprep.subr.mxu0 0.0
    %2322 = vmatpush1.msra.mxu0 0.0
    %2323 = vmatprep.subr.mxu0 0.0
    %2324 = vmatpush1.msra.mxu0 0.0
    %2325 = vmatprep.subr.mxu0 0.0
    %2326 = vmatpush1.msra.mxu0 0.0
    %2327 = vmatprep.subr.mxu0 0.0
    %2328 = vmatpush1.msra.mxu0 0.0
    %2329 = vmatprep.subr.mxu0 0.0
    %2330 = vmatpush1.msra.mxu0 0.0
    %2331 = vmatprep.subr.mxu0 0.0
    %2332 = vmatpush1.msra.mxu0 0.0
    %2333 = vmatprep.subr.mxu0 0.0
    %2334 = vmatpush1.msra.mxu0 0.0
    %2335 = vmatprep.subr.mxu0 0.0
    %2336 = vmatpush1.msra.mxu0 0.0
    %2337 = vmatprep.subr.mxu0 0.0
    %2338 = vmatpush1.msra.mxu0 0.0
    %2339 = vmatprep.subr.mxu0 0.0
    %2340 = vmatpush1.msra.mxu0 0.0
    %2341 = vmatprep.subr.mxu0 0.0
    %2342 = vmatpush1.msra.mxu0 0.0
    %2343 = vmatprep.subr.mxu0 0.0
    %2344 = vmatpush1.msra.mxu0 0.0
    %2345 = vmatprep.subr.mxu0 0.0
    %2346 = vmatpush1.msra.mxu0 0.0
    %2347 = vmatprep.subr.mxu0 0.0
    %2348 = vmatpush1.msra.mxu0 0.0
    %2349 = vmatprep.subr.mxu0 0.0
    %2350 = vmatpush1.msra.mxu0 0.0
    %2351 = vmatprep.subr.mxu0 0.0
    %2352 = vmatpush1.msra.mxu0 0.0
    %2353 = vmatprep.subr.mxu0 0.0
    %2354 = vmatpush1.msra.mxu0 0.0
    %2355 = vmatprep.subr.mxu0 0.0
    %2356 = vmatpush1.msra.mxu0 0.0
    %2357 = vmatprep.subr.mxu0 0.0
    %2358 = vmatpush1.msra.mxu0 0.0
    %2359 = vmatprep.subr.mxu0 0.0
    %2360 = vmatpush1.msra.mxu0 0.0
    %2361 = vmatprep.mubr.f32.mxu0 0.0
    %2362 = vmatmul.mubr.f32.gmra.mrb[0].mxu0 %v2155
    %v2363 = vpop.f32.mrb[0].mxu0
    %v2364 = vadd.f32 %v441, %v2363
    %v2365 = vpop.f32.mrb[0].mxu0
    %2366 = vdwg.mxu0
    %v2368 = vrot.slane %v2224, 1
    %v2370 = vadd.f32 %v254, %v2368
    %v2371 = vxor.u32 %v2370, 2147483648
    %v2372 = vmul.f32 %v2371, 1.442695
    %v2373 = vpow.pop %v2372
    %v2374 = vadd.f32 %v2373, 1.0
    %v2375 = vrcp.pop %v2374
    %v2376 = vmul.f32 1.0, %v2375
    %v2378 = vrot.slane %v2294, 1
    %v2380 = vadd.f32 %v344, %v2378
    %v2381 = vxor.u32 %v2380, 2147483648
    %v2382 = vmul.f32 %v2381, 1.442695
    %v2383 = vpow.pop %v2382
    %v2384 = vadd.f32 %v2383, 1.0
    %v2385 = vrcp.pop %v2384
    %v2386 = vmul.f32 1.0, %v2385
    %v2388 = vrot.slane %v2364, 1
    %v2390 = vmul.f32 %v2376, %v2388
    %v2391 = vadd.f32 %v423, %v2390
    %v2392 = vtanh.pop %v2391
    %v2393 = vsub.f32 1.0, %v2386
    %v2394 = vmul.f32 %v2393, %v2392
    %v2395 = vrot.slane %v2152, 7
    %v2397 = vmul.f32 %v2386, %v2395
    %v2398 = vadd.f32 %v2394, %v2397
    %vm2399 = vcmask 1040384
    %v2400 = vsel %vm2399, %v677, %v922
    %vm2401 = vcmask 1041408
    %v2402 = vsel %vm2401, %v2400, %v1168
    %vm2403 = vcmask 1042432
    %v2404 = vsel %vm2403, %v2402, %v1414
    %vm2405 = vcmask 1043456
    %v2406 = vsel %vm2405, %v2404, %v1660
    %vm2407 = vcmask 1044480
    %v2408 = vsel %vm2407, %v2406, %v1906
    %vm2409 = vcmask 1045504
    %v2410 = vsel %vm2409, %v2408, %v2152
    %vm2411 = vcmask 1046528
    %v2412 = vsel %vm2411, %v2410, %v2398
    %v2413 = vld [vmem:[#allocation11] sm:$0xff]
    %v2414 = vld [vmem:[#allocation11 + $0x8] sm:$0xff]
    %v2415 = vld [vmem:[#allocation11 + $0x10] sm:$0xff]
    %v2416 = vld [vmem:[#allocation11 + $0x18] sm:$0xff]
    %v2417 = vld [vmem:[%s8] sm:$0x1]
    %v2419 = vlaneseq
    %v2420 = vshrl.u32 %v2419, 7
    %v2421 = vsub.s32 0, %v2420
    %v2422 = vrot.slane %v2417, %v2421
    %v2425 = vsel %vm443, %v2412, 0
    %2427 = vmatprep.subr.mxu0 0.0
    %2428 = vmatpush1.msra.mxu0 %v2413
    %2429 = vmatprep.subr.mxu0 0.0
    %2430 = vmatpush1.msra.mxu0 %v2414
    %2431 = vmatprep.subr.mxu0 0.0
    %2432 = vmatpush1.msra.mxu0 %v2415
    %2433 = vmatprep.subr.mxu0 0.0
    %2434 = vmatpush1.msra.mxu0 %v2416
    %2435 = vmatprep.subr.mxu0 0.0
    %2436 = vmatpush1.msra.mxu0 0.0
    %2437 = vmatprep.subr.mxu0 0.0
    %2438 = vmatpush1.msra.mxu0 0.0
    %2439 = vmatprep.subr.mxu0 0.0
    %2440 = vmatpush1.msra.mxu0 0.0
    %2441 = vmatprep.subr.mxu0 0.0
    %2442 = vmatpush1.msra.mxu0 0.0
    %2443 = vmatprep.subr.mxu0 0.0
    %2444 = vmatpush1.msra.mxu0 0.0
    %2445 = vmatprep.subr.mxu0 0.0
    %2446 = vmatpush1.msra.mxu0 0.0
    %2447 = vmatprep.subr.mxu0 0.0
    %2448 = vmatpush1.msra.mxu0 0.0
    %2449 = vmatprep.subr.mxu0 0.0
    %2450 = vmatpush1.msra.mxu0 0.0
    %2451 = vmatprep.subr.mxu0 0.0
    %2452 = vmatpush1.msra.mxu0 0.0
    %2453 = vmatprep.subr.mxu0 0.0
    %2454 = vmatpush1.msra.mxu0 0.0
    %2455 = vmatprep.subr.mxu0 0.0
    %2456 = vmatpush1.msra.mxu0 0.0
    %2457 = vmatprep.subr.mxu0 0.0
    %2458 = vmatpush1.msra.mxu0 0.0
    %2459 = vmatprep.subr.mxu0 0.0
    %2460 = vmatpush1.msra.mxu0 0.0
    %2461 = vmatprep.subr.mxu0 0.0
    %2462 = vmatpush1.msra.mxu0 0.0
    %2463 = vmatprep.subr.mxu0 0.0
    %2464 = vmatpush1.msra.mxu0 0.0
    %2465 = vmatprep.subr.mxu0 0.0
    %2466 = vmatpush1.msra.mxu0 0.0
    %2467 = vmatprep.subr.mxu0 0.0
    %2468 = vmatpush1.msra.mxu0 0.0
    %2469 = vmatprep.subr.mxu0 0.0
    %2470 = vmatpush1.msra.mxu0 0.0
    %2471 = vmatprep.subr.mxu0 0.0
    %2472 = vmatpush1.msra.mxu0 0.0
    %2473 = vmatprep.subr.mxu0 0.0
    %2474 = vmatpush1.msra.mxu0 0.0
    %2475 = vmatprep.subr.mxu0 0.0
    %2476 = vmatpush1.msra.mxu0 0.0
    %2477 = vmatprep.subr.mxu0 0.0
    %2478 = vmatpush1.msra.mxu0 0.0
    %2479 = vmatprep.subr.mxu0 0.0
    %2480 = vmatpush1.msra.mxu0 0.0
    %2481 = vmatprep.subr.mxu0 0.0
    %2482 = vmatpush1.msra.mxu0 0.0
    %2483 = vmatprep.subr.mxu0 0.0
    %2484 = vmatpush1.msra.mxu0 0.0
    %2485 = vmatprep.subr.mxu0 0.0
    %2486 = vmatpush1.msra.mxu0 0.0
    %2487 = vmatprep.subr.mxu0 0.0
    %2488 = vmatpush1.msra.mxu0 0.0
    %2489 = vmatprep.subr.mxu0 0.0
    %2490 = vmatpush1.msra.mxu0 0.0
    %2491 = vmatprep.mubr.f32.mxu0 0.0
    %2492 = vmatmul.mubr.f32.gmra.mrb[0].mxu0 %v2425
    %v2493 = vpop.f32.mrb[0].mxu0
    %v2494 = vadd.f32 %v2422, %v2493
    %v2495 = vpop.f32.mrb[0].mxu0
    %2496 = vdwg.mxu0
    %v2497 = vld [vmem:[%s9] sm:$0x1]
    %v2499 = vlaneseq
    %v2500 = vshrl.u32 %v2499, 7
    %v2501 = vsub.s32 0, %v2500
    %v2502 = vrot.slane %v2497, %v2501
    %v2504 = vadd.f32 %v2494, %v2502
    %s2505 = scalar_lea.vmem [#allocation11], 32
    %v2506 = vld [vmem:[%s2505] sm:$0xff]
    %v2507 = vld [vmem:[%s2505 + $0x8] sm:$0xff]
    %v2508 = vld [vmem:[%s2505 + $0x10] sm:$0xff]
    %v2509 = vld [vmem:[%s2505 + $0x18] sm:$0xff]
    %s2510 = scalar_lea.vmem %s8, 1
    %v2511 = vld [vmem:[%s2510] sm:$0x1]
    %v2513 = vlaneseq
    %v2514 = vshrl.u32 %v2513, 7
    %v2515 = vsub.s32 0, %v2514
    %v2516 = vrot.slane %v2511, %v2515
    %2518 = vmatprep.subr.mxu0 0.0
    %2519 = vmatpush1.msra.mxu0 %v2506
    %2520 = vmatprep.subr.mxu0 0.0
    %2521 = vmatpush1.msra.mxu0 %v2507
    %2522 = vmatprep.subr.mxu0 0.0
    %2523 = vmatpush1.msra.mxu0 %v2508
    %2524 = vmatprep.subr.mxu0 0.0
    %2525 = vmatpush1.msra.mxu0 %v2509
    %2526 = vmatprep.subr.mxu0 0.0
    %2527 = vmatpush1.msra.mxu0 0.0
    %2528 = vmatprep.subr.mxu0 0.0
    %2529 = vmatpush1.msra.mxu0 0.0
    %2530 = vmatprep.subr.mxu0 0.0
    %2531 = vmatpush1.msra.mxu0 0.0
    %2532 = vmatprep.subr.mxu0 0.0
    %2533 = vmatpush1.msra.mxu0 0.0
    %2534 = vmatprep.subr.mxu0 0.0
    %2535 = vmatpush1.msra.mxu0 0.0
    %2536 = vmatprep.subr.mxu0 0.0
    %2537 = vmatpush1.msra.mxu0 0.0
    %2538 = vmatprep.subr.mxu0 0.0
    %2539 = vmatpush1.msra.mxu0 0.0
    %2540 = vmatprep.subr.mxu0 0.0
    %2541 = vmatpush1.msra.mxu0 0.0
    %2542 = vmatprep.subr.mxu0 0.0
    %2543 = vmatpush1.msra.mxu0 0.0
    %2544 = vmatprep.subr.mxu0 0.0
    %2545 = vmatpush1.msra.mxu0 0.0
    %2546 = vmatprep.subr.mxu0 0.0
    %2547 = vmatpush1.msra.mxu0 0.0
    %2548 = vmatprep.subr.mxu0 0.0
    %2549 = vmatpush1.msra.mxu0 0.0
    %2550 = vmatprep.subr.mxu0 0.0
    %2551 = vmatpush1.msra.mxu0 0.0
    %2552 = vmatprep.subr.mxu0 0.0
    %2553 = vmatpush1.msra.mxu0 0.0
    %2554 = vmatprep.subr.mxu0 0.0
    %2555 = vmatpush1.msra.mxu0 0.0
    %2556 = vmatprep.subr.mxu0 0.0
    %2557 = vmatpush1.msra.mxu0 0.0
    %2558 = vmatprep.subr.mxu0 0.0
    %2559 = vmatpush1.msra.mxu0 0.0
    %2560 = vmatprep.subr.mxu0 0.0
    %2561 = vmatpush1.msra.mxu0 0.0
    %2562 = vmatprep.subr.mxu0 0.0
    %2563 = vmatpush1.msra.mxu0 0.0
    %2564 = vmatprep.subr.mxu0 0.0
    %2565 = vmatpush1.msra.mxu0 0.0
    %2566 = vmatprep.subr.mxu0 0.0
    %2567 = vmatpush1.msra.mxu0 0.0
    %2568 = vmatprep.subr.mxu0 0.0
    %2569 = vmatpush1.msra.mxu0 0.0
    %2570 = vmatprep.subr.mxu0 0.0
    %2571 = vmatpush1.msra.mxu0 0.0
    %2572 = vmatprep.subr.mxu0 0.0
    %2573 = vmatpush1.msra.mxu0 0.0
    %2574 = vmatprep.subr.mxu0 0.0
    %2575 = vmatpush1.msra.mxu0 0.0
    %2576 = vmatprep.subr.mxu0 0.0
    %2577 = vmatpush1.msra.mxu0 0.0
    %2578 = vmatprep.subr.mxu0 0.0
    %2579 = vmatpush1.msra.mxu0 0.0
    %2580 = vmatprep.subr.mxu0 0.0
    %2581 = vmatpush1.msra.mxu0 0.0
    %2582 = vmatprep.mubr.f32.mxu0 0.0
    %2583 = vmatmul.mubr.f32.gmra.mrb[0].mxu0 %v2425
    %v2584 = vpop.f32.mrb[0].mxu0
    %v2585 = vadd.f32 %v2516, %v2584
    %v2586 = vpop.f32.mrb[0].mxu0
    %2587 = vdwg.mxu0
    %s2588 = scalar_lea.vmem %s9, 1
    %v2589 = vld [vmem:[%s2588] sm:$0x1]
    %v2591 = vlaneseq
    %v2592 = vshrl.u32 %v2591, 7
    %v2593 = vsub.s32 0, %v2592
    %v2594 = vrot.slane %v2589, %v2593
    %v2596 = vadd.f32 %v2585, %v2594
    %s2597 = scalar_lea.vmem [#allocation11], 64
    %v2598 = vld [vmem:[%s2597] sm:$0xff]
    %v2599 = vld [vmem:[%s2597 + $0x8] sm:$0xff]
    %v2600 = vld [vmem:[%s2597 + $0x10] sm:$0xff]
    %v2601 = vld [vmem:[%s2597 + $0x18] sm:$0xff]
    %s2602 = scalar_lea.vmem %s8, 2
    %v2603 = vld [vmem:[%s2602] sm:$0x1]
    %v2605 = vlaneseq
    %v2606 = vshrl.u32 %v2605, 7
    %v2607 = vsub.s32 0, %v2606
    %v2608 = vrot.slane %v2603, %v2607
    %2610 = vmatprep.subr.mxu0 0.0
    %2611 = vmatpush1.msra.mxu0 %v2598
    %2612 = vmatprep.subr.mxu0 0.0
    %2613 = vmatpush1.msra.mxu0 %v2599
    %2614 = vmatprep.subr.mxu0 0.0
    %2615 = vmatpush1.msra.mxu0 %v2600
    %2616 = vmatprep.subr.mxu0 0.0
    %2617 = vmatpush1.msra.mxu0 %v2601
    %2618 = vmatprep.subr.mxu0 0.0
    %2619 = vmatpush1.msra.mxu0 0.0
    %2620 = vmatprep.subr.mxu0 0.0
    %2621 = vmatpush1.msra.mxu0 0.0
    %2622 = vmatprep.subr.mxu0 0.0
    %2623 = vmatpush1.msra.mxu0 0.0
    %2624 = vmatprep.subr.mxu0 0.0
    %2625 = vmatpush1.msra.mxu0 0.0
    %2626 = vmatprep.subr.mxu0 0.0
    %2627 = vmatpush1.msra.mxu0 0.0
    %2628 = vmatprep.subr.mxu0 0.0
    %2629 = vmatpush1.msra.mxu0 0.0
    %2630 = vmatprep.subr.mxu0 0.0
    %2631 = vmatpush1.msra.mxu0 0.0
    %2632 = vmatprep.subr.mxu0 0.0
    %2633 = vmatpush1.msra.mxu0 0.0
    %2634 = vmatprep.subr.mxu0 0.0
    %2635 = vmatpush1.msra.mxu0 0.0
    %2636 = vmatprep.subr.mxu0 0.0
    %2637 = vmatpush1.msra.mxu0 0.0
    %2638 = vmatprep.subr.mxu0 0.0
    %2639 = vmatpush1.msra.mxu0 0.0
    %2640 = vmatprep.subr.mxu0 0.0
    %2641 = vmatpush1.msra.mxu0 0.0
    %2642 = vmatprep.subr.mxu0 0.0
    %2643 = vmatpush1.msra.mxu0 0.0
    %2644 = vmatprep.subr.mxu0 0.0
    %2645 = vmatpush1.msra.mxu0 0.0
    %2646 = vmatprep.subr.mxu0 0.0
    %2647 = vmatpush1.msra.mxu0 0.0
    %2648 = vmatprep.subr.mxu0 0.0
    %2649 = vmatpush1.msra.mxu0 0.0
    %2650 = vmatprep.subr.mxu0 0.0
    %2651 = vmatpush1.msra.mxu0 0.0
    %2652 = vmatprep.subr.mxu0 0.0
    %2653 = vmatpush1.msra.mxu0 0.0
    %2654 = vmatprep.subr.mxu0 0.0
    %2655 = vmatpush1.msra.mxu0 0.0
    %2656 = vmatprep.subr.mxu0 0.0
    %2657 = vmatpush1.msra.mxu0 0.0
    %2658 = vmatprep.subr.mxu0 0.0
    %2659 = vmatpush1.msra.mxu0 0.0
    %2660 = vmatprep.subr.mxu0 0.0
    %2661 = vmatpush1.msra.mxu0 0.0
    %2662 = vmatprep.subr.mxu0 0.0
    %2663 = vmatpush1.msra.mxu0 0.0
    %2664 = vmatprep.subr.mxu0 0.0
    %2665 = vmatpush1.msra.mxu0 0.0
    %2666 = vmatprep.subr.mxu0 0.0
    %2667 = vmatpush1.msra.mxu0 0.0
    %2668 = vmatprep.subr.mxu0 0.0
    %2669 = vmatpush1.msra.mxu0 0.0
    %2670 = vmatprep.subr.mxu0 0.0
    %2671 = vmatpush1.msra.mxu0 0.0
    %2672 = vmatprep.subr.mxu0 0.0
    %2673 = vmatpush1.msra.mxu0 0.0
    %2674 = vmatprep.mubr.f32.mxu0 0.0
    %2675 = vmatmul.mubr.f32.gmra.mrb[0].mxu0 %v2425
    %v2676 = vpop.f32.mrb[0].mxu0
    %v2677 = vadd.f32 %v2608, %v2676
    %v2678 = vpop.f32.mrb[0].mxu0
    %2679 = vdwg.mxu0
    %v2680 = vld [vmem:[#allocation12] sm:$0xff]
    %v2681 = vld [vmem:[#allocation12 + $0x8] sm:$0xff]
    %v2682 = vld [vmem:[#allocation12 + $0x10] sm:$0xff]
    %v2683 = vld [vmem:[#allocation12 + $0x18] sm:$0xff]
    %s2684 = scalar_lea.vmem [#allocation12], 32
    %v2685 = vld [vmem:[%s2684] sm:$0xff]
    %v2686 = vld [vmem:[%s2684 + $0x8] sm:$0xff]
    %v2687 = vld [vmem:[%s2684 + $0x10] sm:$0xff]
    %v2688 = vld [vmem:[%s2684 + $0x18] sm:$0xff]
    %s2689 = scalar_lea.vmem [#allocation12], 64
    %v2690 = vld [vmem:[%s2689] sm:$0xff]
    %v2691 = vld [vmem:[%s2689 + $0x8] sm:$0xff]
    %v2692 = vld [vmem:[%s2689 + $0x10] sm:$0xff]
    %v2693 = vld [vmem:[%s2689 + $0x18] sm:$0xff]
    %s2694 = scalar_lea.vmem %s9, 2
    %v2695 = vld [vmem:[%s2694] sm:$0x1]
    %v2696 = vld [vmem:[#allocation6 + $0x1] sm:$0x1]
    %v2698 = vsel %vm443, %v2696, 0
    %2700 = vmatprep.subr.mxu0 0.0
    %2701 = vmatpush1.msra.mxu0 %v2680
    %2702 = vmatprep.subr.mxu0 0.0
    %2703 = vmatpush1.msra.mxu0 %v2681
    %2704 = vmatprep.subr.mxu0 0.0
    %2705 = vmatpush1.msra.mxu0 %v2682
    %2706 = vmatprep.subr.mxu0 0.0
    %2707 = vmatpush1.msra.mxu0 %v2683
    %2708 = vmatprep.subr.mxu0 0.0
    %2709 = vmatpush1.msra.mxu0 0.0
    %2710 = vmatprep.subr.mxu0 0.0
    %2711 = vmatpush1.msra.mxu0 0.0
    %2712 = vmatprep.subr.mxu0 0.0
    %2713 = vmatpush1.msra.mxu0 0.0
    %2714 = vmatprep.subr.mxu0 0.0
    %2715 = vmatpush1.msra.mxu0 0.0
    %2716 = vmatprep.subr.mxu0 0.0
    %2717 = vmatpush1.msra.mxu0 0.0
    %2718 = vmatprep.subr.mxu0 0.0
    %2719 = vmatpush1.msra.mxu0 0.0
    %2720 = vmatprep.subr.mxu0 0.0
    %2721 = vmatpush1.msra.mxu0 0.0
    %2722 = vmatprep.subr.mxu0 0.0
    %2723 = vmatpush1.msra.mxu0 0.0
    %2724 = vmatprep.subr.mxu0 0.0
    %2725 = vmatpush1.msra.mxu0 0.0
    %2726 = vmatprep.subr.mxu0 0.0
    %2727 = vmatpush1.msra.mxu0 0.0
    %2728 = vmatprep.subr.mxu0 0.0
    %2729 = vmatpush1.msra.mxu0 0.0
    %2730 = vmatprep.subr.mxu0 0.0
    %2731 = vmatpush1.msra.mxu0 0.0
    %2732 = vmatprep.subr.mxu0 0.0
    %2733 = vmatpush1.msra.mxu0 0.0
    %2734 = vmatprep.subr.mxu0 0.0
    %2735 = vmatpush1.msra.mxu0 0.0
    %2736 = vmatprep.subr.mxu0 0.0
    %2737 = vmatpush1.msra.mxu0 0.0
    %2738 = vmatprep.subr.mxu0 0.0
    %2739 = vmatpush1.msra.mxu0 0.0
    %2740 = vmatprep.subr.mxu0 0.0
    %2741 = vmatpush1.msra.mxu0 0.0
    %2742 = vmatprep.subr.mxu0 0.0
    %2743 = vmatpush1.msra.mxu0 0.0
    %2744 = vmatprep.subr.mxu0 0.0
    %2745 = vmatpush1.msra.mxu0 0.0
    %2746 = vmatprep.subr.mxu0 0.0
    %2747 = vmatpush1.msra.mxu0 0.0
    %2748 = vmatprep.subr.mxu0 0.0
    %2749 = vmatpush1.msra.mxu0 0.0
    %2750 = vmatprep.subr.mxu0 0.0
    %2751 = vmatpush1.msra.mxu0 0.0
    %2752 = vmatprep.subr.mxu0 0.0
    %2753 = vmatpush1.msra.mxu0 0.0
    %2754 = vmatprep.subr.mxu0 0.0
    %2755 = vmatpush1.msra.mxu0 0.0
    %2756 = vmatprep.subr.mxu0 0.0
    %2757 = vmatpush1.msra.mxu0 0.0
    %2758 = vmatprep.subr.mxu0 0.0
    %2759 = vmatpush1.msra.mxu0 0.0
    %2760 = vmatprep.subr.mxu0 0.0
    %2761 = vmatpush1.msra.mxu0 0.0
    %2762 = vmatprep.subr.mxu0 0.0
    %2763 = vmatpush1.msra.mxu0 0.0
    %2764 = vmatprep.mubr.f32.mxu0 0.0
    %2765 = vmatmul.mubr.f32.gmra.mrb[0].mxu0 %v2698
    %v2766 = vpop.f32.mrb[0].mxu0
    %v2767 = vadd.f32 0.0, %v2766
    %v2768 = vpop.f32.mrb[0].mxu0
    %2769 = vdwg.mxu0
    %2770 = vmatprep.subr.mxu0 0.0
    %2771 = vmatpush1.msra.mxu0 %v2685
    %2772 = vmatprep.subr.mxu0 0.0
    %2773 = vmatpush1.msra.mxu0 %v2686
    %2774 = vmatprep.subr.mxu0 0.0
    %2775 = vmatpush1.msra.mxu0 %v2687
    %2776 = vmatprep.subr.mxu0 0.0
    %2777 = vmatpush1.msra.mxu0 %v2688
    %2778 = vmatprep.subr.mxu0 0.0
    %2779 = vmatpush1.msra.mxu0 0.0
    %2780 = vmatprep.subr.mxu0 0.0
    %2781 = vmatpush1.msra.mxu0 0.0
    %2782 = vmatprep.subr.mxu0 0.0
    %2783 = vmatpush1.msra.mxu0 0.0
    %2784 = vmatprep.subr.mxu0 0.0
    %2785 = vmatpush1.msra.mxu0 0.0
    %2786 = vmatprep.subr.mxu0 0.0
    %2787 = vmatpush1.msra.mxu0 0.0
    %2788 = vmatprep.subr.mxu0 0.0
    %2789 = vmatpush1.msra.mxu0 0.0
    %2790 = vmatprep.subr.mxu0 0.0
    %2791 = vmatpush1.msra.mxu0 0.0
    %2792 = vmatprep.subr.mxu0 0.0
    %2793 = vmatpush1.msra.mxu0 0.0
    %2794 = vmatprep.subr.mxu0 0.0
    %2795 = vmatpush1.msra.mxu0 0.0
    %2796 = vmatprep.subr.mxu0 0.0
    %2797 = vmatpush1.msra.mxu0 0.0
    %2798 = vmatprep.subr.mxu0 0.0
    %2799 = vmatpush1.msra.mxu0 0.0
    %2800 = vmatprep.subr.mxu0 0.0
    %2801 = vmatpush1.msra.mxu0 0.0
    %2802 = vmatprep.subr.mxu0 0.0
    %2803 = vmatpush1.msra.mxu0 0.0
    %2804 = vmatprep.subr.mxu0 0.0
    %2805 = vmatpush1.msra.mxu0 0.0
    %2806 = vmatprep.subr.mxu0 0.0
    %2807 = vmatpush1.msra.mxu0 0.0
    %2808 = vmatprep.subr.mxu0 0.0
    %2809 = vmatpush1.msra.mxu0 0.0
    %2810 = vmatprep.subr.mxu0 0.0
    %2811 = vmatpush1.msra.mxu0 0.0
    %2812 = vmatprep.subr.mxu0 0.0
    %2813 = vmatpush1.msra.mxu0 0.0
    %2814 = vmatprep.subr.mxu0 0.0
    %2815 = vmatpush1.msra.mxu0 0.0
    %2816 = vmatprep.subr.mxu0 0.0
    %2817 = vmatpush1.msra.mxu0 0.0
    %2818 = vmatprep.subr.mxu0 0.0
    %2819 = vmatpush1.msra.mxu0 0.0
    %2820 = vmatprep.subr.mxu0 0.0
    %2821 = vmatpush1.msra.mxu0 0.0
    %2822 = vmatprep.subr.mxu0 0.0
    %2823 = vmatpush1.msra.mxu0 0.0
    %2824 = vmatprep.subr.mxu0 0.0
    %2825 = vmatpush1.msra.mxu0 0.0
    %2826 = vmatprep.subr.mxu0 0.0
    %2827 = vmatpush1.msra.mxu0 0.0
    %2828 = vmatprep.subr.mxu0 0.0
    %2829 = vmatpush1.msra.mxu0 0.0
    %2830 = vmatprep.subr.mxu0 0.0
    %2831 = vmatpush1.msra.mxu0 0.0
    %2832 = vmatprep.subr.mxu0 0.0
    %2833 = vmatpush1.msra.mxu0 0.0
    %2834 = vmatprep.mubr.f32.mxu0 0.0
    %2835 = vmatmul.mubr.f32.gmra.mrb[0].mxu0 %v2698
    %v2836 = vpop.f32.mrb[0].mxu0
    %v2837 = vadd.f32 0.0, %v2836
    %v2838 = vpop.f32.mrb[0].mxu0
    %2839 = vdwg.mxu0
    %2840 = vmatprep.subr.mxu0 0.0
    %2841 = vmatpush1.msra.mxu0 %v2690
    %2842 = vmatprep.subr.mxu0 0.0
    %2843 = vmatpush1.msra.mxu0 %v2691
    %2844 = vmatprep.subr.mxu0 0.0
    %2845 = vmatpush1.msra.mxu0 %v2692
    %2846 = vmatprep.subr.mxu0 0.0
    %2847 = vmatpush1.msra.mxu0 %v2693
    %2848 = vmatprep.subr.mxu0 0.0
    %2849 = vmatpush1.msra.mxu0 0.0
    %2850 = vmatprep.subr.mxu0 0.0
    %2851 = vmatpush1.msra.mxu0 0.0
    %2852 = vmatprep.subr.mxu0 0.0
    %2853 = vmatpush1.msra.mxu0 0.0
    %2854 = vmatprep.subr.mxu0 0.0
    %2855 = vmatpush1.msra.mxu0 0.0
    %2856 = vmatprep.subr.mxu0 0.0
    %2857 = vmatpush1.msra.mxu0 0.0
    %2858 = vmatprep.subr.mxu0 0.0
    %2859 = vmatpush1.msra.mxu0 0.0
    %2860 = vmatprep.subr.mxu0 0.0
    %2861 = vmatpush1.msra.mxu0 0.0
    %2862 = vmatprep.subr.mxu0 0.0
    %2863 = vmatpush1.msra.mxu0 0.0
    %2864 = vmatprep.subr.mxu0 0.0
    %2865 = vmatpush1.msra.mxu0 0.0
    %2866 = vmatprep.subr.mxu0 0.0
    %2867 = vmatpush1.msra.mxu0 0.0
    %2868 = vmatprep.subr.mxu0 0.0
    %2869 = vmatpush1.msra.mxu0 0.0
    %2870 = vmatprep.subr.mxu0 0.0
    %2871 = vmatpush1.msra.mxu0 0.0
    %2872 = vmatprep.subr.mxu0 0.0
    %2873 = vmatpush1.msra.mxu0 0.0
    %2874 = vmatprep.subr.mxu0 0.0
    %2875 = vmatpush1.msra.mxu0 0.0
    %2876 = vmatprep.subr.mxu0 0.0
    %2877 = vmatpush1.msra.mxu0 0.0
    %2878 = vmatprep.subr.mxu0 0.0
    %2879 = vmatpush1.msra.mxu0 0.0
    %2880 = vmatprep.subr.mxu0 0.0
    %2881 = vmatpush1.msra.mxu0 0.0
    %2882 = vmatprep.subr.mxu0 0.0
    %2883 = vmatpush1.msra.mxu0 0.0
    %2884 = vmatprep.subr.mxu0 0.0
    %2885 = vmatpush1.msra.mxu0 0.0
    %2886 = vmatprep.subr.mxu0 0.0
    %2887 = vmatpush1.msra.mxu0 0.0
    %2888 = vmatprep.subr.mxu0 0.0
    %2889 = vmatpush1.msra.mxu0 0.0
    %2890 = vmatprep.subr.mxu0 0.0
    %2891 = vmatpush1.msra.mxu0 0.0
    %2892 = vmatprep.subr.mxu0 0.0
    %2893 = vmatpush1.msra.mxu0 0.0
    %2894 = vmatprep.subr.mxu0 0.0
    %2895 = vmatpush1.msra.mxu0 0.0
    %2896 = vmatprep.subr.mxu0 0.0
    %2897 = vmatpush1.msra.mxu0 0.0
    %2898 = vmatprep.subr.mxu0 0.0
    %2899 = vmatpush1.msra.mxu0 0.0
    %2900 = vmatprep.subr.mxu0 0.0
    %2901 = vmatpush1.msra.mxu0 0.0
    %2902 = vmatprep.subr.mxu0 0.0
    %2903 = vmatpush1.msra.mxu0 0.0
    %2904 = vmatprep.mubr.f32.mxu0 0.0
    %2905 = vmatmul.mubr.f32.gmra.mrb[0].mxu0 %v2698
    %v2906 = vpop.f32.mrb[0].mxu0
    %v2907 = vadd.f32 %v2695, %v2906
    %v2908 = vpop.f32.mrb[0].mxu0
    %2909 = vdwg.mxu0
    %v2910 = vadd.f32 %v2504, %v2767
    %v2911 = vxor.u32 %v2910, 2147483648
    %v2912 = vmul.f32 %v2911, 1.442695
    %v2913 = vpow.pop %v2912
    %v2914 = vadd.f32 %v2913, 1.0
    %v2915 = vrcp.pop %v2914
    %v2916 = vmul.f32 1.0, %v2915
    %v2917 = vadd.f32 %v2596, %v2837
    %v2918 = vxor.u32 %v2917, 2147483648
    %v2919 = vmul.f32 %v2918, 1.442695
    %v2920 = vpow.pop %v2919
    %v2921 = vadd.f32 %v2920, 1.0
    %v2922 = vrcp.pop %v2921
    %v2923 = vmul.f32 1.0, %v2922
    %v2924 = vmul.f32 %v2916, %v2907
    %v2925 = vadd.f32 %v2677, %v2924
    %v2926 = vtanh.pop %v2925
    %v2927 = vsub.f32 1.0, %v2923
    %v2928 = vmul.f32 %v2927, %v2926
    %v2929 = vmul.f32 %v2923, %v2696
    %v2930 = vadd.f32 %v2928, %v2929
    %v2932 = vsel %vm443, %v2930, 0
    %2934 = vmatprep.subr.mxu0 0.0
    %2935 = vmatpush1.msra.mxu0 %v2680
    %2936 = vmatprep.subr.mxu0 0.0
    %2937 = vmatpush1.msra.mxu0 %v2681
    %2938 = vmatprep.subr.mxu0 0.0
    %2939 = vmatpush1.msra.mxu0 %v2682
    %2940 = vmatprep.subr.mxu0 0.0
    %2941 = vmatpush1.msra.mxu0 %v2683
    %2942 = vmatprep.subr.mxu0 0.0
    %2943 = vmatpush1.msra.mxu0 0.0
    %2944 = vmatprep.subr.mxu0 0.0
    %2945 = vmatpush1.msra.mxu0 0.0
    %2946 = vmatprep.subr.mxu0 0.0
    %2947 = vmatpush1.msra.mxu0 0.0
    %2948 = vmatprep.subr.mxu0 0.0
    %2949 = vmatpush1.msra.mxu0 0.0
    %2950 = vmatprep.subr.mxu0 0.0
    %2951 = vmatpush1.msra.mxu0 0.0
    %2952 = vmatprep.subr.mxu0 0.0
    %2953 = vmatpush1.msra.mxu0 0.0
    %2954 = vmatprep.subr.mxu0 0.0
    %2955 = vmatpush1.msra.mxu0 0.0
    %2956 = vmatprep.subr.mxu0 0.0
    %2957 = vmatpush1.msra.mxu0 0.0
    %2958 = vmatprep.subr.mxu0 0.0
    %2959 = vmatpush1.msra.mxu0 0.0
    %2960 = vmatprep.subr.mxu0 0.0
    %2961 = vmatpush1.msra.mxu0 0.0
    %2962 = vmatprep.subr.mxu0 0.0
    %2963 = vmatpush1.msra.mxu0 0.0
    %2964 = vmatprep.subr.mxu0 0.0
    %2965 = vmatpush1.msra.mxu0 0.0
    %2966 = vmatprep.subr.mxu0 0.0
    %2967 = vmatpush1.msra.mxu0 0.0
    %2968 = vmatprep.subr.mxu0 0.0
    %2969 = vmatpush1.msra.mxu0 0.0
    %2970 = vmatprep.subr.mxu0 0.0
    %2971 = vmatpush1.msra.mxu0 0.0
    %2972 = vmatprep.subr.mxu0 0.0
    %2973 = vmatpush1.msra.mxu0 0.0
    %2974 = vmatprep.subr.mxu0 0.0
    %2975 = vmatpush1.msra.mxu0 0.0
    %2976 = vmatprep.subr.mxu0 0.0
    %2977 = vmatpush1.msra.mxu0 0.0
    %2978 = vmatprep.subr.mxu0 0.0
    %2979 = vmatpush1.msra.mxu0 0.0
    %2980 = vmatprep.subr.mxu0 0.0
    %2981 = vmatpush1.msra.mxu0 0.0
    %2982 = vmatprep.subr.mxu0 0.0
    %2983 = vmatpush1.msra.mxu0 0.0
    %2984 = vmatprep.subr.mxu0 0.0
    %2985 = vmatpush1.msra.mxu0 0.0
    %2986 = vmatprep.subr.mxu0 0.0
    %2987 = vmatpush1.msra.mxu0 0.0
    %2988 = vmatprep.subr.mxu0 0.0
    %2989 = vmatpush1.msra.mxu0 0.0
    %2990 = vmatprep.subr.mxu0 0.0
    %2991 = vmatpush1.msra.mxu0 0.0
    %2992 = vmatprep.subr.mxu0 0.0
    %2993 = vmatpush1.msra.mxu0 0.0
    %2994 = vmatprep.subr.mxu0 0.0
    %2995 = vmatpush1.msra.mxu0 0.0
    %2996 = vmatprep.subr.mxu0 0.0
    %2997 = vmatpush1.msra.mxu0 0.0
    %2998 = vmatprep.mubr.f32.mxu0 0.0
    %2999 = vmatmul.mubr.f32.gmra.mrb[0].mxu0 %v2932
    %v3000 = vpop.f32.mrb[0].mxu0
    %v3001 = vadd.f32 0.0, %v3000
    %v3002 = vpop.f32.mrb[0].mxu0
    %3003 = vdwg.mxu0
    %3004 = vmatprep.subr.mxu0 0.0
    %3005 = vmatpush1.msra.mxu0 %v2685
    %3006 = vmatprep.subr.mxu0 0.0
    %3007 = vmatpush1.msra.mxu0 %v2686
    %3008 = vmatprep.subr.mxu0 0.0
    %3009 = vmatpush1.msra.mxu0 %v2687
    %3010 = vmatprep.subr.mxu0 0.0
    %3011 = vmatpush1.msra.mxu0 %v2688
    %3012 = vmatprep.subr.mxu0 0.0
    %3013 = vmatpush1.msra.mxu0 0.0
    %3014 = vmatprep.subr.mxu0 0.0
    %3015 = vmatpush1.msra.mxu0 0.0
    %3016 = vmatprep.subr.mxu0 0.0
    %3017 = vmatpush1.msra.mxu0 0.0
    %3018 = vmatprep.subr.mxu0 0.0
    %3019 = vmatpush1.msra.mxu0 0.0
    %3020 = vmatprep.subr.mxu0 0.0
    %3021 = vmatpush1.msra.mxu0 0.0
    %3022 = vmatprep.subr.mxu0 0.0
    %3023 = vmatpush1.msra.mxu0 0.0
    %3024 = vmatprep.subr.mxu0 0.0
    %3025 = vmatpush1.msra.mxu0 0.0
    %3026 = vmatprep.subr.mxu0 0.0
    %3027 = vmatpush1.msra.mxu0 0.0
    %3028 = vmatprep.subr.mxu0 0.0
    %3029 = vmatpush1.msra.mxu0 0.0
    %3030 = vmatprep.subr.mxu0 0.0
    %3031 = vmatpush1.msra.mxu0 0.0
    %3032 = vmatprep.subr.mxu0 0.0
    %3033 = vmatpush1.msra.mxu0 0.0
    %3034 = vmatprep.subr.mxu0 0.0
    %3035 = vmatpush1.msra.mxu0 0.0
    %3036 = vmatprep.subr.mxu0 0.0
    %3037 = vmatpush1.msra.mxu0 0.0
    %3038 = vmatprep.subr.mxu0 0.0
    %3039 = vmatpush1.msra.mxu0 0.0
    %3040 = vmatprep.subr.mxu0 0.0
    %3041 = vmatpush1.msra.mxu0 0.0
    %3042 = vmatprep.subr.mxu0 0.0
    %3043 = vmatpush1.msra.mxu0 0.0
    %3044 = vmatprep.subr.mxu0 0.0
    %3045 = vmatpush1.msra.mxu0 0.0
    %3046 = vmatprep.subr.mxu0 0.0
    %3047 = vmatpush1.msra.mxu0 0.0
    %3048 = vmatprep.subr.mxu0 0.0
    %3049 = vmatpush1.msra.mxu0 0.0
    %3050 = vmatprep.subr.mxu0 0.0
    %3051 = vmatpush1.msra.mxu0 0.0
    %3052 = vmatprep.subr.mxu0 0.0
    %3053 = vmatpush1.msra.mxu0 0.0
    %3054 = vmatprep.subr.mxu0 0.0
    %3055 = vmatpush1.msra.mxu0 0.0
    %3056 = vmatprep.subr.mxu0 0.0
    %3057 = vmatpush1.msra.mxu0 0.0
    %3058 = vmatprep.subr.mxu0 0.0
    %3059 = vmatpush1.msra.mxu0 0.0
    %3060 = vmatprep.subr.mxu0 0.0
    %3061 = vmatpush1.msra.mxu0 0.0
    %3062 = vmatprep.subr.mxu0 0.0
    %3063 = vmatpush1.msra.mxu0 0.0
    %3064 = vmatprep.subr.mxu0 0.0
    %3065 = vmatpush1.msra.mxu0 0.0
    %3066 = vmatprep.subr.mxu0 0.0
    %3067 = vmatpush1.msra.mxu0 0.0
    %3068 = vmatprep.mubr.f32.mxu0 0.0
    %3069 = vmatmul.mubr.f32.gmra.mrb[0].mxu0 %v2932
    %v3070 = vpop.f32.mrb[0].mxu0
    %v3071 = vadd.f32 0.0, %v3070
    %v3072 = vpop.f32.mrb[0].mxu0
    %3073 = vdwg.mxu0
    %3074 = vmatprep.subr.mxu0 0.0
    %3075 = vmatpush1.msra.mxu0 %v2690
    %3076 = vmatprep.subr.mxu0 0.0
    %3077 = vmatpush1.msra.mxu0 %v2691
    %3078 = vmatprep.subr.mxu0 0.0
    %3079 = vmatpush1.msra.mxu0 %v2692
    %3080 = vmatprep.subr.mxu0 0.0
    %3081 = vmatpush1.msra.mxu0 %v2693
    %3082 = vmatprep.subr.mxu0 0.0
    %3083 = vmatpush1.msra.mxu0 0.0
    %3084 = vmatprep.subr.mxu0 0.0
    %3085 = vmatpush1.msra.mxu0 0.0
    %3086 = vmatprep.subr.mxu0 0.0
    %3087 = vmatpush1.msra.mxu0 0.0
    %3088 = vmatprep.subr.mxu0 0.0
    %3089 = vmatpush1.msra.mxu0 0.0
    %3090 = vmatprep.subr.mxu0 0.0
    %3091 = vmatpush1.msra.mxu0 0.0
    %3092 = vmatprep.subr.mxu0 0.0
    %3093 = vmatpush1.msra.mxu0 0.0
    %3094 = vmatprep.subr.mxu0 0.0
    %3095 = vmatpush1.msra.mxu0 0.0
    %3096 = vmatprep.subr.mxu0 0.0
    %3097 = vmatpush1.msra.mxu0 0.0
    %3098 = vmatprep.subr.mxu0 0.0
    %3099 = vmatpush1.msra.mxu0 0.0
    %3100 = vmatprep.subr.mxu0 0.0
    %3101 = vmatpush1.msra.mxu0 0.0
    %3102 = vmatprep.subr.mxu0 0.0
    %3103 = vmatpush1.msra.mxu0 0.0
    %3104 = vmatprep.subr.mxu0 0.0
    %3105 = vmatpush1.msra.mxu0 0.0
    %3106 = vmatprep.subr.mxu0 0.0
    %3107 = vmatpush1.msra.mxu0 0.0
    %3108 = vmatprep.subr.mxu0 0.0
    %3109 = vmatpush1.msra.mxu0 0.0
    %3110 = vmatprep.subr.mxu0 0.0
    %3111 = vmatpush1.msra.mxu0 0.0
    %3112 = vmatprep.subr.mxu0 0.0
    %3113 = vmatpush1.msra.mxu0 0.0
    %3114 = vmatprep.subr.mxu0 0.0
    %3115 = vmatpush1.msra.mxu0 0.0
    %3116 = vmatprep.subr.mxu0 0.0
    %3117 = vmatpush1.msra.mxu0 0.0
    %3118 = vmatprep.subr.mxu0 0.0
    %3119 = vmatpush1.msra.mxu0 0.0
    %3120 = vmatprep.subr.mxu0 0.0
    %3121 = vmatpush1.msra.mxu0 0.0
    %3122 = vmatprep.subr.mxu0 0.0
    %3123 = vmatpush1.msra.mxu0 0.0
    %3124 = vmatprep.subr.mxu0 0.0
    %3125 = vmatpush1.msra.mxu0 0.0
    %3126 = vmatprep.subr.mxu0 0.0
    %3127 = vmatpush1.msra.mxu0 0.0
    %3128 = vmatprep.subr.mxu0 0.0
    %3129 = vmatpush1.msra.mxu0 0.0
    %3130 = vmatprep.subr.mxu0 0.0
    %3131 = vmatpush1.msra.mxu0 0.0
    %3132 = vmatprep.subr.mxu0 0.0
    %3133 = vmatpush1.msra.mxu0 0.0
    %3134 = vmatprep.subr.mxu0 0.0
    %3135 = vmatpush1.msra.mxu0 0.0
    %3136 = vmatprep.subr.mxu0 0.0
    %3137 = vmatpush1.msra.mxu0 0.0
    %3138 = vmatprep.mubr.f32.mxu0 0.0
    %3139 = vmatmul.mubr.f32.gmra.mrb[0].mxu0 %v2932
    %v3140 = vpop.f32.mrb[0].mxu0
    %v3141 = vadd.f32 %v2695, %v3140
    %v3142 = vpop.f32.mrb[0].mxu0
    %3143 = vdwg.mxu0
    %v3145 = vrot.slane %v3001, 7
    %v3147 = vadd.f32 %v2504, %v3145
    %v3148 = vxor.u32 %v3147, 2147483648
    %v3149 = vmul.f32 %v3148, 1.442695
    %v3150 = vpow.pop %v3149
    %v3151 = vadd.f32 %v3150, 1.0
    %v3152 = vrcp.pop %v3151
    %v3153 = vmul.f32 1.0, %v3152
    %v3155 = vrot.slane %v3071, 7
    %v3157 = vadd.f32 %v2596, %v3155
    %v3158 = vxor.u32 %v3157, 2147483648
    %v3159 = vmul.f32 %v3158, 1.442695
    %v3160 = vpow.pop %v3159
    %v3161 = vadd.f32 %v3160, 1.0
    %v3162 = vrcp.pop %v3161
    %v3163 = vmul.f32 1.0, %v3162
    %v3165 = vrot.slane %v3141, 7
    %v3167 = vmul.f32 %v3153, %v3165
    %v3168 = vadd.f32 %v2677, %v3167
    %v3169 = vtanh.pop %v3168
    %v3170 = vsub.f32 1.0, %v3163
    %v3171 = vmul.f32 %v3170, %v3169
    %v3172 = vrot.slane %v2930, 7
    %v3174 = vmul.f32 %v3163, %v3172
    %v3175 = vadd.f32 %v3171, %v3174
    %v3177 = vrot.slane %v3175, 1
    %v3178 = vsel %vm443, %v3177, 0
    %3180 = vmatprep.subr.mxu0 0.0
    %3181 = vmatpush1.msra.mxu0 %v2680
    %3182 = vmatprep.subr.mxu0 0.0
    %3183 = vmatpush1.msra.mxu0 %v2681
    %3184 = vmatprep.subr.mxu0 0.0
    %3185 = vmatpush1.msra.mxu0 %v2682
    %3186 = vmatprep.subr.mxu0 0.0
    %3187 = vmatpush1.msra.mxu0 %v2683
    %3188 = vmatprep.subr.mxu0 0.0
    %3189 = vmatpush1.msra.mxu0 0.0
    %3190 = vmatprep.subr.mxu0 0.0
    %3191 = vmatpush1.msra.mxu0 0.0
    %3192 = vmatprep.subr.mxu0 0.0
    %3193 = vmatpush1.msra.mxu0 0.0
    %3194 = vmatprep.subr.mxu0 0.0
    %3195 = vmatpush1.msra.mxu0 0.0
    %3196 = vmatprep.subr.mxu0 0.0
    %3197 = vmatpush1.msra.mxu0 0.0
    %3198 = vmatprep.subr.mxu0 0.0
    %3199 = vmatpush1.msra.mxu0 0.0
    %3200 = vmatprep.subr.mxu0 0.0
    %3201 = vmatpush1.msra.mxu0 0.0
    %3202 = vmatprep.subr.mxu0 0.0
    %3203 = vmatpush1.msra.mxu0 0.0
    %3204 = vmatprep.subr.mxu0 0.0
    %3205 = vmatpush1.msra.mxu0 0.0
    %3206 = vmatprep.subr.mxu0 0.0
    %3207 = vmatpush1.msra.mxu0 0.0
    %3208 = vmatprep.subr.mxu0 0.0
    %3209 = vmatpush1.msra.mxu0 0.0
    %3210 = vmatprep.subr.mxu0 0.0
    %3211 = vmatpush1.msra.mxu0 0.0
    %3212 = vmatprep.subr.mxu0 0.0
    %3213 = vmatpush1.msra.mxu0 0.0
    %3214 = vmatprep.subr.mxu0 0.0
    %3215 = vmatpush1.msra.mxu0 0.0
    %3216 = vmatprep.subr.mxu0 0.0
    %3217 = vmatpush1.msra.mxu0 0.0
    %3218 = vmatprep.subr.mxu0 0.0
    %3219 = vmatpush1.msra.mxu0 0.0
    %3220 = vmatprep.subr.mxu0 0.0
    %3221 = vmatpush1.msra.mxu0 0.0
    %3222 = vmatprep.subr.mxu0 0.0
    %3223 = vmatpush1.msra.mxu0 0.0
    %3224 = vmatprep.subr.mxu0 0.0
    %3225 = vmatpush1.msra.mxu0 0.0
    %3226 = vmatprep.subr.mxu0 0.0
    %3227 = vmatpush1.msra.mxu0 0.0
    %3228 = vmatprep.subr.mxu0 0.0
    %3229 = vmatpush1.msra.mxu0 0.0
    %3230 = vmatprep.subr.mxu0 0.0
    %3231 = vmatpush1.msra.mxu0 0.0
    %3232 = vmatprep.subr.mxu0 0.0
    %3233 = vmatpush1.msra.mxu0 0.0
    %3234 = vmatprep.subr.mxu0 0.0
    %3235 = vmatpush1.msra.mxu0 0.0
    %3236 = vmatprep.subr.mxu0 0.0
    %3237 = vmatpush1.msra.mxu0 0.0
    %3238 = vmatprep.subr.mxu0 0.0
    %3239 = vmatpush1.msra.mxu0 0.0
    %3240 = vmatprep.subr.mxu0 0.0
    %3241 = vmatpush1.msra.mxu0 0.0
    %3242 = vmatprep.subr.mxu0 0.0
    %3243 = vmatpush1.msra.mxu0 0.0
    %3244 = vmatprep.mubr.f32.mxu0 0.0
    %3245 = vmatmul.mubr.f32.gmra.mrb[0].mxu0 %v3178
    %v3246 = vpop.f32.mrb[0].mxu0
    %v3247 = vadd.f32 0.0, %v3246
    %v3248 = vpop.f32.mrb[0].mxu0
    %3249 = vdwg.mxu0
    %3250 = vmatprep.subr.mxu0 0.0
    %3251 = vmatpush1.msra.mxu0 %v2685
    %3252 = vmatprep.subr.mxu0 0.0
    %3253 = vmatpush1.msra.mxu0 %v2686
    %3254 = vmatprep.subr.mxu0 0.0
    %3255 = vmatpush1.msra.mxu0 %v2687
    %3256 = vmatprep.subr.mxu0 0.0
    %3257 = vmatpush1.msra.mxu0 %v2688
    %3258 = vmatprep.subr.mxu0 0.0
    %3259 = vmatpush1.msra.mxu0 0.0
    %3260 = vmatprep.subr.mxu0 0.0
    %3261 = vmatpush1.msra.mxu0 0.0
    %3262 = vmatprep.subr.mxu0 0.0
    %3263 = vmatpush1.msra.mxu0 0.0
    %3264 = vmatprep.subr.mxu0 0.0
    %3265 = vmatpush1.msra.mxu0 0.0
    %3266 = vmatprep.subr.mxu0 0.0
    %3267 = vmatpush1.msra.mxu0 0.0
    %3268 = vmatprep.subr.mxu0 0.0
    %3269 = vmatpush1.msra.mxu0 0.0
    %3270 = vmatprep.subr.mxu0 0.0
    %3271 = vmatpush1.msra.mxu0 0.0
    %3272 = vmatprep.subr.mxu0 0.0
    %3273 = vmatpush1.msra.mxu0 0.0
    %3274 = vmatprep.subr.mxu0 0.0
    %3275 = vmatpush1.msra.mxu0 0.0
    %3276 = vmatprep.subr.mxu0 0.0
    %3277 = vmatpush1.msra.mxu0 0.0
    %3278 = vmatprep.subr.mxu0 0.0
    %3279 = vmatpush1.msra.mxu0 0.0
    %3280 = vmatprep.subr.mxu0 0.0
    %3281 = vmatpush1.msra.mxu0 0.0
    %3282 = vmatprep.subr.mxu0 0.0
    %3283 = vmatpush1.msra.mxu0 0.0
    %3284 = vmatprep.subr.mxu0 0.0
    %3285 = vmatpush1.msra.mxu0 0.0
    %3286 = vmatprep.subr.mxu0 0.0
    %3287 = vmatpush1.msra.mxu0 0.0
    %3288 = vmatprep.subr.mxu0 0.0
    %3289 = vmatpush1.msra.mxu0 0.0
    %3290 = vmatprep.subr.mxu0 0.0
    %3291 = vmatpush1.msra.mxu0 0.0
    %3292 = vmatprep.subr.mxu0 0.0
    %3293 = vmatpush1.msra.mxu0 0.0
    %3294 = vmatprep.subr.mxu0 0.0
    %3295 = vmatpush1.msra.mxu0 0.0
    %3296 = vmatprep.subr.mxu0 0.0
    %3297 = vmatpush1.msra.mxu0 0.0
    %3298 = vmatprep.subr.mxu0 0.0
    %3299 = vmatpush1.msra.mxu0 0.0
    %3300 = vmatprep.subr.mxu0 0.0
    %3301 = vmatpush1.msra.mxu0 0.0
    %3302 = vmatprep.subr.mxu0 0.0
    %3303 = vmatpush1.msra.mxu0 0.0
    %3304 = vmatprep.subr.mxu0 0.0
    %3305 = vmatpush1.msra.mxu0 0.0
    %3306 = vmatprep.subr.mxu0 0.0
    %3307 = vmatpush1.msra.mxu0 0.0
    %3308 = vmatprep.subr.mxu0 0.0
    %3309 = vmatpush1.msra.mxu0 0.0
    %3310 = vmatprep.subr.mxu0 0.0
    %3311 = vmatpush1.msra.mxu0 0.0
    %3312 = vmatprep.subr.mxu0 0.0
    %3313 = vmatpush1.msra.mxu0 0.0
    %3314 = vmatprep.mubr.f32.mxu0 0.0
    %3315 = vmatmul.mubr.f32.gmra.mrb[0].mxu0 %v3178
    %v3316 = vpop.f32.mrb[0].mxu0
    %v3317 = vadd.f32 0.0, %v3316
    %v3318 = vpop.f32.mrb[0].mxu0
    %3319 = vdwg.mxu0
    %3320 = vmatprep.subr.mxu0 0.0
    %3321 = vmatpush1.msra.mxu0 %v2690
    %3322 = vmatprep.subr.mxu0 0.0
    %3323 = vmatpush1.msra.mxu0 %v2691
    %3324 = vmatprep.subr.mxu0 0.0
    %3325 = vmatpush1.msra.mxu0 %v2692
    %3326 = vmatprep.subr.mxu0 0.0
    %3327 = vmatpush1.msra.mxu0 %v2693
    %3328 = vmatprep.subr.mxu0 0.0
    %3329 = vmatpush1.msra.mxu0 0.0
    %3330 = vmatprep.subr.mxu0 0.0
    %3331 = vmatpush1.msra.mxu0 0.0
    %3332 = vmatprep.subr.mxu0 0.0
    %3333 = vmatpush1.msra.mxu0 0.0
    %3334 = vmatprep.subr.mxu0 0.0
    %3335 = vmatpush1.msra.mxu0 0.0
    %3336 = vmatprep.subr.mxu0 0.0
    %3337 = vmatpush1.msra.mxu0 0.0
    %3338 = vmatprep.subr.mxu0 0.0
    %3339 = vmatpush1.msra.mxu0 0.0
    %3340 = vmatprep.subr.mxu0 0.0
    %3341 = vmatpush1.msra.mxu0 0.0
    %3342 = vmatprep.subr.mxu0 0.0
    %3343 = vmatpush1.msra.mxu0 0.0
    %3344 = vmatprep.subr.mxu0 0.0
    %3345 = vmatpush1.msra.mxu0 0.0
    %3346 = vmatprep.subr.mxu0 0.0
    %3347 = vmatpush1.msra.mxu0 0.0
    %3348 = vmatprep.subr.mxu0 0.0
    %3349 = vmatpush1.msra.mxu0 0.0
    %3350 = vmatprep.subr.mxu0 0.0
    %3351 = vmatpush1.msra.mxu0 0.0
    %3352 = vmatprep.subr.mxu0 0.0
    %3353 = vmatpush1.msra.mxu0 0.0
    %3354 = vmatprep.subr.mxu0 0.0
    %3355 = vmatpush1.msra.mxu0 0.0
    %3356 = vmatprep.subr.mxu0 0.0
    %3357 = vmatpush1.msra.mxu0 0.0
    %3358 = vmatprep.subr.mxu0 0.0
    %3359 = vmatpush1.msra.mxu0 0.0
    %3360 = vmatprep.subr.mxu0 0.0
    %3361 = vmatpush1.msra.mxu0 0.0
    %3362 = vmatprep.subr.mxu0 0.0
    %3363 = vmatpush1.msra.mxu0 0.0
    %3364 = vmatprep.subr.mxu0 0.0
    %3365 = vmatpush1.msra.mxu0 0.0
    %3366 = vmatprep.subr.mxu0 0.0
    %3367 = vmatpush1.msra.mxu0 0.0
    %3368 = vmatprep.subr.mxu0 0.0
    %3369 = vmatpush1.msra.mxu0 0.0
    %3370 = vmatprep.subr.mxu0 0.0
    %3371 = vmatpush1.msra.mxu0 0.0
    %3372 = vmatprep.subr.mxu0 0.0
    %3373 = vmatpush1.msra.mxu0 0.0
    %3374 = vmatprep.subr.mxu0 0.0
    %3375 = vmatpush1.msra.mxu0 0.0
    %3376 = vmatprep.subr.mxu0 0.0
    %3377 = vmatpush1.msra.mxu0 0.0
    %3378 = vmatprep.subr.mxu0 0.0
    %3379 = vmatpush1.msra.mxu0 0.0
    %3380 = vmatprep.subr.mxu0 0.0
    %3381 = vmatpush1.msra.mxu0 0.0
    %3382 = vmatprep.subr.mxu0 0.0
    %3383 = vmatpush1.msra.mxu0 0.0
    %3384 = vmatprep.mubr.f32.mxu0 0.0
    %3385 = vmatmul.mubr.f32.gmra.mrb[0].mxu0 %v3178
    %v3386 = vpop.f32.mrb[0].mxu0
    %v3387 = vadd.f32 %v2695, %v3386
    %v3388 = vpop.f32.mrb[0].mxu0
    %3389 = vdwg.mxu0
    %v3391 = vrot.slane %v3247, 6
    %v3393 = vadd.f32 %v2504, %v3391
    %v3394 = vxor.u32 %v3393, 2147483648
    %v3395 = vmul.f32 %v3394, 1.442695
    %v3396 = vpow.pop %v3395
    %v3397 = vadd.f32 %v3396, 1.0
    %v3398 = vrcp.pop %v3397
    %v3399 = vmul.f32 1.0, %v3398
    %v3401 = vrot.slane %v3317, 6
    %v3403 = vadd.f32 %v2596, %v3401
    %v3404 = vxor.u32 %v3403, 2147483648
    %v3405 = vmul.f32 %v3404, 1.442695
    %v3406 = vpow.pop %v3405
    %v3407 = vadd.f32 %v3406, 1.0
    %v3408 = vrcp.pop %v3407
    %v3409 = vmul.f32 1.0, %v3408
    %v3411 = vrot.slane %v3387, 6
    %v3413 = vmul.f32 %v3399, %v3411
    %v3414 = vadd.f32 %v2677, %v3413
    %v3415 = vtanh.pop %v3414
    %v3416 = vsub.f32 1.0, %v3409
    %v3417 = vmul.f32 %v3416, %v3415
    %v3418 = vrot.slane %v3175, 7
    %v3420 = vmul.f32 %v3409, %v3418
    %v3421 = vadd.f32 %v3417, %v3420
    %v3423 = vrot.slane %v3421, 2
    %v3424 = vsel %vm443, %v3423, 0
    %3426 = vmatprep.subr.mxu0 0.0
    %3427 = vmatpush1.msra.mxu0 %v2680
    %3428 = vmatprep.subr.mxu0 0.0
    %3429 = vmatpush1.msra.mxu0 %v2681
    %3430 = vmatprep.subr.mxu0 0.0
    %3431 = vmatpush1.msra.mxu0 %v2682
    %3432 = vmatprep.subr.mxu0 0.0
    %3433 = vmatpush1.msra.mxu0 %v2683
    %3434 = vmatprep.subr.mxu0 0.0
    %3435 = vmatpush1.msra.mxu0 0.0
    %3436 = vmatprep.subr.mxu0 0.0
    %3437 = vmatpush1.msra.mxu0 0.0
    %3438 = vmatprep.subr.mxu0 0.0
    %3439 = vmatpush1.msra.mxu0 0.0
    %3440 = vmatprep.subr.mxu0 0.0
    %3441 = vmatpush1.msra.mxu0 0.0
    %3442 = vmatprep.subr.mxu0 0.0
    %3443 = vmatpush1.msra.mxu0 0.0
    %3444 = vmatprep.subr.mxu0 0.0
    %3445 = vmatpush1.msra.mxu0 0.0
    %3446 = vmatprep.subr.mxu0 0.0
    %3447 = vmatpush1.msra.mxu0 0.0
    %3448 = vmatprep.subr.mxu0 0.0
    %3449 = vmatpush1.msra.mxu0 0.0
    %3450 = vmatprep.subr.mxu0 0.0
    %3451 = vmatpush1.msra.mxu0 0.0
    %3452 = vmatprep.subr.mxu0 0.0
    %3453 = vmatpush1.msra.mxu0 0.0
    %3454 = vmatprep.subr.mxu0 0.0
    %3455 = vmatpush1.msra.mxu0 0.0
    %3456 = vmatprep.subr.mxu0 0.0
    %3457 = vmatpush1.msra.mxu0 0.0
    %3458 = vmatprep.subr.mxu0 0.0
    %3459 = vmatpush1.msra.mxu0 0.0
    %3460 = vmatprep.subr.mxu0 0.0
    %3461 = vmatpush1.msra.mxu0 0.0
    %3462 = vmatprep.subr.mxu0 0.0
    %3463 = vmatpush1.msra.mxu0 0.0
    %3464 = vmatprep.subr.mxu0 0.0
    %3465 = vmatpush1.msra.mxu0 0.0
    %3466 = vmatprep.subr.mxu0 0.0
    %3467 = vmatpush1.msra.mxu0 0.0
    %3468 = vmatprep.subr.mxu0 0.0
    %3469 = vmatpush1.msra.mxu0 0.0
    %3470 = vmatprep.subr.mxu0 0.0
    %3471 = vmatpush1.msra.mxu0 0.0
    %3472 = vmatprep.subr.mxu0 0.0
    %3473 = vmatpush1.msra.mxu0 0.0
    %3474 = vmatprep.subr.mxu0 0.0
    %3475 = vmatpush1.msra.mxu0 0.0
    %3476 = vmatprep.subr.mxu0 0.0
    %3477 = vmatpush1.msra.mxu0 0.0
    %3478 = vmatprep.subr.mxu0 0.0
    %3479 = vmatpush1.msra.mxu0 0.0
    %3480 = vmatprep.subr.mxu0 0.0
    %3481 = vmatpush1.msra.mxu0 0.0
    %3482 = vmatprep.subr.mxu0 0.0
    %3483 = vmatpush1.msra.mxu0 0.0
    %3484 = vmatprep.subr.mxu0 0.0
    %3485 = vmatpush1.msra.mxu0 0.0
    %3486 = vmatprep.subr.mxu0 0.0
    %3487 = vmatpush1.msra.mxu0 0.0
    %3488 = vmatprep.subr.mxu0 0.0
    %3489 = vmatpush1.msra.mxu0 0.0
    %3490 = vmatprep.mubr.f32.mxu0 0.0
    %3491 = vmatmul.mubr.f32.gmra.mrb[0].mxu0 %v3424
    %v3492 = vpop.f32.mrb[0].mxu0
    %v3493 = vadd.f32 0.0, %v3492
    %v3494 = vpop.f32.mrb[0].mxu0
    %3495 = vdwg.mxu0
    %3496 = vmatprep.subr.mxu0 0.0
    %3497 = vmatpush1.msra.mxu0 %v2685
    %3498 = vmatprep.subr.mxu0 0.0
    %3499 = vmatpush1.msra.mxu0 %v2686
    %3500 = vmatprep.subr.mxu0 0.0
    %3501 = vmatpush1.msra.mxu0 %v2687
    %3502 = vmatprep.subr.mxu0 0.0
    %3503 = vmatpush1.msra.mxu0 %v2688
    %3504 = vmatprep.subr.mxu0 0.0
    %3505 = vmatpush1.msra.mxu0 0.0
    %3506 = vmatprep.subr.mxu0 0.0
    %3507 = vmatpush1.msra.mxu0 0.0
    %3508 = vmatprep.subr.mxu0 0.0
    %3509 = vmatpush1.msra.mxu0 0.0
    %3510 = vmatprep.subr.mxu0 0.0
    %3511 = vmatpush1.msra.mxu0 0.0
    %3512 = vmatprep.subr.mxu0 0.0
    %3513 = vmatpush1.msra.mxu0 0.0
    %3514 = vmatprep.subr.mxu0 0.0
    %3515 = vmatpush1.msra.mxu0 0.0
    %3516 = vmatprep.subr.mxu0 0.0
    %3517 = vmatpush1.msra.mxu0 0.0
    %3518 = vmatprep.subr.mxu0 0.0
    %3519 = vmatpush1.msra.mxu0 0.0
    %3520 = vmatprep.subr.mxu0 0.0
    %3521 = vmatpush1.msra.mxu0 0.0
    %3522 = vmatprep.subr.mxu0 0.0
    %3523 = vmatpush1.msra.mxu0 0.0
    %3524 = vmatprep.subr.mxu0 0.0
    %3525 = vmatpush1.msra.mxu0 0.0
    %3526 = vmatprep.subr.mxu0 0.0
    %3527 = vmatpush1.msra.mxu0 0.0
    %3528 = vmatprep.subr.mxu0 0.0
    %3529 = vmatpush1.msra.mxu0 0.0
    %3530 = vmatprep.subr.mxu0 0.0
    %3531 = vmatpush1.msra.mxu0 0.0
    %3532 = vmatprep.subr.mxu0 0.0
    %3533 = vmatpush1.msra.mxu0 0.0
    %3534 = vmatprep.subr.mxu0 0.0
    %3535 = vmatpush1.msra.mxu0 0.0
    %3536 = vmatprep.subr.mxu0 0.0
    %3537 = vmatpush1.msra.mxu0 0.0
    %3538 = vmatprep.subr.mxu0 0.0
    %3539 = vmatpush1.msra.mxu0 0.0
    %3540 = vmatprep.subr.mxu0 0.0
    %3541 = vmatpush1.msra.mxu0 0.0
    %3542 = vmatprep.subr.mxu0 0.0
    %3543 = vmatpush1.msra.mxu0 0.0
    %3544 = vmatprep.subr.mxu0 0.0
    %3545 = vmatpush1.msra.mxu0 0.0
    %3546 = vmatprep.subr.mxu0 0.0
    %3547 = vmatpush1.msra.mxu0 0.0
    %3548 = vmatprep.subr.mxu0 0.0
    %3549 = vmatpush1.msra.mxu0 0.0
    %3550 = vmatprep.subr.mxu0 0.0
    %3551 = vmatpush1.msra.mxu0 0.0
    %3552 = vmatprep.subr.mxu0 0.0
    %3553 = vmatpush1.msra.mxu0 0.0
    %3554 = vmatprep.subr.mxu0 0.0
    %3555 = vmatpush1.msra.mxu0 0.0
    %3556 = vmatprep.subr.mxu0 0.0
    %3557 = vmatpush1.msra.mxu0 0.0
    %3558 = vmatprep.subr.mxu0 0.0
    %3559 = vmatpush1.msra.mxu0 0.0
    %3560 = vmatprep.mubr.f32.mxu0 0.0
    %3561 = vmatmul.mubr.f32.gmra.mrb[0].mxu0 %v3424
    %v3562 = vpop.f32.mrb[0].mxu0
    %v3563 = vadd.f32 0.0, %v3562
    %v3564 = vpop.f32.mrb[0].mxu0
    %3565 = vdwg.mxu0
    %3566 = vmatprep.subr.mxu0 0.0
    %3567 = vmatpush1.msra.mxu0 %v2690
    %3568 = vmatprep.subr.mxu0 0.0
    %3569 = vmatpush1.msra.mxu0 %v2691
    %3570 = vmatprep.subr.mxu0 0.0
    %3571 = vmatpush1.msra.mxu0 %v2692
    %3572 = vmatprep.subr.mxu0 0.0
    %3573 = vmatpush1.msra.mxu0 %v2693
    %3574 = vmatprep.subr.mxu0 0.0
    %3575 = vmatpush1.msra.mxu0 0.0
    %3576 = vmatprep.subr.mxu0 0.0
    %3577 = vmatpush1.msra.mxu0 0.0
    %3578 = vmatprep.subr.mxu0 0.0
    %3579 = vmatpush1.msra.mxu0 0.0
    %3580 = vmatprep.subr.mxu0 0.0
    %3581 = vmatpush1.msra.mxu0 0.0
    %3582 = vmatprep.subr.mxu0 0.0
    %3583 = vmatpush1.msra.mxu0 0.0
    %3584 = vmatprep.subr.mxu0 0.0
    %3585 = vmatpush1.msra.mxu0 0.0
    %3586 = vmatprep.subr.mxu0 0.0
    %3587 = vmatpush1.msra.mxu0 0.0
    %3588 = vmatprep.subr.mxu0 0.0
    %3589 = vmatpush1.msra.mxu0 0.0
    %3590 = vmatprep.subr.mxu0 0.0
    %3591 = vmatpush1.msra.mxu0 0.0
    %3592 = vmatprep.subr.mxu0 0.0
    %3593 = vmatpush1.msra.mxu0 0.0
    %3594 = vmatprep.subr.mxu0 0.0
    %3595 = vmatpush1.msra.mxu0 0.0
    %3596 = vmatprep.subr.mxu0 0.0
    %3597 = vmatpush1.msra.mxu0 0.0
    %3598 = vmatprep.subr.mxu0 0.0
    %3599 = vmatpush1.msra.mxu0 0.0
    %3600 = vmatprep.subr.mxu0 0.0
    %3601 = vmatpush1.msra.mxu0 0.0
    %3602 = vmatprep.subr.mxu0 0.0
    %3603 = vmatpush1.msra.mxu0 0.0
    %3604 = vmatprep.subr.mxu0 0.0
    %3605 = vmatpush1.msra.mxu0 0.0
    %3606 = vmatprep.subr.mxu0 0.0
    %3607 = vmatpush1.msra.mxu0 0.0
    %3608 = vmatprep.subr.mxu0 0.0
    %3609 = vmatpush1.msra.mxu0 0.0
    %3610 = vmatprep.subr.mxu0 0.0
    %3611 = vmatpush1.msra.mxu0 0.0
    %3612 = vmatprep.subr.mxu0 0.0
    %3613 = vmatpush1.msra.mxu0 0.0
    %3614 = vmatprep.subr.mxu0 0.0
    %3615 = vmatpush1.msra.mxu0 0.0
    %3616 = vmatprep.subr.mxu0 0.0
    %3617 = vmatpush1.msra.mxu0 0.0
    %3618 = vmatprep.subr.mxu0 0.0
    %3619 = vmatpush1.msra.mxu0 0.0
    %3620 = vmatprep.subr.mxu0 0.0
    %3621 = vmatpush1.msra.mxu0 0.0
    %3622 = vmatprep.subr.mxu0 0.0
    %3623 = vmatpush1.msra.mxu0 0.0
    %3624 = vmatprep.subr.mxu0 0.0
    %3625 = vmatpush1.msra.mxu0 0.0
    %3626 = vmatprep.subr.mxu0 0.0
    %3627 = vmatpush1.msra.mxu0 0.0
    %3628 = vmatprep.subr.mxu0 0.0
    %3629 = vmatpush1.msra.mxu0 0.0
    %3630 = vmatprep.mubr.f32.mxu0 0.0
    %3631 = vmatmul.mubr.f32.gmra.mrb[0].mxu0 %v3424
    %v3632 = vpop.f32.mrb[0].mxu0
    %v3633 = vadd.f32 %v2695, %v3632
    %v3634 = vpop.f32.mrb[0].mxu0
    %3635 = vdwg.mxu0
    %v3637 = vrot.slane %v3493, 5
    %v3639 = vadd.f32 %v2504, %v3637
    %v3640 = vxor.u32 %v3639, 2147483648
    %v3641 = vmul.f32 %v3640, 1.442695
    %v3642 = vpow.pop %v3641
    %v3643 = vadd.f32 %v3642, 1.0
    %v3644 = vrcp.pop %v3643
    %v3645 = vmul.f32 1.0, %v3644
    %v3647 = vrot.slane %v3563, 5
    %v3649 = vadd.f32 %v2596, %v3647
    %v3650 = vxor.u32 %v3649, 2147483648
    %v3651 = vmul.f32 %v3650, 1.442695
    %v3652 = vpow.pop %v3651
    %v3653 = vadd.f32 %v3652, 1.0
    %v3654 = vrcp.pop %v3653
    %v3655 = vmul.f32 1.0, %v3654
    %v3657 = vrot.slane %v3633, 5
    %v3659 = vmul.f32 %v3645, %v3657
    %v3660 = vadd.f32 %v2677, %v3659
    %v3661 = vtanh.pop %v3660
    %v3662 = vsub.f32 1.0, %v3655
    %v3663 = vmul.f32 %v3662, %v3661
    %v3664 = vrot.slane %v3421, 7
    %v3666 = vmul.f32 %v3655, %v3664
    %v3667 = vadd.f32 %v3663, %v3666
    %v3669 = vrot.slane %v3667, 3
    %v3670 = vsel %vm443, %v3669, 0
    %3672 = vmatprep.subr.mxu0 0.0
    %3673 = vmatpush1.msra.mxu0 %v2680
    %3674 = vmatprep.subr.mxu0 0.0
    %3675 = vmatpush1.msra.mxu0 %v2681
    %3676 = vmatprep.subr.mxu0 0.0
    %3677 = vmatpush1.msra.mxu0 %v2682
    %3678 = vmatprep.subr.mxu0 0.0
    %3679 = vmatpush1.msra.mxu0 %v2683
    %3680 = vmatprep.subr.mxu0 0.0
    %3681 = vmatpush1.msra.mxu0 0.0
    %3682 = vmatprep.subr.mxu0 0.0
    %3683 = vmatpush1.msra.mxu0 0.0
    %3684 = vmatprep.subr.mxu0 0.0
    %3685 = vmatpush1.msra.mxu0 0.0
    %3686 = vmatprep.subr.mxu0 0.0
    %3687 = vmatpush1.msra.mxu0 0.0
    %3688 = vmatprep.subr.mxu0 0.0
    %3689 = vmatpush1.msra.mxu0 0.0
    %3690 = vmatprep.subr.mxu0 0.0
    %3691 = vmatpush1.msra.mxu0 0.0
    %3692 = vmatprep.subr.mxu0 0.0
    %3693 = vmatpush1.msra.mxu0 0.0
    %3694 = vmatprep.subr.mxu0 0.0
    %3695 = vmatpush1.msra.mxu0 0.0
    %3696 = vmatprep.subr.mxu0 0.0
    %3697 = vmatpush1.msra.mxu0 0.0
    %3698 = vmatprep.subr.mxu0 0.0
    %3699 = vmatpush1.msra.mxu0 0.0
    %3700 = vmatprep.subr.mxu0 0.0
    %3701 = vmatpush1.msra.mxu0 0.0
    %3702 = vmatprep.subr.mxu0 0.0
    %3703 = vmatpush1.msra.mxu0 0.0
    %3704 = vmatprep.subr.mxu0 0.0
    %3705 = vmatpush1.msra.mxu0 0.0
    %3706 = vmatprep.subr.mxu0 0.0
    %3707 = vmatpush1.msra.mxu0 0.0
    %3708 = vmatprep.subr.mxu0 0.0
    %3709 = vmatpush1.msra.mxu0 0.0
    %3710 = vmatprep.subr.mxu0 0.0
    %3711 = vmatpush1.msra.mxu0 0.0
    %3712 = vmatprep.subr.mxu0 0.0
    %3713 = vmatpush1.msra.mxu0 0.0
    %3714 = vmatprep.subr.mxu0 0.0
    %3715 = vmatpush1.msra.mxu0 0.0
    %3716 = vmatprep.subr.mxu0 0.0
    %3717 = vmatpush1.msra.mxu0 0.0
    %3718 = vmatprep.subr.mxu0 0.0
    %3719 = vmatpush1.msra.mxu0 0.0
    %3720 = vmatprep.subr.mxu0 0.0
    %3721 = vmatpush1.msra.mxu0 0.0
    %3722 = vmatprep.subr.mxu0 0.0
    %3723 = vmatpush1.msra.mxu0 0.0
    %3724 = vmatprep.subr.mxu0 0.0
    %3725 = vmatpush1.msra.mxu0 0.0
    %3726 = vmatprep.subr.mxu0 0.0
    %3727 = vmatpush1.msra.mxu0 0.0
    %3728 = vmatprep.subr.mxu0 0.0
    %3729 = vmatpush1.msra.mxu0 0.0
    %3730 = vmatprep.subr.mxu0 0.0
    %3731 = vmatpush1.msra.mxu0 0.0
    %3732 = vmatprep.subr.mxu0 0.0
    %3733 = vmatpush1.msra.mxu0 0.0
    %3734 = vmatprep.subr.mxu0 0.0
    %3735 = vmatpush1.msra.mxu0 0.0
    %3736 = vmatprep.mubr.f32.mxu0 0.0
    %3737 = vmatmul.mubr.f32.gmra.mrb[0].mxu0 %v3670
    %v3738 = vpop.f32.mrb[0].mxu0
    %v3739 = vadd.f32 0.0, %v3738
    %v3740 = vpop.f32.mrb[0].mxu0
    %3741 = vdwg.mxu0
    %3742 = vmatprep.subr.mxu0 0.0
    %3743 = vmatpush1.msra.mxu0 %v2685
    %3744 = vmatprep.subr.mxu0 0.0
    %3745 = vmatpush1.msra.mxu0 %v2686
    %3746 = vmatprep.subr.mxu0 0.0
    %3747 = vmatpush1.msra.mxu0 %v2687
    %3748 = vmatprep.subr.mxu0 0.0
    %3749 = vmatpush1.msra.mxu0 %v2688
    %3750 = vmatprep.subr.mxu0 0.0
    %3751 = vmatpush1.msra.mxu0 0.0
    %3752 = vmatprep.subr.mxu0 0.0
    %3753 = vmatpush1.msra.mxu0 0.0
    %3754 = vmatprep.subr.mxu0 0.0
    %3755 = vmatpush1.msra.mxu0 0.0
    %3756 = vmatprep.subr.mxu0 0.0
    %3757 = vmatpush1.msra.mxu0 0.0
    %3758 = vmatprep.subr.mxu0 0.0
    %3759 = vmatpush1.msra.mxu0 0.0
    %3760 = vmatprep.subr.mxu0 0.0
    %3761 = vmatpush1.msra.mxu0 0.0
    %3762 = vmatprep.subr.mxu0 0.0
    %3763 = vmatpush1.msra.mxu0 0.0
    %3764 = vmatprep.subr.mxu0 0.0
    %3765 = vmatpush1.msra.mxu0 0.0
    %3766 = vmatprep.subr.mxu0 0.0
    %3767 = vmatpush1.msra.mxu0 0.0
    %3768 = vmatprep.subr.mxu0 0.0
    %3769 = vmatpush1.msra.mxu0 0.0
    %3770 = vmatprep.subr.mxu0 0.0
    %3771 = vmatpush1.msra.mxu0 0.0
    %3772 = vmatprep.subr.mxu0 0.0
    %3773 = vmatpush1.msra.mxu0 0.0
    %3774 = vmatprep.subr.mxu0 0.0
    %3775 = vmatpush1.msra.mxu0 0.0
    %3776 = vmatprep.subr.mxu0 0.0
    %3777 = vmatpush1.msra.mxu0 0.0
    %3778 = vmatprep.subr.mxu0 0.0
    %3779 = vmatpush1.msra.mxu0 0.0
    %3780 = vmatprep.subr.mxu0 0.0
    %3781 = vmatpush1.msra.mxu0 0.0
    %3782 = vmatprep.subr.mxu0 0.0
    %3783 = vmatpush1.msra.mxu0 0.0
    %3784 = vmatprep.subr.mxu0 0.0
    %3785 = vmatpush1.msra.mxu0 0.0
    %3786 = vmatprep.subr.mxu0 0.0
    %3787 = vmatpush1.msra.mxu0 0.0
    %3788 = vmatprep.subr.mxu0 0.0
    %3789 = vmatpush1.msra.mxu0 0.0
    %3790 = vmatprep.subr.mxu0 0.0
    %3791 = vmatpush1.msra.mxu0 0.0
    %3792 = vmatprep.subr.mxu0 0.0
    %3793 = vmatpush1.msra.mxu0 0.0
    %3794 = vmatprep.subr.mxu0 0.0
    %3795 = vmatpush1.msra.mxu0 0.0
    %3796 = vmatprep.subr.mxu0 0.0
    %3797 = vmatpush1.msra.mxu0 0.0
    %3798 = vmatprep.subr.mxu0 0.0
    %3799 = vmatpush1.msra.mxu0 0.0
    %3800 = vmatprep.subr.mxu0 0.0
    %3801 = vmatpush1.msra.mxu0 0.0
    %3802 = vmatprep.subr.mxu0 0.0
    %3803 = vmatpush1.msra.mxu0 0.0
    %3804 = vmatprep.subr.mxu0 0.0
    %3805 = vmatpush1.msra.mxu0 0.0
    %3806 = vmatprep.mubr.f32.mxu0 0.0
    %3807 = vmatmul.mubr.f32.gmra.mrb[0].mxu0 %v3670
    %v3808 = vpop.f32.mrb[0].mxu0
    %v3809 = vadd.f32 0.0, %v3808
    %v3810 = vpop.f32.mrb[0].mxu0
    %3811 = vdwg.mxu0
    %3812 = vmatprep.subr.mxu0 0.0
    %3813 = vmatpush1.msra.mxu0 %v2690
    %3814 = vmatprep.subr.mxu0 0.0
    %3815 = vmatpush1.msra.mxu0 %v2691
    %3816 = vmatprep.subr.mxu0 0.0
    %3817 = vmatpush1.msra.mxu0 %v2692
    %3818 = vmatprep.subr.mxu0 0.0
    %3819 = vmatpush1.msra.mxu0 %v2693
    %3820 = vmatprep.subr.mxu0 0.0
    %3821 = vmatpush1.msra.mxu0 0.0
    %3822 = vmatprep.subr.mxu0 0.0
    %3823 = vmatpush1.msra.mxu0 0.0
    %3824 = vmatprep.subr.mxu0 0.0
    %3825 = vmatpush1.msra.mxu0 0.0
    %3826 = vmatprep.subr.mxu0 0.0
    %3827 = vmatpush1.msra.mxu0 0.0
    %3828 = vmatprep.subr.mxu0 0.0
    %3829 = vmatpush1.msra.mxu0 0.0
    %3830 = vmatprep.subr.mxu0 0.0
    %3831 = vmatpush1.msra.mxu0 0.0
    %3832 = vmatprep.subr.mxu0 0.0
    %3833 = vmatpush1.msra.mxu0 0.0
    %3834 = vmatprep.subr.mxu0 0.0
    %3835 = vmatpush1.msra.mxu0 0.0
    %3836 = vmatprep.subr.mxu0 0.0
    %3837 = vmatpush1.msra.mxu0 0.0
    %3838 = vmatprep.subr.mxu0 0.0
    %3839 = vmatpush1.msra.mxu0 0.0
    %3840 = vmatprep.subr.mxu0 0.0
    %3841 = vmatpush1.msra.mxu0 0.0
    %3842 = vmatprep.subr.mxu0 0.0
    %3843 = vmatpush1.msra.mxu0 0.0
    %3844 = vmatprep.subr.mxu0 0.0
    %3845 = vmatpush1.msra.mxu0 0.0
    %3846 = vmatprep.subr.mxu0 0.0
    %3847 = vmatpush1.msra.mxu0 0.0
    %3848 = vmatprep.subr.mxu0 0.0
    %3849 = vmatpush1.msra.mxu0 0.0
    %3850 = vmatprep.subr.mxu0 0.0
    %3851 = vmatpush1.msra.mxu0 0.0
    %3852 = vmatprep.subr.mxu0 0.0
    %3853 = vmatpush1.msra.mxu0 0.0
    %3854 = vmatprep.subr.mxu0 0.0
    %3855 = vmatpush1.msra.mxu0 0.0
    %3856 = vmatprep.subr.mxu0 0.0
    %3857 = vmatpush1.msra.mxu0 0.0
    %3858 = vmatprep.subr.mxu0 0.0
    %3859 = vmatpush1.msra.mxu0 0.0
    %3860 = vmatprep.subr.mxu0 0.0
    %3861 = vmatpush1.msra.mxu0 0.0
    %3862 = vmatprep.subr.mxu0 0.0
    %3863 = vmatpush1.msra.mxu0 0.0
    %3864 = vmatprep.subr.mxu0 0.0
    %3865 = vmatpush1.msra.mxu0 0.0
    %3866 = vmatprep.subr.mxu0 0.0
    %3867 = vmatpush1.msra.mxu0 0.0
    %3868 = vmatprep.subr.mxu0 0.0
    %3869 = vmatpush1.msra.mxu0 0.0
    %3870 = vmatprep.subr.mxu0 0.0
    %3871 = vmatpush1.msra.mxu0 0.0
    %3872 = vmatprep.subr.mxu0 0.0
    %3873 = vmatpush1.msra.mxu0 0.0
    %3874 = vmatprep.subr.mxu0 0.0
    %3875 = vmatpush1.msra.mxu0 0.0
    %3876 = vmatprep.mubr.f32.mxu0 0.0
    %3877 = vmatmul.mubr.f32.gmra.mrb[0].mxu0 %v3670
    %v3878 = vpop.f32.mrb[0].mxu0
    %v3879 = vadd.f32 %v2695, %v3878
    %v3880 = vpop.f32.mrb[0].mxu0
    %3881 = vdwg.mxu0
    %v3883 = vrot.slane %v3739, 4
    %v3885 = vadd.f32 %v2504, %v3883
    %v3886 = vxor.u32 %v3885, 2147483648
    %v3887 = vmul.f32 %v3886, 1.442695
    %v3888 = vpow.pop %v3887
    %v3889 = vadd.f32 %v3888, 1.0
    %v3890 = vrcp.pop %v3889
    %v3891 = vmul.f32 1.0, %v3890
    %v3893 = vrot.slane %v3809, 4
    %v3895 = vadd.f32 %v2596, %v3893
    %v3896 = vxor.u32 %v3895, 2147483648
    %v3897 = vmul.f32 %v3896, 1.442695
    %v3898 = vpow.pop %v3897
    %v3899 = vadd.f32 %v3898, 1.0
    %v3900 = vrcp.pop %v3899
    %v3901 = vmul.f32 1.0, %v3900
    %v3903 = vrot.slane %v3879, 4
    %v3905 = vmul.f32 %v3891, %v3903
    %v3906 = vadd.f32 %v2677, %v3905
    %v3907 = vtanh.pop %v3906
    %v3908 = vsub.f32 1.0, %v3901
    %v3909 = vmul.f32 %v3908, %v3907
    %v3910 = vrot.slane %v3667, 7
    %v3912 = vmul.f32 %v3901, %v3910
    %v3913 = vadd.f32 %v3909, %v3912
    %v3915 = vrot.slane %v3913, 4
    %v3916 = vsel %vm443, %v3915, 0
    %3918 = vmatprep.subr.mxu0 0.0
    %3919 = vmatpush1.msra.mxu0 %v2680
    %3920 = vmatprep.subr.mxu0 0.0
    %3921 = vmatpush1.msra.mxu0 %v2681
    %3922 = vmatprep.subr.mxu0 0.0
    %3923 = vmatpush1.msra.mxu0 %v2682
    %3924 = vmatprep.subr.mxu0 0.0
    %3925 = vmatpush1.msra.mxu0 %v2683
    %3926 = vmatprep.subr.mxu0 0.0
    %3927 = vmatpush1.msra.mxu0 0.0
    %3928 = vmatprep.subr.mxu0 0.0
    %3929 = vmatpush1.msra.mxu0 0.0
    %3930 = vmatprep.subr.mxu0 0.0
    %3931 = vmatpush1.msra.mxu0 0.0
    %3932 = vmatprep.subr.mxu0 0.0
    %3933 = vmatpush1.msra.mxu0 0.0
    %3934 = vmatprep.subr.mxu0 0.0
    %3935 = vmatpush1.msra.mxu0 0.0
    %3936 = vmatprep.subr.mxu0 0.0
    %3937 = vmatpush1.msra.mxu0 0.0
    %3938 = vmatprep.subr.mxu0 0.0
    %3939 = vmatpush1.msra.mxu0 0.0
    %3940 = vmatprep.subr.mxu0 0.0
    %3941 = vmatpush1.msra.mxu0 0.0
    %3942 = vmatprep.subr.mxu0 0.0
    %3943 = vmatpush1.msra.mxu0 0.0
    %3944 = vmatprep.subr.mxu0 0.0
    %3945 = vmatpush1.msra.mxu0 0.0
    %3946 = vmatprep.subr.mxu0 0.0
    %3947 = vmatpush1.msra.mxu0 0.0
    %3948 = vmatprep.subr.mxu0 0.0
    %3949 = vmatpush1.msra.mxu0 0.0
    %3950 = vmatprep.subr.mxu0 0.0
    %3951 = vmatpush1.msra.mxu0 0.0
    %3952 = vmatprep.subr.mxu0 0.0
    %3953 = vmatpush1.msra.mxu0 0.0
    %3954 = vmatprep.subr.mxu0 0.0
    %3955 = vmatpush1.msra.mxu0 0.0
    %3956 = vmatprep.subr.mxu0 0.0
    %3957 = vmatpush1.msra.mxu0 0.0
    %3958 = vmatprep.subr.mxu0 0.0
    %3959 = vmatpush1.msra.mxu0 0.0
    %3960 = vmatprep.subr.mxu0 0.0
    %3961 = vmatpush1.msra.mxu0 0.0
    %3962 = vmatprep.subr.mxu0 0.0
    %3963 = vmatpush1.msra.mxu0 0.0
    %3964 = vmatprep.subr.mxu0 0.0
    %3965 = vmatpush1.msra.mxu0 0.0
    %3966 = vmatprep.subr.mxu0 0.0
    %3967 = vmatpush1.msra.mxu0 0.0
    %3968 = vmatprep.subr.mxu0 0.0
    %3969 = vmatpush1.msra.mxu0 0.0
    %3970 = vmatprep.subr.mxu0 0.0
    %3971 = vmatpush1.msra.mxu0 0.0
    %3972 = vmatprep.subr.mxu0 0.0
    %3973 = vmatpush1.msra.mxu0 0.0
    %3974 = vmatprep.subr.mxu0 0.0
    %3975 = vmatpush1.msra.mxu0 0.0
    %3976 = vmatprep.subr.mxu0 0.0
    %3977 = vmatpush1.msra.mxu0 0.0
    %3978 = vmatprep.subr.mxu0 0.0
    %3979 = vmatpush1.msra.mxu0 0.0
    %3980 = vmatprep.subr.mxu0 0.0
    %3981 = vmatpush1.msra.mxu0 0.0
    %3982 = vmatprep.mubr.f32.mxu0 0.0
    %3983 = vmatmul.mubr.f32.gmra.mrb[0].mxu0 %v3916
    %v3984 = vpop.f32.mrb[0].mxu0
    %v3985 = vadd.f32 0.0, %v3984
    %v3986 = vpop.f32.mrb[0].mxu0
    %3987 = vdwg.mxu0
    %3988 = vmatprep.subr.mxu0 0.0
    %3989 = vmatpush1.msra.mxu0 %v2685
    %3990 = vmatprep.subr.mxu0 0.0
    %3991 = vmatpush1.msra.mxu0 %v2686
    %3992 = vmatprep.subr.mxu0 0.0
    %3993 = vmatpush1.msra.mxu0 %v2687
    %3994 = vmatprep.subr.mxu0 0.0
    %3995 = vmatpush1.msra.mxu0 %v2688
    %3996 = vmatprep.subr.mxu0 0.0
    %3997 = vmatpush1.msra.mxu0 0.0
    %3998 = vmatprep.subr.mxu0 0.0
    %3999 = vmatpush1.msra.mxu0 0.0
    %4000 = vmatprep.subr.mxu0 0.0
    %4001 = vmatpush1.msra.mxu0 0.0
    %4002 = vmatprep.subr.mxu0 0.0
    %4003 = vmatpush1.msra.mxu0 0.0
    %4004 = vmatprep.subr.mxu0 0.0
    %4005 = vmatpush1.msra.mxu0 0.0
    %4006 = vmatprep.subr.mxu0 0.0
    %4007 = vmatpush1.msra.mxu0 0.0
    %4008 = vmatprep.subr.mxu0 0.0
    %4009 = vmatpush1.msra.mxu0 0.0
    %4010 = vmatprep.subr.mxu0 0.0
    %4011 = vmatpush1.msra.mxu0 0.0
    %4012 = vmatprep.subr.mxu0 0.0
    %4013 = vmatpush1.msra.mxu0 0.0
    %4014 = vmatprep.subr.mxu0 0.0
    %4015 = vmatpush1.msra.mxu0 0.0
    %4016 = vmatprep.subr.mxu0 0.0
    %4017 = vmatpush1.msra.mxu0 0.0
    %4018 = vmatprep.subr.mxu0 0.0
    %4019 = vmatpush1.msra.mxu0 0.0
    %4020 = vmatprep.subr.mxu0 0.0
    %4021 = vmatpush1.msra.mxu0 0.0
    %4022 = vmatprep.subr.mxu0 0.0
    %4023 = vmatpush1.msra.mxu0 0.0
    %4024 = vmatprep.subr.mxu0 0.0
    %4025 = vmatpush1.msra.mxu0 0.0
    %4026 = vmatprep.subr.mxu0 0.0
    %4027 = vmatpush1.msra.mxu0 0.0
    %4028 = vmatprep.subr.mxu0 0.0
    %4029 = vmatpush1.msra.mxu0 0.0
    %4030 = vmatprep.subr.mxu0 0.0
    %4031 = vmatpush1.msra.mxu0 0.0
    %4032 = vmatprep.subr.mxu0 0.0
    %4033 = vmatpush1.msra.mxu0 0.0
    %4034 = vmatprep.subr.mxu0 0.0
    %4035 = vmatpush1.msra.mxu0 0.0
    %4036 = vmatprep.subr.mxu0 0.0
    %4037 = vmatpush1.msra.mxu0 0.0
    %4038 = vmatprep.subr.mxu0 0.0
    %4039 = vmatpush1.msra.mxu0 0.0
    %4040 = vmatprep.subr.mxu0 0.0
    %4041 = vmatpush1.msra.mxu0 0.0
    %4042 = vmatprep.subr.mxu0 0.0
    %4043 = vmatpush1.msra.mxu0 0.0
    %4044 = vmatprep.subr.mxu0 0.0
    %4045 = vmatpush1.msra.mxu0 0.0
    %4046 = vmatprep.subr.mxu0 0.0
    %4047 = vmatpush1.msra.mxu0 0.0
    %4048 = vmatprep.subr.mxu0 0.0
    %4049 = vmatpush1.msra.mxu0 0.0
    %4050 = vmatprep.subr.mxu0 0.0
    %4051 = vmatpush1.msra.mxu0 0.0
    %4052 = vmatprep.mubr.f32.mxu0 0.0
    %4053 = vmatmul.mubr.f32.gmra.mrb[0].mxu0 %v3916
    %v4054 = vpop.f32.mrb[0].mxu0
    %v4055 = vadd.f32 0.0, %v4054
    %v4056 = vpop.f32.mrb[0].mxu0
    %4057 = vdwg.mxu0
    %4058 = vmatprep.subr.mxu0 0.0
    %4059 = vmatpush1.msra.mxu0 %v2690
    %4060 = vmatprep.subr.mxu0 0.0
    %4061 = vmatpush1.msra.mxu0 %v2691
    %4062 = vmatprep.subr.mxu0 0.0
    %4063 = vmatpush1.msra.mxu0 %v2692
    %4064 = vmatprep.subr.mxu0 0.0
    %4065 = vmatpush1.msra.mxu0 %v2693
    %4066 = vmatprep.subr.mxu0 0.0
    %4067 = vmatpush1.msra.mxu0 0.0
    %4068 = vmatprep.subr.mxu0 0.0
    %4069 = vmatpush1.msra.mxu0 0.0
    %4070 = vmatprep.subr.mxu0 0.0
    %4071 = vmatpush1.msra.mxu0 0.0
    %4072 = vmatprep.subr.mxu0 0.0
    %4073 = vmatpush1.msra.mxu0 0.0
    %4074 = vmatprep.subr.mxu0 0.0
    %4075 = vmatpush1.msra.mxu0 0.0
    %4076 = vmatprep.subr.mxu0 0.0
    %4077 = vmatpush1.msra.mxu0 0.0
    %4078 = vmatprep.subr.mxu0 0.0
    %4079 = vmatpush1.msra.mxu0 0.0
    %4080 = vmatprep.subr.mxu0 0.0
    %4081 = vmatpush1.msra.mxu0 0.0
    %4082 = vmatprep.subr.mxu0 0.0
    %4083 = vmatpush1.msra.mxu0 0.0
    %4084 = vmatprep.subr.mxu0 0.0
    %4085 = vmatpush1.msra.mxu0 0.0
    %4086 = vmatprep.subr.mxu0 0.0
    %4087 = vmatpush1.msra.mxu0 0.0
    %4088 = vmatprep.subr.mxu0 0.0
    %4089 = vmatpush1.msra.mxu0 0.0
    %4090 = vmatprep.subr.mxu0 0.0
    %4091 = vmatpush1.msra.mxu0 0.0
    %4092 = vmatprep.subr.mxu0 0.0
    %4093 = vmatpush1.msra.mxu0 0.0
    %4094 = vmatprep.subr.mxu0 0.0
    %4095 = vmatpush1.msra.mxu0 0.0
    %4096 = vmatprep.subr.mxu0 0.0
    %4097 = vmatpush1.msra.mxu0 0.0
    %4098 = vmatprep.subr.mxu0 0.0
    %4099 = vmatpush1.msra.mxu0 0.0
    %4100 = vmatprep.subr.mxu0 0.0
    %4101 = vmatpush1.msra.mxu0 0.0
    %4102 = vmatprep.subr.mxu0 0.0
    %4103 = vmatpush1.msra.mxu0 0.0
    %4104 = vmatprep.subr.mxu0 0.0
    %4105 = vmatpush1.msra.mxu0 0.0
    %4106 = vmatprep.subr.mxu0 0.0
    %4107 = vmatpush1.msra.mxu0 0.0
    %4108 = vmatprep.subr.mxu0 0.0
    %4109 = vmatpush1.msra.mxu0 0.0
    %4110 = vmatprep.subr.mxu0 0.0
    %4111 = vmatpush1.msra.mxu0 0.0
    %4112 = vmatprep.subr.mxu0 0.0
    %4113 = vmatpush1.msra.mxu0 0.0
    %4114 = vmatprep.subr.mxu0 0.0
    %4115 = vmatpush1.msra.mxu0 0.0
    %4116 = vmatprep.subr.mxu0 0.0
    %4117 = vmatpush1.msra.mxu0 0.0
    %4118 = vmatprep.subr.mxu0 0.0
    %4119 = vmatpush1.msra.mxu0 0.0
    %4120 = vmatprep.subr.mxu0 0.0
    %4121 = vmatpush1.msra.mxu0 0.0
    %4122 = vmatprep.mubr.f32.mxu0 0.0
    %4123 = vmatmul.mubr.f32.gmra.mrb[0].mxu0 %v3916
    %v4124 = vpop.f32.mrb[0].mxu0
    %v4125 = vadd.f32 %v2695, %v4124
    %v4126 = vpop.f32.mrb[0].mxu0
    %4127 = vdwg.mxu0
    %v4129 = vrot.slane %v3985, 3
    %v4131 = vadd.f32 %v2504, %v4129
    %v4132 = vxor.u32 %v4131, 2147483648
    %v4133 = vmul.f32 %v4132, 1.442695
    %v4134 = vpow.pop %v4133
    %v4135 = vadd.f32 %v4134, 1.0
    %v4136 = vrcp.pop %v4135
    %v4137 = vmul.f32 1.0, %v4136
    %v4139 = vrot.slane %v4055, 3
    %v4141 = vadd.f32 %v2596, %v4139
    %v4142 = vxor.u32 %v4141, 2147483648
    %v4143 = vmul.f32 %v4142, 1.442695
    %v4144 = vpow.pop %v4143
    %v4145 = vadd.f32 %v4144, 1.0
    %v4146 = vrcp.pop %v4145
    %v4147 = vmul.f32 1.0, %v4146
    %v4149 = vrot.slane %v4125, 3
    %v4151 = vmul.f32 %v4137, %v4149
    %v4152 = vadd.f32 %v2677, %v4151
    %v4153 = vtanh.pop %v4152
    %v4154 = vsub.f32 1.0, %v4147
    %v4155 = vmul.f32 %v4154, %v4153
    %v4156 = vrot.slane %v3913, 7
    %v4158 = vmul.f32 %v4147, %v4156
    %v4159 = vadd.f32 %v4155, %v4158
    %v4161 = vrot.slane %v4159, 5
    %v4162 = vsel %vm443, %v4161, 0
    %4164 = vmatprep.subr.mxu0 0.0
    %4165 = vmatpush1.msra.mxu0 %v2680
    %4166 = vmatprep.subr.mxu0 0.0
    %4167 = vmatpush1.msra.mxu0 %v2681
    %4168 = vmatprep.subr.mxu0 0.0
    %4169 = vmatpush1.msra.mxu0 %v2682
    %4170 = vmatprep.subr.mxu0 0.0
    %4171 = vmatpush1.msra.mxu0 %v2683
    %4172 = vmatprep.subr.mxu0 0.0
    %4173 = vmatpush1.msra.mxu0 0.0
    %4174 = vmatprep.subr.mxu0 0.0
    %4175 = vmatpush1.msra.mxu0 0.0
    %4176 = vmatprep.subr.mxu0 0.0
    %4177 = vmatpush1.msra.mxu0 0.0
    %4178 = vmatprep.subr.mxu0 0.0
    %4179 = vmatpush1.msra.mxu0 0.0
    %4180 = vmatprep.subr.mxu0 0.0
    %4181 = vmatpush1.msra.mxu0 0.0
    %4182 = vmatprep.subr.mxu0 0.0
    %4183 = vmatpush1.msra.mxu0 0.0
    %4184 = vmatprep.subr.mxu0 0.0
    %4185 = vmatpush1.msra.mxu0 0.0
    %4186 = vmatprep.subr.mxu0 0.0
    %4187 = vmatpush1.msra.mxu0 0.0
    %4188 = vmatprep.subr.mxu0 0.0
    %4189 = vmatpush1.msra.mxu0 0.0
    %4190 = vmatprep.subr.mxu0 0.0
    %4191 = vmatpush1.msra.mxu0 0.0
    %4192 = vmatprep.subr.mxu0 0.0
    %4193 = vmatpush1.msra.mxu0 0.0
    %4194 = vmatprep.subr.mxu0 0.0
    %4195 = vmatpush1.msra.mxu0 0.0
    %4196 = vmatprep.subr.mxu0 0.0
    %4197 = vmatpush1.msra.mxu0 0.0
    %4198 = vmatprep.subr.mxu0 0.0
    %4199 = vmatpush1.msra.mxu0 0.0
    %4200 = vmatprep.subr.mxu0 0.0
    %4201 = vmatpush1.msra.mxu0 0.0
    %4202 = vmatprep.subr.mxu0 0.0
    %4203 = vmatpush1.msra.mxu0 0.0
    %4204 = vmatprep.subr.mxu0 0.0
    %4205 = vmatpush1.msra.mxu0 0.0
    %4206 = vmatprep.subr.mxu0 0.0
    %4207 = vmatpush1.msra.mxu0 0.0
    %4208 = vmatprep.subr.mxu0 0.0
    %4209 = vmatpush1.msra.mxu0 0.0
    %4210 = vmatprep.subr.mxu0 0.0
    %4211 = vmatpush1.msra.mxu0 0.0
    %4212 = vmatprep.subr.mxu0 0.0
    %4213 = vmatpush1.msra.mxu0 0.0
    %4214 = vmatprep.subr.mxu0 0.0
    %4215 = vmatpush1.msra.mxu0 0.0
    %4216 = vmatprep.subr.mxu0 0.0
    %4217 = vmatpush1.msra.mxu0 0.0
    %4218 = vmatprep.subr.mxu0 0.0
    %4219 = vmatpush1.msra.mxu0 0.0
    %4220 = vmatprep.subr.mxu0 0.0
    %4221 = vmatpush1.msra.mxu0 0.0
    %4222 = vmatprep.subr.mxu0 0.0
    %4223 = vmatpush1.msra.mxu0 0.0
    %4224 = vmatprep.subr.mxu0 0.0
    %4225 = vmatpush1.msra.mxu0 0.0
    %4226 = vmatprep.subr.mxu0 0.0
    %4227 = vmatpush1.msra.mxu0 0.0
    %4228 = vmatprep.mubr.f32.mxu0 0.0
    %4229 = vmatmul.mubr.f32.gmra.mrb[0].mxu0 %v4162
    %v4230 = vpop.f32.mrb[0].mxu0
    %v4231 = vadd.f32 0.0, %v4230
    %v4232 = vpop.f32.mrb[0].mxu0
    %4233 = vdwg.mxu0
    %4234 = vmatprep.subr.mxu0 0.0
    %4235 = vmatpush1.msra.mxu0 %v2685
    %4236 = vmatprep.subr.mxu0 0.0
    %4237 = vmatpush1.msra.mxu0 %v2686
    %4238 = vmatprep.subr.mxu0 0.0
    %4239 = vmatpush1.msra.mxu0 %v2687
    %4240 = vmatprep.subr.mxu0 0.0
    %4241 = vmatpush1.msra.mxu0 %v2688
    %4242 = vmatprep.subr.mxu0 0.0
    %4243 = vmatpush1.msra.mxu0 0.0
    %4244 = vmatprep.subr.mxu0 0.0
    %4245 = vmatpush1.msra.mxu0 0.0
    %4246 = vmatprep.subr.mxu0 0.0
    %4247 = vmatpush1.msra.mxu0 0.0
    %4248 = vmatprep.subr.mxu0 0.0
    %4249 = vmatpush1.msra.mxu0 0.0
    %4250 = vmatprep.subr.mxu0 0.0
    %4251 = vmatpush1.msra.mxu0 0.0
    %4252 = vmatprep.subr.mxu0 0.0
    %4253 = vmatpush1.msra.mxu0 0.0
    %4254 = vmatprep.subr.mxu0 0.0
    %4255 = vmatpush1.msra.mxu0 0.0
    %4256 = vmatprep.subr.mxu0 0.0
    %4257 = vmatpush1.msra.mxu0 0.0
    %4258 = vmatprep.subr.mxu0 0.0
    %4259 = vmatpush1.msra.mxu0 0.0
    %4260 = vmatprep.subr.mxu0 0.0
    %4261 = vmatpush1.msra.mxu0 0.0
    %4262 = vmatprep.subr.mxu0 0.0
    %4263 = vmatpush1.msra.mxu0 0.0
    %4264 = vmatprep.subr.mxu0 0.0
    %4265 = vmatpush1.msra.mxu0 0.0
    %4266 = vmatprep.subr.mxu0 0.0
    %4267 = vmatpush1.msra.mxu0 0.0
    %4268 = vmatprep.subr.mxu0 0.0
    %4269 = vmatpush1.msra.mxu0 0.0
    %4270 = vmatprep.subr.mxu0 0.0
    %4271 = vmatpush1.msra.mxu0 0.0
    %4272 = vmatprep.subr.mxu0 0.0
    %4273 = vmatpush1.msra.mxu0 0.0
    %4274 = vmatprep.subr.mxu0 0.0
    %4275 = vmatpush1.msra.mxu0 0.0
    %4276 = vmatprep.subr.mxu0 0.0
    %4277 = vmatpush1.msra.mxu0 0.0
    %4278 = vmatprep.subr.mxu0 0.0
    %4279 = vmatpush1.msra.mxu0 0.0
    %4280 = vmatprep.subr.mxu0 0.0
    %4281 = vmatpush1.msra.mxu0 0.0
    %4282 = vmatprep.subr.mxu0 0.0
    %4283 = vmatpush1.msra.mxu0 0.0
    %4284 = vmatprep.subr.mxu0 0.0
    %4285 = vmatpush1.msra.mxu0 0.0
    %4286 = vmatprep.subr.mxu0 0.0
    %4287 = vmatpush1.msra.mxu0 0.0
    %4288 = vmatprep.subr.mxu0 0.0
    %4289 = vmatpush1.msra.mxu0 0.0
    %4290 = vmatprep.subr.mxu0 0.0
    %4291 = vmatpush1.msra.mxu0 0.0
    %4292 = vmatprep.subr.mxu0 0.0
    %4293 = vmatpush1.msra.mxu0 0.0
    %4294 = vmatprep.subr.mxu0 0.0
    %4295 = vmatpush1.msra.mxu0 0.0
    %4296 = vmatprep.subr.mxu0 0.0
    %4297 = vmatpush1.msra.mxu0 0.0
    %4298 = vmatprep.mubr.f32.mxu0 0.0
    %4299 = vmatmul.mubr.f32.gmra.mrb[0].mxu0 %v4162
    %v4300 = vpop.f32.mrb[0].mxu0
    %v4301 = vadd.f32 0.0, %v4300
    %v4302 = vpop.f32.mrb[0].mxu0
    %4303 = vdwg.mxu0
    %4304 = vmatprep.subr.mxu0 0.0
    %4305 = vmatpush1.msra.mxu0 %v2690
    %4306 = vmatprep.subr.mxu0 0.0
    %4307 = vmatpush1.msra.mxu0 %v2691
    %4308 = vmatprep.subr.mxu0 0.0
    %4309 = vmatpush1.msra.mxu0 %v2692
    %4310 = vmatprep.subr.mxu0 0.0
    %4311 = vmatpush1.msra.mxu0 %v2693
    %4312 = vmatprep.subr.mxu0 0.0
    %4313 = vmatpush1.msra.mxu0 0.0
    %4314 = vmatprep.subr.mxu0 0.0
    %4315 = vmatpush1.msra.mxu0 0.0
    %4316 = vmatprep.subr.mxu0 0.0
    %4317 = vmatpush1.msra.mxu0 0.0
    %4318 = vmatprep.subr.mxu0 0.0
    %4319 = vmatpush1.msra.mxu0 0.0
    %4320 = vmatprep.subr.mxu0 0.0
    %4321 = vmatpush1.msra.mxu0 0.0
    %4322 = vmatprep.subr.mxu0 0.0
    %4323 = vmatpush1.msra.mxu0 0.0
    %4324 = vmatprep.subr.mxu0 0.0
    %4325 = vmatpush1.msra.mxu0 0.0
    %4326 = vmatprep.subr.mxu0 0.0
    %4327 = vmatpush1.msra.mxu0 0.0
    %4328 = vmatprep.subr.mxu0 0.0
    %4329 = vmatpush1.msra.mxu0 0.0
    %4330 = vmatprep.subr.mxu0 0.0
    %4331 = vmatpush1.msra.mxu0 0.0
    %4332 = vmatprep.subr.mxu0 0.0
    %4333 = vmatpush1.msra.mxu0 0.0
    %4334 = vmatprep.subr.mxu0 0.0
    %4335 = vmatpush1.msra.mxu0 0.0
    %4336 = vmatprep.subr.mxu0 0.0
    %4337 = vmatpush1.msra.mxu0 0.0
    %4338 = vmatprep.subr.mxu0 0.0
    %4339 = vmatpush1.msra.mxu0 0.0
    %4340 = vmatprep.subr.mxu0 0.0
    %4341 = vmatpush1.msra.mxu0 0.0
    %4342 = vmatprep.subr.mxu0 0.0
    %4343 = vmatpush1.msra.mxu0 0.0
    %4344 = vmatprep.subr.mxu0 0.0
    %4345 = vmatpush1.msra.mxu0 0.0
    %4346 = vmatprep.subr.mxu0 0.0
    %4347 = vmatpush1.msra.mxu0 0.0
    %4348 = vmatprep.subr.mxu0 0.0
    %4349 = vmatpush1.msra.mxu0 0.0
    %4350 = vmatprep.subr.mxu0 0.0
    %4351 = vmatpush1.msra.mxu0 0.0
    %4352 = vmatprep.subr.mxu0 0.0
    %4353 = vmatpush1.msra.mxu0 0.0
    %4354 = vmatprep.subr.mxu0 0.0
    %4355 = vmatpush1.msra.mxu0 0.0
    %4356 = vmatprep.subr.mxu0 0.0
    %4357 = vmatpush1.msra.mxu0 0.0
    %4358 = vmatprep.subr.mxu0 0.0
    %4359 = vmatpush1.msra.mxu0 0.0
    %4360 = vmatprep.subr.mxu0 0.0
    %4361 = vmatpush1.msra.mxu0 0.0
    %4362 = vmatprep.subr.mxu0 0.0
    %4363 = vmatpush1.msra.mxu0 0.0
    %4364 = vmatprep.subr.mxu0 0.0
    %4365 = vmatpush1.msra.mxu0 0.0
    %4366 = vmatprep.subr.mxu0 0.0
    %4367 = vmatpush1.msra.mxu0 0.0
    %4368 = vmatprep.mubr.f32.mxu0 0.0
    %4369 = vmatmul.mubr.f32.gmra.mrb[0].mxu0 %v4162
    %v4370 = vpop.f32.mrb[0].mxu0
    %v4371 = vadd.f32 %v2695, %v4370
    %v4372 = vpop.f32.mrb[0].mxu0
    %4373 = vdwg.mxu0
    %v4375 = vrot.slane %v4231, 2
    %v4377 = vadd.f32 %v2504, %v4375
    %v4378 = vxor.u32 %v4377, 2147483648
    %v4379 = vmul.f32 %v4378, 1.442695
    %v4380 = vpow.pop %v4379
    %v4381 = vadd.f32 %v4380, 1.0
    %v4382 = vrcp.pop %v4381
    %v4383 = vmul.f32 1.0, %v4382
    %v4385 = vrot.slane %v4301, 2
    %v4387 = vadd.f32 %v2596, %v4385
    %v4388 = vxor.u32 %v4387, 2147483648
    %v4389 = vmul.f32 %v4388, 1.442695
    %v4390 = vpow.pop %v4389
    %v4391 = vadd.f32 %v4390, 1.0
    %v4392 = vrcp.pop %v4391
    %v4393 = vmul.f32 1.0, %v4392
    %v4395 = vrot.slane %v4371, 2
    %v4397 = vmul.f32 %v4383, %v4395
    %v4398 = vadd.f32 %v2677, %v4397
    %v4399 = vtanh.pop %v4398
    %v4400 = vsub.f32 1.0, %v4393
    %v4401 = vmul.f32 %v4400, %v4399
    %v4402 = vrot.slane %v4159, 7
    %v4404 = vmul.f32 %v4393, %v4402
    %v4405 = vadd.f32 %v4401, %v4404
    %v4407 = vrot.slane %v4405, 6
    %v4408 = vsel %vm443, %v4407, 0
    %4410 = vmatprep.subr.mxu0 0.0
    %4411 = vmatpush1.msra.mxu0 %v2680
    %4412 = vmatprep.subr.mxu0 0.0
    %4413 = vmatpush1.msra.mxu0 %v2681
    %4414 = vmatprep.subr.mxu0 0.0
    %4415 = vmatpush1.msra.mxu0 %v2682
    %4416 = vmatprep.subr.mxu0 0.0
    %4417 = vmatpush1.msra.mxu0 %v2683
    %4418 = vmatprep.subr.mxu0 0.0
    %4419 = vmatpush1.msra.mxu0 0.0
    %4420 = vmatprep.subr.mxu0 0.0
    %4421 = vmatpush1.msra.mxu0 0.0
    %4422 = vmatprep.subr.mxu0 0.0
    %4423 = vmatpush1.msra.mxu0 0.0
    %4424 = vmatprep.subr.mxu0 0.0
    %4425 = vmatpush1.msra.mxu0 0.0
    %4426 = vmatprep.subr.mxu0 0.0
    %4427 = vmatpush1.msra.mxu0 0.0
    %4428 = vmatprep.subr.mxu0 0.0
    %4429 = vmatpush1.msra.mxu0 0.0
    %4430 = vmatprep.subr.mxu0 0.0
    %4431 = vmatpush1.msra.mxu0 0.0
    %4432 = vmatprep.subr.mxu0 0.0
    %4433 = vmatpush1.msra.mxu0 0.0
    %4434 = vmatprep.subr.mxu0 0.0
    %4435 = vmatpush1.msra.mxu0 0.0
    %4436 = vmatprep.subr.mxu0 0.0
    %4437 = vmatpush1.msra.mxu0 0.0
    %4438 = vmatprep.subr.mxu0 0.0
    %4439 = vmatpush1.msra.mxu0 0.0
    %4440 = vmatprep.subr.mxu0 0.0
    %4441 = vmatpush1.msra.mxu0 0.0
    %4442 = vmatprep.subr.mxu0 0.0
    %4443 = vmatpush1.msra.mxu0 0.0
    %4444 = vmatprep.subr.mxu0 0.0
    %4445 = vmatpush1.msra.mxu0 0.0
    %4446 = vmatprep.subr.mxu0 0.0
    %4447 = vmatpush1.msra.mxu0 0.0
    %4448 = vmatprep.subr.mxu0 0.0
    %4449 = vmatpush1.msra.mxu0 0.0
    %4450 = vmatprep.subr.mxu0 0.0
    %4451 = vmatpush1.msra.mxu0 0.0
    %4452 = vmatprep.subr.mxu0 0.0
    %4453 = vmatpush1.msra.mxu0 0.0
    %4454 = vmatprep.subr.mxu0 0.0
    %4455 = vmatpush1.msra.mxu0 0.0
    %4456 = vmatprep.subr.mxu0 0.0
    %4457 = vmatpush1.msra.mxu0 0.0
    %4458 = vmatprep.subr.mxu0 0.0
    %4459 = vmatpush1.msra.mxu0 0.0
    %4460 = vmatprep.subr.mxu0 0.0
    %4461 = vmatpush1.msra.mxu0 0.0
    %4462 = vmatprep.subr.mxu0 0.0
    %4463 = vmatpush1.msra.mxu0 0.0
    %4464 = vmatprep.subr.mxu0 0.0
    %4465 = vmatpush1.msra.mxu0 0.0
    %4466 = vmatprep.subr.mxu0 0.0
    %4467 = vmatpush1.msra.mxu0 0.0
    %4468 = vmatprep.subr.mxu0 0.0
    %4469 = vmatpush1.msra.mxu0 0.0
    %4470 = vmatprep.subr.mxu0 0.0
    %4471 = vmatpush1.msra.mxu0 0.0
    %4472 = vmatprep.subr.mxu0 0.0
    %4473 = vmatpush1.msra.mxu0 0.0
    %4474 = vmatprep.mubr.f32.mxu0 0.0
    %4475 = vmatmul.mubr.f32.gmra.mrb[0].mxu0 %v4408
    %v4476 = vpop.f32.mrb[0].mxu0
    %v4477 = vadd.f32 0.0, %v4476
    %v4478 = vpop.f32.mrb[0].mxu0
    %4479 = vdwg.mxu0
    %4480 = vmatprep.subr.mxu0 0.0
    %4481 = vmatpush1.msra.mxu0 %v2685
    %4482 = vmatprep.subr.mxu0 0.0
    %4483 = vmatpush1.msra.mxu0 %v2686
    %4484 = vmatprep.subr.mxu0 0.0
    %4485 = vmatpush1.msra.mxu0 %v2687
    %4486 = vmatprep.subr.mxu0 0.0
    %4487 = vmatpush1.msra.mxu0 %v2688
    %4488 = vmatprep.subr.mxu0 0.0
    %4489 = vmatpush1.msra.mxu0 0.0
    %4490 = vmatprep.subr.mxu0 0.0
    %4491 = vmatpush1.msra.mxu0 0.0
    %4492 = vmatprep.subr.mxu0 0.0
    %4493 = vmatpush1.msra.mxu0 0.0
    %4494 = vmatprep.subr.mxu0 0.0
    %4495 = vmatpush1.msra.mxu0 0.0
    %4496 = vmatprep.subr.mxu0 0.0
    %4497 = vmatpush1.msra.mxu0 0.0
    %4498 = vmatprep.subr.mxu0 0.0
    %4499 = vmatpush1.msra.mxu0 0.0
    %4500 = vmatprep.subr.mxu0 0.0
    %4501 = vmatpush1.msra.mxu0 0.0
    %4502 = vmatprep.subr.mxu0 0.0
    %4503 = vmatpush1.msra.mxu0 0.0
    %4504 = vmatprep.subr.mxu0 0.0
    %4505 = vmatpush1.msra.mxu0 0.0
    %4506 = vmatprep.subr.mxu0 0.0
    %4507 = vmatpush1.msra.mxu0 0.0
    %4508 = vmatprep.subr.mxu0 0.0
    %4509 = vmatpush1.msra.mxu0 0.0
    %4510 = vmatprep.subr.mxu0 0.0
    %4511 = vmatpush1.msra.mxu0 0.0
    %4512 = vmatprep.subr.mxu0 0.0
    %4513 = vmatpush1.msra.mxu0 0.0
    %4514 = vmatprep.subr.mxu0 0.0
    %4515 = vmatpush1.msra.mxu0 0.0
    %4516 = vmatprep.subr.mxu0 0.0
    %4517 = vmatpush1.msra.mxu0 0.0
    %4518 = vmatprep.subr.mxu0 0.0
    %4519 = vmatpush1.msra.mxu0 0.0
    %4520 = vmatprep.subr.mxu0 0.0
    %4521 = vmatpush1.msra.mxu0 0.0
    %4522 = vmatprep.subr.mxu0 0.0
    %4523 = vmatpush1.msra.mxu0 0.0
    %4524 = vmatprep.subr.mxu0 0.0
    %4525 = vmatpush1.msra.mxu0 0.0
    %4526 = vmatprep.subr.mxu0 0.0
    %4527 = vmatpush1.msra.mxu0 0.0
    %4528 = vmatprep.subr.mxu0 0.0
    %4529 = vmatpush1.msra.mxu0 0.0
    %4530 = vmatprep.subr.mxu0 0.0
    %4531 = vmatpush1.msra.mxu0 0.0
    %4532 = vmatprep.subr.mxu0 0.0
    %4533 = vmatpush1.msra.mxu0 0.0
    %4534 = vmatprep.subr.mxu0 0.0
    %4535 = vmatpush1.msra.mxu0 0.0
    %4536 = vmatprep.subr.mxu0 0.0
    %4537 = vmatpush1.msra.mxu0 0.0
    %4538 = vmatprep.subr.mxu0 0.0
    %4539 = vmatpush1.msra.mxu0 0.0
    %4540 = vmatprep.subr.mxu0 0.0
    %4541 = vmatpush1.msra.mxu0 0.0
    %4542 = vmatprep.subr.mxu0 0.0
    %4543 = vmatpush1.msra.mxu0 0.0
    %4544 = vmatprep.mubr.f32.mxu0 0.0
    %4545 = vmatmul.mubr.f32.gmra.mrb[0].mxu0 %v4408
    %v4546 = vpop.f32.mrb[0].mxu0
    %v4547 = vadd.f32 0.0, %v4546
    %v4548 = vpop.f32.mrb[0].mxu0
    %4549 = vdwg.mxu0
    %4550 = vmatprep.subr.mxu0 0.0
    %4551 = vmatpush1.msra.mxu0 %v2690
    %4552 = vmatprep.subr.mxu0 0.0
    %4553 = vmatpush1.msra.mxu0 %v2691
    %4554 = vmatprep.subr.mxu0 0.0
    %4555 = vmatpush1.msra.mxu0 %v2692
    %4556 = vmatprep.subr.mxu0 0.0
    %4557 = vmatpush1.msra.mxu0 %v2693
    %4558 = vmatprep.subr.mxu0 0.0
    %4559 = vmatpush1.msra.mxu0 0.0
    %4560 = vmatprep.subr.mxu0 0.0
    %4561 = vmatpush1.msra.mxu0 0.0
    %4562 = vmatprep.subr.mxu0 0.0
    %4563 = vmatpush1.msra.mxu0 0.0
    %4564 = vmatprep.subr.mxu0 0.0
    %4565 = vmatpush1.msra.mxu0 0.0
    %4566 = vmatprep.subr.mxu0 0.0
    %4567 = vmatpush1.msra.mxu0 0.0
    %4568 = vmatprep.subr.mxu0 0.0
    %4569 = vmatpush1.msra.mxu0 0.0
    %4570 = vmatprep.subr.mxu0 0.0
    %4571 = vmatpush1.msra.mxu0 0.0
    %4572 = vmatprep.subr.mxu0 0.0
    %4573 = vmatpush1.msra.mxu0 0.0
    %4574 = vmatprep.subr.mxu0 0.0
    %4575 = vmatpush1.msra.mxu0 0.0
    %4576 = vmatprep.subr.mxu0 0.0
    %4577 = vmatpush1.msra.mxu0 0.0
    %4578 = vmatprep.subr.mxu0 0.0
    %4579 = vmatpush1.msra.mxu0 0.0
    %4580 = vmatprep.subr.mxu0 0.0
    %4581 = vmatpush1.msra.mxu0 0.0
    %4582 = vmatprep.subr.mxu0 0.0
    %4583 = vmatpush1.msra.mxu0 0.0
    %4584 = vmatprep.subr.mxu0 0.0
    %4585 = vmatpush1.msra.mxu0 0.0
    %4586 = vmatprep.subr.mxu0 0.0
    %4587 = vmatpush1.msra.mxu0 0.0
    %4588 = vmatprep.subr.mxu0 0.0
    %4589 = vmatpush1.msra.mxu0 0.0
    %4590 = vmatprep.subr.mxu0 0.0
    %4591 = vmatpush1.msra.mxu0 0.0
    %4592 = vmatprep.subr.mxu0 0.0
    %4593 = vmatpush1.msra.mxu0 0.0
    %4594 = vmatprep.subr.mxu0 0.0
    %4595 = vmatpush1.msra.mxu0 0.0
    %4596 = vmatprep.subr.mxu0 0.0
    %4597 = vmatpush1.msra.mxu0 0.0
    %4598 = vmatprep.subr.mxu0 0.0
    %4599 = vmatpush1.msra.mxu0 0.0
    %4600 = vmatprep.subr.mxu0 0.0
    %4601 = vmatpush1.msra.mxu0 0.0
    %4602 = vmatprep.subr.mxu0 0.0
    %4603 = vmatpush1.msra.mxu0 0.0
    %4604 = vmatprep.subr.mxu0 0.0
    %4605 = vmatpush1.msra.mxu0 0.0
    %4606 = vmatprep.subr.mxu0 0.0
    %4607 = vmatpush1.msra.mxu0 0.0
    %4608 = vmatprep.subr.mxu0 0.0
    %4609 = vmatpush1.msra.mxu0 0.0
    %4610 = vmatprep.subr.mxu0 0.0
    %4611 = vmatpush1.msra.mxu0 0.0
    %4612 = vmatprep.subr.mxu0 0.0
    %4613 = vmatpush1.msra.mxu0 0.0
    %4614 = vmatprep.mubr.f32.mxu0 0.0
    %4615 = vmatmul.mubr.f32.gmra.mrb[0].mxu0 %v4408
    %v4616 = vpop.f32.mrb[0].mxu0
    %v4617 = vadd.f32 %v2695, %v4616
    %v4618 = vpop.f32.mrb[0].mxu0
    %4619 = vdwg.mxu0
    %v4621 = vrot.slane %v4477, 1
    %v4623 = vadd.f32 %v2504, %v4621
    %v4624 = vxor.u32 %v4623, 2147483648
    %v4625 = vmul.f32 %v4624, 1.442695
    %v4626 = vpow.pop %v4625
    %v4627 = vadd.f32 %v4626, 1.0
    %v4628 = vrcp.pop %v4627
    %v4629 = vmul.f32 1.0, %v4628
    %v4631 = vrot.slane %v4547, 1
    %v4633 = vadd.f32 %v2596, %v4631
    %v4634 = vxor.u32 %v4633, 2147483648
    %v4635 = vmul.f32 %v4634, 1.442695
    %v4636 = vpow.pop %v4635
    %v4637 = vadd.f32 %v4636, 1.0
    %v4638 = vrcp.pop %v4637
    %v4639 = vmul.f32 1.0, %v4638
    %v4641 = vrot.slane %v4617, 1
    %v4643 = vmul.f32 %v4629, %v4641
    %v4644 = vadd.f32 %v2677, %v4643
    %v4645 = vtanh.pop %v4644
    %v4646 = vsub.f32 1.0, %v4639
    %v4647 = vmul.f32 %v4646, %v4645
    %v4648 = vrot.slane %v4405, 7
    %v4650 = vmul.f32 %v4639, %v4648
    %v4651 = vadd.f32 %v4647, %v4650
    %v4652 = vsel %vm2399, %v2930, %v3175
    %v4653 = vsel %vm2401, %v4652, %v3421
    %v4654 = vsel %vm2403, %v4653, %v3667
    %v4655 = vsel %vm2405, %v4654, %v3913
    %v4656 = vsel %vm2407, %v4655, %v4159
    %v4657 = vsel %vm2409, %v4656, %v4405
    %v4658 = vsel %vm2411, %v4657, %v4651
    %v4660 = vrot.slane %v2398, 7
    %v4663 = vrot.slane %v4651, 6
    %v4665 = vsel %vm2399, %v4660, %v4663
    %vm4666 = vcmask 254976
    %4667 = vst.msk [vmem:[#allocation17] sm:$0x3] %vm4666, %v4665
    %v4668 = vld [vmem:[#allocation14] sm:$0xff]
    %v4669 = vld [vmem:[#allocation14 + $0x8] sm:$0xff]
    %v4670 = vld [vmem:[#allocation14 + $0x10] sm:$0xff]
    %v4671 = vld [vmem:[#allocation14 + $0x18] sm:$0xff]
    %v4672 = vld [vmem:[#allocation14 + $0x20] sm:$0xff]
    %v4673 = vld [vmem:[#allocation14 + $0x28] sm:$0xff]
    %v4674 = vld [vmem:[#allocation14 + $0x30] sm:$0xff]
    %v4675 = vld [vmem:[#allocation14 + $0x38] sm:$0xff]
    %v4676 = vld [vmem:[%s11] sm:$0x3]
    %v4678 = vlaneseq
    %v4679 = vshrl.u32 %v4678, 7
    %v4680 = vsub.s32 0, %v4679
    %v4681 = vrot.slane %v4676, %v4680
    %v4682 = vlaneseq
    %v4683 = vshrl.u32 %v4682, 7
    %v4684 = vsub.s32 1, %v4683
    %v4685 = vrot.slane %v4676, %v4684
    %v4689 = vsel %vm443, %v4658, 0
    %4691 = vmatprep.subr.mxu0 %v4669
    %4692 = vmatpush1.msra.mxu0 %v4668
    %4693 = vmatprep.subr.mxu0 %v4671
    %4694 = vmatpush1.msra.mxu0 %v4670
    %4695 = vmatprep.subr.mxu0 %v4673
    %4696 = vmatpush1.msra.mxu0 %v4672
    %4697 = vmatprep.subr.mxu0 %v4675
    %4698 = vmatpush1.msra.mxu0 %v4674
    %4699 = vmatprep.subr.mxu0 0.0
    %4700 = vmatpush1.msra.mxu0 0.0
    %4701 = vmatprep.subr.mxu0 0.0
    %4702 = vmatpush1.msra.mxu0 0.0
    %4703 = vmatprep.subr.mxu0 0.0
    %4704 = vmatpush1.msra.mxu0 0.0
    %4705 = vmatprep.subr.mxu0 0.0
    %4706 = vmatpush1.msra.mxu0 0.0
    %4707 = vmatprep.subr.mxu0 0.0
    %4708 = vmatpush1.msra.mxu0 0.0
    %4709 = vmatprep.subr.mxu0 0.0
    %4710 = vmatpush1.msra.mxu0 0.0
    %4711 = vmatprep.subr.mxu0 0.0
    %4712 = vmatpush1.msra.mxu0 0.0
    %4713 = vmatprep.subr.mxu0 0.0
    %4714 = vmatpush1.msra.mxu0 0.0
    %4715 = vmatprep.subr.mxu0 0.0
    %4716 = vmatpush1.msra.mxu0 0.0
    %4717 = vmatprep.subr.mxu0 0.0
    %4718 = vmatpush1.msra.mxu0 0.0
    %4719 = vmatprep.subr.mxu0 0.0
    %4720 = vmatpush1.msra.mxu0 0.0
    %4721 = vmatprep.subr.mxu0 0.0
    %4722 = vmatpush1.msra.mxu0 0.0
    %4723 = vmatprep.subr.mxu0 0.0
    %4724 = vmatpush1.msra.mxu0 0.0
    %4725 = vmatprep.subr.mxu0 0.0
    %4726 = vmatpush1.msra.mxu0 0.0
    %4727 = vmatprep.subr.mxu0 0.0
    %4728 = vmatpush1.msra.mxu0 0.0
    %4729 = vmatprep.subr.mxu0 0.0
    %4730 = vmatpush1.msra.mxu0 0.0
    %4731 = vmatprep.subr.mxu0 0.0
    %4732 = vmatpush1.msra.mxu0 0.0
    %4733 = vmatprep.subr.mxu0 0.0
    %4734 = vmatpush1.msra.mxu0 0.0
    %4735 = vmatprep.subr.mxu0 0.0
    %4736 = vmatpush1.msra.mxu0 0.0
    %4737 = vmatprep.subr.mxu0 0.0
    %4738 = vmatpush1.msra.mxu0 0.0
    %4739 = vmatprep.subr.mxu0 0.0
    %4740 = vmatpush1.msra.mxu0 0.0
    %4741 = vmatprep.subr.mxu0 0.0
    %4742 = vmatpush1.msra.mxu0 0.0
    %4743 = vmatprep.subr.mxu0 0.0
    %4744 = vmatpush1.msra.mxu0 0.0
    %4745 = vmatprep.subr.mxu0 0.0
    %4746 = vmatpush1.msra.mxu0 0.0
    %4747 = vmatprep.subr.mxu0 0.0
    %4748 = vmatpush1.msra.mxu0 0.0
    %4749 = vmatprep.subr.mxu0 0.0
    %4750 = vmatpush1.msra.mxu0 0.0
    %4751 = vmatprep.subr.mxu0 0.0
    %4752 = vmatpush1.msra.mxu0 0.0
    %4753 = vmatprep.subr.mxu0 0.0
    %4754 = vmatpush1.msra.mxu0 0.0
    %4755 = vmatprep.mubr.f32.mxu0 0.0
    %4756 = vmatmul.mubr.f32.gmra.mrb[0].mxu0 %v4689
    %v4757 = vpop.f32.mrb[0].mxu0
    %v4758 = vadd.f32 %v4681, %v4757
    %v4759 = vpop.f32.mrb[0].mxu0
    %v4760 = vadd.f32 %v4685, %v4759
    %4761 = vdwg.mxu0
    %vm4762 = vcmp.gt.f32.partialorder %v4758, 0.0
    %vm4763 = vcmp.gt.f32.partialorder %v4760, 0.0
    %v4764 = vmin.f32 %v4758, 0.0
    %v4765 = vmin.f32 %v4760, 0.0
    %v4766 = vmul.f32 %v4764, 1.442695
    %v4767 = vpow.pop %v4766
    %v4768 = vmul.f32 %v4765, 1.442695
    %v4769 = vpow.pop %v4768
    %v4770 = vsub.f32 %v4767, 1.0
    %v4771 = vsub.f32 %v4769, 1.0
    %v4772 = vsel %vm4762, %v4758, %v4770
    %v4773 = vsel %vm4763, %v4760, %v4771
    %v4774 = vld [vmem:[#allocation15] sm:$0xff]
    %v4775 = vld [vmem:[#allocation15 + $0x8] sm:$0xff]
    %v4776 = vld [vmem:[#allocation15 + $0x10] sm:$0xff]
    %v4777 = vld [vmem:[#allocation15 + $0x18] sm:$0xff]
    %v4778 = vld [vmem:[#allocation15 + $0x20] sm:$0xff]
    %v4779 = vld [vmem:[#allocation15 + $0x28] sm:$0xff]
    %v4780 = vld [vmem:[#allocation15 + $0x30] sm:$0xff]
    %v4781 = vld [vmem:[#allocation15 + $0x38] sm:$0xff]
    %v4782 = vld [vmem:[#allocation15 + $0x40] sm:$0xff]
    %v4783 = vld [vmem:[#allocation15 + $0x48] sm:$0xff]
    %v4784 = vld [vmem:[#allocation15 + $0x50] sm:$0xff]
    %v4785 = vld [vmem:[#allocation15 + $0x58] sm:$0xff]
    %v4786 = vld [vmem:[#allocation15 + $0x60] sm:$0xff]
    %v4787 = vld [vmem:[#allocation15 + $0x68] sm:$0xff]
    %v4788 = vld [vmem:[#allocation15 + $0x70] sm:$0xff]
    %v4789 = vld [vmem:[#allocation15 + $0x78] sm:$0xff]
    %v4790 = vld [vmem:[#allocation15 + $0x80] sm:$0xff]
    %v4791 = vld [vmem:[#allocation15 + $0x88] sm:$0xff]
    %v4792 = vld [vmem:[#allocation15 + $0x90] sm:$0xff]
    %v4793 = vld [vmem:[#allocation15 + $0x98] sm:$0xff]
    %v4794 = vld [vmem:[#allocation15 + $0xa0] sm:$0xff]
    %v4795 = vld [vmem:[#allocation15 + $0xa8] sm:$0xff]
    %v4796 = vld [vmem:[#allocation15 + $0xb0] sm:$0xff]
    %v4797 = vld [vmem:[#allocation15 + $0xb8] sm:$0xff]
    %v4798 = vld [vmem:[#allocation15 + $0xc0] sm:$0xff]
    %v4799 = vld [vmem:[#allocation15 + $0xc8] sm:$0xff]
    %v4800 = vld [vmem:[#allocation15 + $0xd0] sm:$0xff]
    %v4801 = vld [vmem:[#allocation15 + $0xd8] sm:$0xff]
    %v4802 = vld [vmem:[#allocation15 + $0xe0] sm:$0xff]
    %v4803 = vld [vmem:[#allocation15 + $0xe8] sm:$0xff]
    %v4804 = vld [vmem:[#allocation15 + $0xf0] sm:$0xff]
    %v4805 = vld [vmem:[#allocation15 + $0xf8] sm:$0xff]
    %v4806 = vld [vmem:[#allocation15 + $0x100] sm:$0xff]
    %v4807 = vld [vmem:[#allocation15 + $0x108] sm:$0xff]
    %v4808 = vld [vmem:[#allocation15 + $0x110] sm:$0xff]
    %v4809 = vld [vmem:[#allocation15 + $0x118] sm:$0xff]
    %v4810 = vld [vmem:[#allocation15 + $0x120] sm:$0xff]
    %v4811 = vld [vmem:[#allocation15 + $0x128] sm:$0xff]
    %v4812 = vld [vmem:[#allocation15 + $0x130] sm:$0xff]
    %v4813 = vld [vmem:[#allocation15 + $0x138] sm:$0xff]
    %v4814 = vld [vmem:[#allocation15 + $0x140] sm:$0xff]
    %v4815 = vld [vmem:[#allocation15 + $0x148] sm:$0xff]
    %v4816 = vld [vmem:[#allocation15 + $0x150] sm:$0xff]
    %v4817 = vld [vmem:[#allocation15 + $0x158] sm:$0xff]
    %v4818 = vld [vmem:[#allocation15 + $0x160] sm:$0xff]
    %v4819 = vld [vmem:[#allocation15 + $0x168] sm:$0xff]
    %v4820 = vld [vmem:[#allocation15 + $0x170] sm:$0xff]
    %v4821 = vld [vmem:[#allocation15 + $0x178] sm:$0xff]
    %v4822 = vld [vmem:[#allocation15 + $0x180] sm:$0xff]
    %v4823 = vld [vmem:[#allocation15 + $0x188] sm:$0xff]
    %v4824 = vld [vmem:[#allocation15 + $0x190] sm:$0xff]
    %v4825 = vld [vmem:[#allocation15 + $0x198] sm:$0xff]
    %v4826 = vld [vmem:[#allocation15 + $0x1a0] sm:$0xff]
    %v4827 = vld [vmem:[#allocation15 + $0x1a8] sm:$0xff]
    %v4828 = vld [vmem:[#allocation15 + $0x1b0] sm:$0xff]
    %v4829 = vld [vmem:[#allocation15 + $0x1b8] sm:$0xff]
    %v4830 = vld [vmem:[#allocation15 + $0x1c0] sm:$0xff]
    %v4831 = vld [vmem:[#allocation15 + $0x1c8] sm:$0xff]
    %v4832 = vld [vmem:[#allocation15 + $0x1d0] sm:$0xff]
    %v4833 = vld [vmem:[#allocation15 + $0x1d8] sm:$0xff]
    %v4834 = vld [vmem:[#allocation15 + $0x1e0] sm:$0xff]
    %v4835 = vld [vmem:[#allocation15 + $0x1e8] sm:$0xff]
    %v4836 = vld [vmem:[#allocation15 + $0x1f0] sm:$0xff]
    %v4837 = vld [vmem:[#allocation15 + $0x1f8] sm:$0xff]
    %v4838 = vld [vmem:[%s13] sm:$0x3]
    %v4840 = vlaneseq
    %v4841 = vshrl.u32 %v4840, 7
    %v4842 = vsub.s32 0, %v4841
    %v4843 = vrot.slane %v4838, %v4842
    %v4844 = vlaneseq
    %v4845 = vshrl.u32 %v4844, 7
    %v4846 = vsub.s32 1, %v4845
    %v4847 = vrot.slane %v4838, %v4846
    %4850 = vmatprep.subr.mxu0 %v4775
    %4851 = vmatpush1.msra.mxu0 %v4774
    %4852 = vmatprep.subr.mxu0 %v4777
    %4853 = vmatpush1.msra.mxu0 %v4776
    %4854 = vmatprep.subr.mxu0 %v4779
    %4855 = vmatpush1.msra.mxu0 %v4778
    %4856 = vmatprep.subr.mxu0 %v4781
    %4857 = vmatpush1.msra.mxu0 %v4780
    %4858 = vmatprep.subr.mxu0 %v4783
    %4859 = vmatpush1.msra.mxu0 %v4782
    %4860 = vmatprep.subr.mxu0 %v4785
    %4861 = vmatpush1.msra.mxu0 %v4784
    %4862 = vmatprep.subr.mxu0 %v4787
    %4863 = vmatpush1.msra.mxu0 %v4786
    %4864 = vmatprep.subr.mxu0 %v4789
    %4865 = vmatpush1.msra.mxu0 %v4788
    %4866 = vmatprep.subr.mxu0 %v4791
    %4867 = vmatpush1.msra.mxu0 %v4790
    %4868 = vmatprep.subr.mxu0 %v4793
    %4869 = vmatpush1.msra.mxu0 %v4792
    %4870 = vmatprep.subr.mxu0 %v4795
    %4871 = vmatpush1.msra.mxu0 %v4794
    %4872 = vmatprep.subr.mxu0 %v4797
    %4873 = vmatpush1.msra.mxu0 %v4796
    %4874 = vmatprep.subr.mxu0 %v4799
    %4875 = vmatpush1.msra.mxu0 %v4798
    %4876 = vmatprep.subr.mxu0 %v4801
    %4877 = vmatpush1.msra.mxu0 %v4800
    %4878 = vmatprep.subr.mxu0 %v4803
    %4879 = vmatpush1.msra.mxu0 %v4802
    %4880 = vmatprep.subr.mxu0 %v4805
    %4881 = vmatpush1.msra.mxu0 %v4804
    %4882 = vmatprep.subr.mxu0 %v4807
    %4883 = vmatpush1.msra.mxu0 %v4806
    %4884 = vmatprep.subr.mxu0 %v4809
    %4885 = vmatpush1.msra.mxu0 %v4808
    %4886 = vmatprep.subr.mxu0 %v4811
    %4887 = vmatpush1.msra.mxu0 %v4810
    %4888 = vmatprep.subr.mxu0 %v4813
    %4889 = vmatpush1.msra.mxu0 %v4812
    %4890 = vmatprep.subr.mxu0 %v4815
    %4891 = vmatpush1.msra.mxu0 %v4814
    %4892 = vmatprep.subr.mxu0 %v4817
    %4893 = vmatpush1.msra.mxu0 %v4816
    %4894 = vmatprep.subr.mxu0 %v4819
    %4895 = vmatpush1.msra.mxu0 %v4818
    %4896 = vmatprep.subr.mxu0 %v4821
    %4897 = vmatpush1.msra.mxu0 %v4820
    %4898 = vmatprep.subr.mxu0 %v4823
    %4899 = vmatpush1.msra.mxu0 %v4822
    %4900 = vmatprep.subr.mxu0 %v4825
    %4901 = vmatpush1.msra.mxu0 %v4824
    %4902 = vmatprep.subr.mxu0 %v4827
    %4903 = vmatpush1.msra.mxu0 %v4826
    %4904 = vmatprep.subr.mxu0 %v4829
    %4905 = vmatpush1.msra.mxu0 %v4828
    %4906 = vmatprep.subr.mxu0 %v4831
    %4907 = vmatpush1.msra.mxu0 %v4830
    %4908 = vmatprep.subr.mxu0 %v4833
    %4909 = vmatpush1.msra.mxu0 %v4832
    %4910 = vmatprep.subr.mxu0 %v4835
    %4911 = vmatpush1.msra.mxu0 %v4834
    %4912 = vmatprep.subr.mxu0 %v4837
    %4913 = vmatpush1.msra.mxu0 %v4836
    %4914 = vmatprep.mubr.f32.mxu0 %v4773
    %4915 = vmatmul.mubr.f32.gmra.mrb[0].mxu0 %v4772
    %v4916 = vpop.f32.mrb[0].mxu0
    %v4917 = vadd.f32 %v4843, %v4916
    %v4918 = vpop.f32.mrb[0].mxu0
    %v4919 = vadd.f32 %v4847, %v4918
    %4920 = vdwg.mxu0
    %vm4921 = vcmp.gt.f32.partialorder %v4917, 0.0
    %vm4922 = vcmp.gt.f32.partialorder %v4919, 0.0
    %v4923 = vmin.f32 %v4917, 0.0
    %v4924 = vmin.f32 %v4919, 0.0
    %v4925 = vmul.f32 %v4923, 1.442695
    %v4926 = vpow.pop %v4925
    %v4927 = vmul.f32 %v4924, 1.442695
    %v4928 = vpow.pop %v4927
    %v4929 = vsub.f32 %v4926, 1.0
    %v4930 = vsub.f32 %v4928, 1.0
    %v4931 = vsel %vm4921, %v4917, %v4929
    %v4932 = vsel %vm4922, %v4919, %v4930
    %v4933 = vld [vmem:[%s14] sm:$0x3]
    %v4935 = vlaneseq
    %v4936 = vshrl.u32 %v4935, 7
    %v4937 = vsub.s32 0, %v4936
    %v4938 = vrot.slane %v4933, %v4937
    %v4939 = vlaneseq
    %v4940 = vshrl.u32 %v4939, 7
    %v4941 = vsub.s32 1, %v4940
    %v4942 = vrot.slane %v4933, %v4941
    %v4945 = vmul.f32 %v4931, %v4938
    %v4946 = vmul.f32 %v4932, %v4942
    %v4947 = vadd.f32 %v4945, %v4946
    %4948 = vadd.xlane.f32.xlu0 %v4947
    %v4949 = vpop.xlane.xlu0 %4948
    %v4950 = vld [vmem:[#allocation2] sm:$0x1]
    %v4952 = vlaneseq
    %v4953 = vshrl.u32 %v4952, 7
    %v4954 = vsub.s32 0, %v4953
    %v4955 = vrot.slane %v4950, %v4954
    %v4957 = vadd.f32 %v4949, %v4955
    %vm4958 = vcmask 7168
    %4959 = vst.msk [vmem:[%s16] sm:$0xff] %vm4958, %v4957
    // Predicated region
    $region98: #{_lambda_.1} parent=1 // pred_check
      _
    $region99: #{_lambda_.1} parent=1 // pred_check_branch
      %4961 = sbr.rel (0) target = $region101
    $region100: #{_lambda_.1} parent=1 // pred_region
      _
    $region101: #{_lambda_.1} parent=1 // pred_fallthru
      _
    // Predicated region
    $region102: #{_lambda_.1} parent=1 // pred_check
      _
    $region103: #{_lambda_.1} parent=1 // pred_check_branch
      %4963 = sbr.rel (0) target = $region105
    $region104: #{_lambda_.1} parent=1 // pred_region
      %s4965 = ssub.s32 32, 32
      %4966 = vsyncadd [#allocation5], %s4965
      %s4968 = sshll.u32 [#allocation17], 4
      %s4969 = int_to_ptr.vmem [resolvable:$true] %s4968
      %4971 = dma.vmem_to_hbm [thread:$0]  %s4969, 32, %s17, [#allocation5]
    $region105: #{_lambda_.1} parent=1 // pred_fallthru
      _
    // Predicated region
    $region106: #{_lambda_.1} parent=1 // pred_check
      _
    $region107: #{_lambda_.1} parent=1 // pred_check_branch
      %4973 = sbr.rel (0) target = $region109
    $region108: #{_lambda_.1} parent=1 // pred_region
      _
    $region109: #{_lambda_.1} parent=1 // pred_fallthru
      _
    // Predicated region
    $region110: #{_lambda_.1} parent=1 // pred_check
      _
    $region111: #{_lambda_.1} parent=1 // pred_check_branch
      %4975 = sbr.rel (0) target = $region113
    $region112: #{_lambda_.1} parent=1 // pred_region
      %4976 = dma.done [#allocation5], 32
    $region113: #{_lambda_.1} parent=1 // pred_fallthru
      _
    %4977 = vsyncpa [#allocation4], 1
    %4978 = vsyncpa [#allocation7], 1
    %4979 = vsyncpa [#allocation10], 1
    %4980 = vsyncpa [#allocation13], 1
    %4981 = vsyncpa [#allocation16], 1
    %4982 = vsyncpa [#allocation5], 1

</llo_original>
